<compile_context>
chip_gen: v6e
topology: v6e:2x2x1
jax: 0.10.0
libtpu: 0.0.40
codegen_flags: <defaults>
</compile_context>

<pallas_src>
import functools

import jax
import jax.numpy as jnp
from jax import lax
from jax.experimental import pallas as pl
from jax.experimental.pallas import tpu as pltpu

EPS = 1e-5
LANES = 128


def _round_up(n, m):
    return ((n + m - 1) // m) * m


def _choose_row_tile(h, w):
    """Smallest multiple-of-8 divisor of h whose tile covers >=128 rows of
    (rows, C) work; falls back to the whole image.  Equal-sized tiles keep the
    Chan variance merge exact."""
    for th in range(8, h, 8):
        if h % th == 0 and th * w >= 128:
            return th
    return h


def _vmem_limit_bytes():
    """Generation-dependent scoped-VMEM budget (v7x only has 64 MiB)."""
    try:
        cap = pltpu.get_tpu_info().vmem_capacity_bytes
    except Exception:
        cap = 64 * 1024 * 1024
    return int(min(cap * 3 // 4, 100 * 1024 * 1024))


# --------------------------------- kernels -----------------------------------
def _store_conv_and_stats(y, y_ref, st_ref):
    """Store conv output tile + per-tile per-channel (mean, centered M2).

    Stats are computed from the stored (possibly bf16-rounded) activations so
    the statistics match what the next stage will normalize."""
    y_q = y.astype(y_ref.dtype)
    y_ref[...] = y_q.reshape(y_ref.shape)
    yf = y_q.astype(jnp.float32)
    mean = jnp.mean(yf, axis=0, keepdims=True)                       # (1, C)
    m2 = jnp.sum(jnp.square(yf - mean), axis=0, keepdims=True)       # (1, C)
    st_ref[...] = jnp.concatenate([mean, m2], axis=0).reshape(st_ref.shape)


def _conv1_kernel(x_ref, w_ref, y_ref, st_ref, *, compute_dtype):
    """1x1 conv (matmul over channels) + BN partial statistics."""
    _, th, w, k = x_ref.shape
    z = x_ref[...].reshape(th * w, k).astype(compute_dtype)
    y = jnp.dot(z, w_ref[...], preferred_element_type=jnp.float32)
    _store_conv_and_stats(y, y_ref, st_ref)


def _bn_relu_conv1_kernel(x_ref, s_ref, b_ref, w_ref, y_ref, st_ref, *,
                          compute_dtype):
    """BN(scale/shift)+ReLU -> 1x1 conv + BN partial statistics."""
    _, th, w, k = x_ref.shape
    z = x_ref[...].reshape(th * w, k).astype(jnp.float32)
    z = jnp.maximum(z * s_ref[...] + b_ref[...], 0.0).astype(compute_dtype)
    y = jnp.dot(z, w_ref[...], preferred_element_type=jnp.float32)
    _store_conv_and_stats(y, y_ref, st_ref)


def _bn_relu_conv3_kernel(x_ref, s_ref, b_ref, w_ref, y_ref, st_ref, *,
                          compute_dtype):
    """BN+ReLU -> 3x3 conv (pad=1) as three accumulated K=3*C matmuls + stats.

    Row-grouped form: per kernel-row kh only the three kw-shifted views are
    concatenated (K = 3*C keeps v6e/v7x's 256-deep MXU full; acceptable on
    v5e as well) and results accumulate into one f32 buffer -> 3x less im2col
    materialization than a single 9-view concat."""
    _, h, w, k = x_ref.shape
    scale = s_ref[...].reshape(1, 1, 1, k)
    shift = b_ref[...].reshape(1, 1, 1, k)
    z = jnp.maximum(x_ref[...].astype(jnp.float32) * scale + shift, 0.0)
    z = z.astype(compute_dtype)
    # value-level zero halo (pad=1); no VMEM scratch, no masked partial stores
    zc = jnp.zeros((1, h, 1, k), compute_dtype)
    zr = jnp.zeros((1, 1, w + 2, k), compute_dtype)
    zp = jnp.concatenate([zc, z, zc], axis=2)
    zp = jnp.concatenate([zr, zp, zr], axis=1)
    nout = w_ref.shape[-1]
    acc = jnp.zeros((h * w, nout), jnp.float32)
    for kh in range(3):
        patches = jnp.concatenate(
            [zp[:, kh:kh + h, kw:kw + w, :] for kw in range(3)],
            axis=-1).reshape(h * w, 3 * k)
        acc = acc + jnp.dot(patches, w_ref[kh],
                            preferred_element_type=jnp.float32)
    _store_conv_and_stats(acc, y_ref, st_ref)


def _bn_add_relu_kernel(y_ref, s_ref, b_ref, r_ref, o_ref):
    """Final BN + identity residual add + ReLU; emits only Cout lanes."""
    k = y_ref.shape[-1]
    cout = o_ref.shape[-1]
    scale = s_ref[...].reshape(1, 1, 1, k)
    shift = b_ref[...].reshape(1, 1, 1, k)
    y = y_ref[...].astype(jnp.float32)
    r = r_ref[...].astype(jnp.float32)
    out = jnp.maximum(y * scale + shift + r, 0.0)
    o_ref[...] = out[..., :cout].astype(o_ref.dtype)


# --------------------------------- wrapper ------------------------------------
def _finalize_bn(stats, gamma, beta, elems_per_tile, total_elems):
    """Merge equal-sized per-tile (mean, M2) partials; return BN scale/shift."""
    stats = stats.reshape(-1, 2, stats.shape[-1])
    mean_b = stats[:, 0, :]                                   # (tiles, C)
    m2_b = stats[:, 1, :]
    mu = jnp.mean(mean_b, axis=0)                             # (C,)
    var = (jnp.sum(m2_b, axis=0)
           + elems_per_tile * jnp.sum(jnp.square(mean_b - mu), axis=0)
           ) / total_elems
    scale = gamma * lax.rsqrt(var + EPS)
    shift = beta - mu * scale
    return scale.reshape(1, -1), shift.reshape(1, -1)


@functools.partial(jax.jit, static_argnames=("compute_dtype",))
def bottleneck_pallas(x_nchw, params, compute_dtype=jnp.bfloat16):
    """_Bottleneck forward (training-mode BN, stride=1, identity residual)."""
    N, Cin, H, W = x_nchw.shape
    P = params["w1"].shape[0]            # planes
    Cout = params["w3"].shape[0]         # planes * expansion
    assert Cin == Cout, "identity residual requires inplanes == planes*expansion"
    # TODO(synk): stride!=1 / downsample branch of _Bottleneck not implemented
    # (a freshly constructed module uses stride=1, downsample=None).

    Cp = _round_up(Cin, LANES)
    Pp = _round_up(P, LANES)
    TH = _choose_row_tile(H, W)
    T = H // TH

    # Layout glue: NCHW -> NHWC, channels zero-padded to lane multiples, kept
    # in compute_dtype so stage-1 input DMA and stage-4 residual re-read stream
    # bf16 on the fast path.
    # TODO(synk): a full network should keep activations NHWC end-to-end so
    # these per-block transposes are not paid.
    x = jnp.transpose(x_nchw, (0, 2, 3, 1))
    x = jnp.pad(x, ((0, 0), (0, 0), (0, 0), (0, Cp - Cin))).astype(compute_dtype)

    w1 = jnp.pad(params["w1"][:, :, 0, 0].T, ((0, Cp - Cin), (0, Pp - P)))
    w2 = jnp.transpose(params["w2"], (2, 3, 1, 0))            # (kh, kw, I, O)
    w2 = jnp.pad(w2, ((0, 0), (0, 0), (0, Pp - P), (0, Pp - P)))
    w2 = w2.reshape(3, 3 * Pp, Pp)                            # per-kh (3*Pp, Pp)
    w3 = jnp.pad(params["w3"][:, :, 0, 0].T, ((0, Pp - P), (0, Cp - Cout)))
    w1, w2, w3 = (w.astype(compute_dtype) for w in (w1, w2, w3))

    def padc(v, c):
        return jnp.pad(v.astype(jnp.float32), (0, c - v.shape[0]))

    g1, b1 = padc(params["g1"], Pp), padc(params["b1"], Pp)
    g2, b2 = padc(params["g2"], Pp), padc(params["b2"], Pp)
    g3, b3 = padc(params["g3"], Cp), padc(params["b3"], Cp)

    m_total = N * H * W
    vmem = _vmem_limit_bytes()
    cparams_2d = pltpu.CompilerParams(
        dimension_semantics=("parallel", "parallel"), vmem_limit_bytes=vmem)
    cparams_1d = pltpu.CompilerParams(
        dimension_semantics=("parallel",), vmem_limit_bytes=vmem)

    # ---- BlockSpec helpers ----
    def tile2d(c):                        # (n, t) grid: spatially tiled image
        return pl.BlockSpec((1, TH, W, c), lambda n, t: (n, t, 0, 0))

    def stats2d(c):
        return pl.BlockSpec((1, 1, 2, c), lambda n, t: (n, t, 0, 0))

    def const2d(shape):
        # TODO(synk): pipeline_mode=pl.Buffered(1) would drop the redundant
        # second buffer for these never-changing operands; left at the default
        # for portability.
        return pl.BlockSpec(shape, lambda n, t: (0,) * len(shape))

    def tile1d(c):                        # (n,) grid: whole image per step
        return pl.BlockSpec((1, H, W, c), lambda n: (n, 0, 0, 0))

    def const1d(shape):
        return pl.BlockSpec(shape, lambda n: (0,) * len(shape))

    def stage2d(kernel, arrays, in_specs, c_out):
        return pl.pallas_call(
            kernel,
            grid=(N, T),
            in_specs=in_specs,
            out_specs=(tile2d(c_out), stats2d(c_out)),
            out_shape=(jax.ShapeDtypeStruct((N, H, W, c_out), compute_dtype),
                       jax.ShapeDtypeStruct((N, T, 2, c_out), jnp.float32)),
            compiler_params=cparams_2d,
        )(*arrays)

    # stage 1: conv1 (1x1) + BN1 partial stats — spatially tiled, bf16 stream
    y1, st1 = stage2d(
        functools.partial(_conv1_kernel, compute_dtype=compute_dtype),
        (x, w1), [tile2d(Cp), const2d((Cp, Pp))], Pp)
    s1, t1 = _finalize_bn(st1, g1, b1, TH * W, m_total)

    # stage 2: bn1+relu -> conv2 (3x3, accumulated K=3*Pp matmuls) + BN2 stats
    # Grid over batch only: the 3x3 halo makes spatial tiling non-trivial.
    # TODO(synk): spatially tile stage 2 with a halo (pl.Element-indexed H or
    # manual DMA) for very large images on v7x's 64 MiB VMEM.
    y2, st2 = pl.pallas_call(
        functools.partial(_bn_relu_conv3_kernel, compute_dtype=compute_dtype),
        grid=(N,),
        in_specs=[tile1d(Pp), const1d((1, Pp)), const1d((1, Pp)),
                  const1d((3, 3 * Pp, Pp))],
        out_specs=(tile1d(Pp), pl.BlockSpec((1, 2, Pp), lambda n: (n, 0, 0))),
        out_shape=(jax.ShapeDtypeStruct((N, H, W, Pp), compute_dtype),
                   jax.ShapeDtypeStruct((N, 2, Pp), jnp.float32)),
        compiler_params=cparams_1d,
    )(y1, s1, t1, w2)
    s2, t2 = _finalize_bn(st2, g2, b2, H * W, m_total)

    # stage 3: bn2+relu -> conv3 (1x1 expansion) + BN3 partial stats
    y3, st3 = stage2d(
        functools.partial(_bn_relu_conv1_kernel, compute_dtype=compute_dtype),
        (y2, s2, t2, w3),
        [tile2d(Pp), const2d((1, Pp)), const2d((1, Pp)), const2d((Pp, Cp))], Cp)
    s3, t3 = _finalize_bn(st3, g3, b3, TH * W, m_total)

    # stage 4: bn3 + identity residual (x re-read in compute_dtype) + relu.
    # Output is compute_dtype and only Cout lanes -> final HBM store is the
    # minimal byte count; wrapper only transposes back to NCHW.
    out = pl.pallas_call(
        _bn_add_relu_kernel,
        grid=(N, T),
        in_specs=[tile2d(Cp), const2d((1, Cp)), const2d((1, Cp)), tile2d(Cp)],
        out_specs=pl.BlockSpec((1, TH, W, Cout), lambda n, t: (n, t, 0, 0)),
        out_shape=jax.ShapeDtypeStruct((N, H, W, Cout), compute_dtype),
        compiler_params=cparams_2d,
    )(y3, s3, t3, x)

    return jnp.transpose(out, (0, 3, 1, 2)).astype(x_nchw.dtype)   # NCHW


# ------------------------- pure-JAX reference (NCHW) --------------------------
def _ref_bottleneck(x, params):
    def conv(x, w, pad):
        return jax.lax.conv_general_dilated(
            x, w, (1, 1), [(pad, pad), (pad, pad)],
            dimension_numbers=("NCHW", "OIHW", "NCHW"))

    def bn(y, g, b, relu):
        mean = y.mean(axis=(0, 2, 3), keepdims=True)
        var = y.var(axis=(0, 2, 3), keepdims=True)
        yn = (y - mean) / jnp.sqrt(var + EPS)
        yn = yn * g[None, :, None, None] + b[None, :, None, None]
        return jnp.maximum(yn, 0.0) if relu else yn

    residual = x
    out = bn(conv(x, params["w1"], 0), params["g1"], params["b1"], True)
    out = bn(conv(out, params["w2"], 1), params["g2"], params["b2"], True)
    out = bn(conv(out, params["w3"], 0), params["g3"], params["b3"], False)
    return jnp.maximum(out + residual, 0.0)


if __name__ == "__main__":
    key = jax.random.PRNGKey(0)
    planes = 4
    inplanes = planes * 4            # expansion = 4, identity residual
    N, H, W = 2, 16, 16

    ks = jax.random.split(key, 10)
    params = {
        "w1": 0.1 * jax.random.normal(ks[0], (planes, inplanes, 1, 1), jnp.float32),
        "w2": 0.1 * jax.random.normal(ks[1], (planes, planes, 3, 3), jnp.float32),
        "w3": 0.1 * jax.random.normal(ks[2], (planes * 4, planes, 1, 1), jnp.float32),
        "g1": 1.0 + 0.1 * jax.random.normal(ks[3], (planes,), jnp.float32),
        "b1": 0.1 * jax.random.normal(ks[4], (planes,), jnp.float32),
        "g2": 1.0 + 0.1 * jax.random.normal(ks[5], (planes,), jnp.float32),
        "b2": 0.1 * jax.random.normal(ks[6], (planes,), jnp.float32),
        "g3": 1.0 + 0.1 * jax.random.normal(ks[7], (planes * 4,), jnp.float32),
        "b3": 0.1 * jax.random.normal(ks[8], (planes * 4,), jnp.float32),
    }
    x = jax.random.normal(ks[9], (N, inplanes, H, W), jnp.float32)

    ref = jax.block_until_ready(_ref_bottleneck(x, params))

    # Strict semantic check with f32 matmuls / f32 stores.
    out_f32 = jax.block_until_ready(
        bottleneck_pallas(x, params, compute_dtype=jnp.float32))
    assert out_f32.shape == (N, inplanes, H, W)
    err32 = float(jnp.abs(out_f32 - ref).max())
    assert jnp.allclose(out_f32, ref, atol=1e-3, rtol=1e-3), err32

    # Fast path: bf16 MXU operands / activation streams, f32 accumulation and
    # f32 BN statistics.  Looser tolerance: bf16 rounding through three
    # stacked convs, the residual stream and the final store.
    out_bf16 = jax.block_until_ready(bottleneck_pallas(x, params))
    errbf = float(jnp.abs(out_bf16 - ref).max())
    assert jnp.allclose(out_bf16, ref, atol=1e-1, rtol=1e-1), errbf

    print("KERNEL_OK")
</pallas_src>

<mosaic_0001>
module attributes {stable_mosaic.version = 11 : i64} {
  func.func @_conv1_kernel(%arg0: i32, %arg1: i32, %arg2: memref<1x8x16x128xf32, #tpu.memory_space<vmem>>, %arg3: memref<128x128xf32, #tpu.memory_space<vmem>>, %arg4: memref<1x8x16x128xf32, #tpu.memory_space<vmem>>, %arg5: memref<1x1x2x128xf32, #tpu.memory_space<vmem>>) attributes {dimension_semantics = [#tpu.dimension_semantics<parallel>, #tpu.dimension_semantics<parallel>], iteration_bounds = array<i64: 2, 2>, scalar_prefetch = 0 : i64, scratch_operands = 0 : i64, tpu.core_type = #tpu.core_type<tc>, window_params = [{transform_indices = @transform_0, window_bounds = array<i64: 1, 8, 16, 128>}, {pipeline_mode = #tpu.pipeline_mode<synchronous>, transform_indices = @transform_1, window_bounds = array<i64: 128, 128>}, {transform_indices = @transform_2, window_bounds = array<i64: 1, 8, 16, 128>}, {transform_indices = @transform_3, window_bounds = array<i64: 1, 1, 2, 128>}]} {
    %c0 = arith.constant 0 : index
    %c0_0 = arith.constant 0 : index
    %c0_1 = arith.constant 0 : index
    %c0_2 = arith.constant 0 : index
    %0 = vector.load %arg2[%c0, %c0_0, %c0_1, %c0_2] : memref<1x8x16x128xf32, #tpu.memory_space<vmem>>, vector<1x8x16x128xf32>
    %1 = vector.shape_cast %0 : vector<1x8x16x128xf32> to vector<128x128xf32>
    %c0_3 = arith.constant 0 : index
    %c0_4 = arith.constant 0 : index
    %2 = vector.load %arg3[%c0_3, %c0_4] : memref<128x128xf32, #tpu.memory_space<vmem>>, vector<128x128xf32>
    %cst = arith.constant dense<0.000000e+00> : vector<128x128xf32>
    %3 = tpu.matmul %1, %2, %cst {dimension_numbers = #tpu.dot_dimension_numbers<[1], [0], [0], [1], [0, 0, 1, 1], [], []>} : vector<128x128xf32>, vector<128x128xf32>, vector<128x128xf32> -> vector<128x128xf32>
    %4 = vector.shape_cast %3 : vector<128x128xf32> to vector<1x8x16x128xf32>
    %c0_5 = arith.constant 0 : index
    %c0_6 = arith.constant 0 : index
    %c0_7 = arith.constant 0 : index
    %c0_8 = arith.constant 0 : index
    %5 = vector.load %arg4[%c0_5, %c0_6, %c0_7, %c0_8] : memref<1x8x16x128xf32, #tpu.memory_space<vmem>>, vector<1x8x16x128xf32>
    tpu.vector_store %arg4[%c0_5, %c0_6, %c0_7, %c0_8], %4 {strides = array<i32>} : memref<1x8x16x128xf32, #tpu.memory_space<vmem>>, vector<1x8x16x128xf32>,
    %cst_9 = arith.constant dense<0.000000e+00> : vector<128xf32>
    %6 = vector.multi_reduction <add>, %3, %cst_9 [0] : vector<128x128xf32> to vector<128xf32>
    %7 = vector.shape_cast %6 : vector<128xf32> to vector<1x128xf32>
    %cst_10 = arith.constant 1.280000e+02 : f32
    %8 = vector.broadcast %cst_10 : f32 to vector<1x128xf32>
    %9 = arith.divf %7, %8 : vector<1x128xf32>
    %10 = vector.broadcast %9 : vector<1x128xf32> to vector<128x128xf32>
    %11 = arith.subf %3, %10 : vector<128x128xf32>
    %12 = arith.mulf %11, %11 : vector<128x128xf32>
    %cst_11 = arith.constant dense<0.000000e+00> : vector<128xf32>
    %13 = vector.multi_reduction <add>, %12, %cst_11 [0] : vector<128x128xf32> to vector<128xf32>
    %14 = vector.shape_cast %13 : vector<128xf32> to vector<1x128xf32>
    %15 = tpu.concatenate %9, %14 in 0 : vector<1x128xf32>, vector<1x128xf32> -> vector<2x128xf32>
    %16 = vector.shape_cast %15 : vector<2x128xf32> to vector<1x1x2x128xf32>
    %c0_12 = arith.constant 0 : index
    %c0_13 = arith.constant 0 : index
    %c0_14 = arith.constant 0 : index
    %c0_15 = arith.constant 0 : index
    %17 = vector.load %arg5[%c0_12, %c0_13, %c0_14, %c0_15] : memref<1x1x2x128xf32, #tpu.memory_space<vmem>>, vector<1x1x2x128xf32>
    tpu.vector_store %arg5[%c0_12, %c0_13, %c0_14, %c0_15], %16 {strides = array<i32>} : memref<1x1x2x128xf32, #tpu.memory_space<vmem>>, vector<1x1x2x128xf32>,
    return
  }
  func.func @transform_0(%arg0: i32, %arg1: i32) -> (i32, i32, i32, i32) {
    %c0_i32 = arith.constant 0 : i32
    %c0_i32_0 = arith.constant 0 : i32
    %c0_i32_1 = arith.constant 0 : i32
    return %arg0, %arg1, %c0_i32, %c0_i32_0 : i32, i32, i32, i32
  }
  func.func @transform_1(%arg0: i32, %arg1: i32) -> (i32, i32) {
    %c0_i32 = arith.constant 0 : i32
    %c0_i32_0 = arith.constant 0 : i32
    %c0_i32_1 = arith.constant 0 : i32
    return %c0_i32, %c0_i32_0 : i32, i32
  }
  func.func @transform_2(%arg0: i32, %arg1: i32) -> (i32, i32, i32, i32) {
    %c0_i32 = arith.constant 0 : i32
    %c0_i32_0 = arith.constant 0 : i32
    %c0_i32_1 = arith.constant 0 : i32
    return %arg0, %arg1, %c0_i32, %c0_i32_0 : i32, i32, i32, i32
  }
  func.func @transform_3(%arg0: i32, %arg1: i32) -> (i32, i32, i32, i32) {
    %c0_i32 = arith.constant 0 : i32
    %c0_i32_0 = arith.constant 0 : i32
    %c0_i32_1 = arith.constant 0 : i32
    return %arg0, %arg1, %c0_i32, %c0_i32_0 : i32, i32, i32, i32
  }
}

module attributes {stable_mosaic.version = 11 : i64} {
  func.func @_bn_relu_conv3_kernel(%arg0: i32, %arg1: memref<1x16x16x128xf32, #tpu.memory_space<vmem>>, %arg2: memref<1x128xf32, #tpu.memory_space<vmem>>, %arg3: memref<1x128xf32, #tpu.memory_space<vmem>>, %arg4: memref<3x384x128xf32, #tpu.memory_space<vmem>>, %arg5: memref<1x16x16x128xf32, #tpu.memory_space<vmem>>, %arg6: memref<1x2x128xf32, #tpu.memory_space<vmem>>) attributes {dimension_semantics = [#tpu.dimension_semantics<parallel>], iteration_bounds = array<i64: 2>, scalar_prefetch = 0 : i64, scratch_operands = 0 : i64, tpu.core_type = #tpu.core_type<tc>, window_params = [{transform_indices = @transform_0, window_bounds = array<i64: 1, 16, 16, 128>}, {pipeline_mode = #tpu.pipeline_mode<synchronous>, transform_indices = @transform_1, window_bounds = array<i64: 1, 128>}, {pipeline_mode = #tpu.pipeline_mode<synchronous>, transform_indices = @transform_2, window_bounds = array<i64: 1, 128>}, {pipeline_mode = #tpu.pipeline_mode<synchronous>, transform_indices = @transform_3, window_bounds = array<i64: 3, 384, 128>}, {transform_indices = @transform_4, window_bounds = array<i64: 1, 16, 16, 128>}, {transform_indices = @transform_5, window_bounds = array<i64: 1, 2, 128>}]} {
    %c0 = arith.constant 0 : index
    %c0_0 = arith.constant 0 : index
    %0 = vector.load %arg2[%c0, %c0_0] : memref<1x128xf32, #tpu.memory_space<vmem>>, vector<1x128xf32>
    %1 = vector.shape_cast %0 : vector<1x128xf32> to vector<1x1x1x128xf32>
    %c0_1 = arith.constant 0 : index
    %c0_2 = arith.constant 0 : index
    %2 = vector.load %arg3[%c0_1, %c0_2] : memref<1x128xf32, #tpu.memory_space<vmem>>, vector<1x128xf32>
    %3 = vector.shape_cast %2 : vector<1x128xf32> to vector<1x1x1x128xf32>
    %c0_3 = arith.constant 0 : index
    %c0_4 = arith.constant 0 : index
    %c0_5 = arith.constant 0 : index
    %c0_6 = arith.constant 0 : index
    %4 = vector.load %arg1[%c0_3, %c0_4, %c0_5, %c0_6] : memref<1x16x16x128xf32, #tpu.memory_space<vmem>>, vector<1x16x16x128xf32>
    %5 = vector.broadcast %1 : vector<1x1x1x128xf32> to vector<1x16x16x128xf32>
    %6 = arith.mulf %4, %5 : vector<1x16x16x128xf32>
    %7 = vector.broadcast %3 : vector<1x1x1x128xf32> to vector<1x16x16x128xf32>
    %8 = arith.addf %6, %7 : vector<1x16x16x128xf32>
    %cst = arith.constant 0.000000e+00 : f32
    %9 = vector.broadcast %cst : f32 to vector<1x16x16x128xf32>
    %10 = arith.maximumf %8, %9 : vector<1x16x16x128xf32>
    %cst_7 = arith.constant 0.000000e+00 : f32
    %11 = vector.broadcast %cst_7 : f32 to vector<1x16x1x128xf32>
    %cst_8 = arith.constant 0.000000e+00 : f32
    %12 = vector.broadcast %cst_8 : f32 to vector<1x1x18x128xf32>
    %13 = tpu.concatenate %11, %10, %11 in 2 : vector<1x16x1x128xf32>, vector<1x16x16x128xf32>, vector<1x16x1x128xf32> -> vector<1x16x18x128xf32>
    %14 = tpu.concatenate %12, %13, %12 in 1 : vector<1x1x18x128xf32>, vector<1x16x18x128xf32>, vector<1x1x18x128xf32> -> vector<1x18x18x128xf32>
    %cst_9 = arith.constant 0.000000e+00 : f32
    %15 = vector.broadcast %cst_9 : f32 to vector<256x128xf32>
    %16 = vector.extract_strided_slice %14 {offsets = [0, 0, 0, 0], sizes = [1, 16, 16, 128], strides = [1, 1, 1, 1]} : vector<1x18x18x128xf32> to vector<1x16x16x128xf32>
    %17 = vector.extract_strided_slice %14 {offsets = [0, 0, 1, 0], sizes = [1, 16, 16, 128], strides = [1, 1, 1, 1]} : vector<1x18x18x128xf32> to vector<1x16x16x128xf32>
    %18 = vector.extract_strided_slice %14 {offsets = [0, 0, 2, 0], sizes = [1, 16, 16, 128], strides = [1, 1, 1, 1]} : vector<1x18x18x128xf32> to vector<1x16x16x128xf32>
    %19 = tpu.concatenate %16, %17, %18 in 3 : vector<1x16x16x128xf32>, vector<1x16x16x128xf32>, vector<1x16x16x128xf32> -> vector<1x16x16x384xf32>
    %20 = vector.shape_cast %19 : vector<1x16x16x384xf32> to vector<256x384xf32>
    %c0_10 = arith.constant 0 : index
    %c0_11 = arith.constant 0 : index
    %c0_12 = arith.constant 0 : index
    %21 = vector.load %arg4[%c0_10, %c0_11, %c0_12] : memref<3x384x128xf32, #tpu.memory_space<vmem>>, vector<1x384x128xf32>
    %22 = vector.shape_cast %21 : vector<1x384x128xf32> to vector<384x128xf32>
    %cst_13 = arith.constant dense<0.000000e+00> : vector<256x128xf32>
    %23 = tpu.matmul %20, %22, %cst_13 {dimension_numbers = #tpu.dot_dimension_numbers<[1], [0], [0], [1], [0, 0, 1, 1], [], []>} : vector<256x384xf32>, vector<384x128xf32>, vector<256x128xf32> -> vector<256x128xf32>
    %24 = arith.addf %15, %23 : vector<256x128xf32>
    %25 = vector.extract_strided_slice %14 {offsets = [0, 1, 0, 0], sizes = [1, 16, 16, 128], strides = [1, 1, 1, 1]} : vector<1x18x18x128xf32> to vector<1x16x16x128xf32>
    %26 = vector.extract_strided_slice %14 {offsets = [0, 1, 1, 0], sizes = [1, 16, 16, 128], strides = [1, 1, 1, 1]} : vector<1x18x18x128xf32> to vector<1x16x16x128xf32>
    %27 = vector.extract_strided_slice %14 {offsets = [0, 1, 2, 0], sizes = [1, 16, 16, 128], strides = [1, 1, 1, 1]} : vector<1x18x18x128xf32> to vector<1x16x16x128xf32>
    %28 = tpu.concatenate %25, %26, %27 in 3 : vector<1x16x16x128xf32>, vector<1x16x16x128xf32>, vector<1x16x16x128xf32> -> vector<1x16x16x384xf32>
    %29 = vector.shape_cast %28 : vector<1x16x16x384xf32> to vector<256x384xf32>
    %c1 = arith.constant 1 : index
    %c0_14 = arith.constant 0 : index
    %c0_15 = arith.constant 0 : index
    %30 = vector.load %arg4[%c1, %c0_14, %c0_15] : memref<3x384x128xf32, #tpu.memory_space<vmem>>, vector<1x384x128xf32>
    %31 = vector.shape_cast %30 : vector<1x384x128xf32> to vector<384x128xf32>
    %cst_16 = arith.constant dense<0.000000e+00> : vector<256x128xf32>
    %32 = tpu.matmul %29, %31, %cst_16 {dimension_numbers = #tpu.dot_dimension_numbers<[1], [0], [0], [1], [0, 0, 1, 1], [], []>} : vector<256x384xf32>, vector<384x128xf32>, vector<256x128xf32> -> vector<256x128xf32>
    %33 = arith.addf %24, %32 : vector<256x128xf32>
    %34 = vector.extract_strided_slice %14 {offsets = [0, 2, 0, 0], sizes = [1, 16, 16, 128], strides = [1, 1, 1, 1]} : vector<1x18x18x128xf32> to vector<1x16x16x128xf32>
    %35 = vector.extract_strided_slice %14 {offsets = [0, 2, 1, 0], sizes = [1, 16, 16, 128], strides = [1, 1, 1, 1]} : vector<1x18x18x128xf32> to vector<1x16x16x128xf32>
    %36 = vector.extract_strided_slice %14 {offsets = [0, 2, 2, 0], sizes = [1, 16, 16, 128], strides = [1, 1, 1, 1]} : vector<1x18x18x128xf32> to vector<1x16x16x128xf32>
    %37 = tpu.concatenate %34, %35, %36 in 3 : vector<1x16x16x128xf32>, vector<1x16x16x128xf32>, vector<1x16x16x128xf32> -> vector<1x16x16x384xf32>
    %38 = vector.shape_cast %37 : vector<1x16x16x384xf32> to vector<256x384xf32>
    %c2 = arith.constant 2 : index
    %c0_17 = arith.constant 0 : index
    %c0_18 = arith.constant 0 : index
    %39 = vector.load %arg4[%c2, %c0_17, %c0_18] : memref<3x384x128xf32, #tpu.memory_space<vmem>>, vector<1x384x128xf32>
    %40 = vector.shape_cast %39 : vector<1x384x128xf32> to vector<384x128xf32>
    %cst_19 = arith.constant dense<0.000000e+00> : vector<256x128xf32>
    %41 = tpu.matmul %38, %40, %cst_19 {dimension_numbers = #tpu.dot_dimension_numbers<[1], [0], [0], [1], [0, 0, 1, 1], [], []>} : vector<256x384xf32>, vector<384x128xf32>, vector<256x128xf32> -> vector<256x128xf32>
    %42 = arith.addf %33, %41 : vector<256x128xf32>
    %43 = vector.shape_cast %42 : vector<256x128xf32> to vector<1x16x16x128xf32>
    %c0_20 = arith.constant 0 : index
    %c0_21 = arith.constant 0 : index
    %c0_22 = arith.constant 0 : index
    %c0_23 = arith.constant 0 : index
    %44 = vector.load %arg5[%c0_20, %c0_21, %c0_22, %c0_23] : memref<1x16x16x128xf32, #tpu.memory_space<vmem>>, vector<1x16x16x128xf32>
    tpu.vector_store %arg5[%c0_20, %c0_21, %c0_22, %c0_23], %43 {strides = array<i32>} : memref<1x16x16x128xf32, #tpu.memory_space<vmem>>, vector<1x16x16x128xf32>,
    %cst_24 = arith.constant dense<0.000000e+00> : vector<128xf32>
    %45 = vector.multi_reduction <add>, %42, %cst_24 [0] : vector<256x128xf32> to vector<128xf32>
    %46 = vector.shape_cast %45 : vector<128xf32> to vector<1x128xf32>
    %cst_25 = arith.constant 2.560000e+02 : f32
    %47 = vector.broadcast %cst_25 : f32 to vector<1x128xf32>
    %48 = arith.divf %46, %47 : vector<1x128xf32>
    %49 = vector.broadcast %48 : vector<1x128xf32> to vector<256x128xf32>
    %50 = arith.subf %42, %49 : vector<256x128xf32>
    %51 = arith.mulf %50, %50 : vector<256x128xf32>
    %cst_26 = arith.constant dense<0.000000e+00> : vector<128xf32>
    %52 = vector.multi_reduction <add>, %51, %cst_26 [0] : vector<256x128xf32> to vector<128xf32>
    %53 = vector.shape_cast %52 : vector<128xf32> to vector<1x128xf32>
    %54 = tpu.concatenate %48, %53 in 0 : vector<1x128xf32>, vector<1x128xf32> -> vector<2x128xf32>
    %55 = vector.shape_cast %54 : vector<2x128xf32> to vector<1x2x128xf32>
    %c0_27 = arith.constant 0 : index
    %c0_28 = arith.constant 0 : index
    %c0_29 = arith.constant 0 : index
    %56 = vector.load %arg6[%c0_27, %c0_28, %c0_29] : memref<1x2x128xf32, #tpu.memory_space<vmem>>, vector<1x2x128xf32>
    tpu.vector_store %arg6[%c0_27, %c0_28, %c0_29], %55 {strides = array<i32>} : memref<1x2x128xf32, #tpu.memory_space<vmem>>, vector<1x2x128xf32>,
    return
  }
  func.func @transform_0(%arg0: i32) -> (i32, i32, i32, i32) {
    %c0_i32 = arith.constant 0 : i32
    %c0_i32_0 = arith.constant 0 : i32
    %c0_i32_1 = arith.constant 0 : i32
    %c0_i32_2 = arith.constant 0 : i32
    return %arg0, %c0_i32, %c0_i32_0, %c0_i32_1 : i32, i32, i32, i32
  }
  func.func @transform_1(%arg0: i32) -> (i32, i32) {
    %c0_i32 = arith.constant 0 : i32
    %c0_i32_0 = arith.constant 0 : i32
    %c0_i32_1 = arith.constant 0 : i32
    return %c0_i32, %c0_i32_0 : i32, i32
  }
  func.func @transform_2(%arg0: i32) -> (i32, i32) {
    %c0_i32 = arith.constant 0 : i32
    %c0_i32_0 = arith.constant 0 : i32
    %c0_i32_1 = arith.constant 0 : i32
    return %c0_i32, %c0_i32_0 : i32, i32
  }
  func.func @transform_3(%arg0: i32) -> (i32, i32, i32) {
    %c0_i32 = arith.constant 0 : i32
    %c0_i32_0 = arith.constant 0 : i32
    %c0_i32_1 = arith.constant 0 : i32
    %c0_i32_2 = arith.constant 0 : i32
    return %c0_i32, %c0_i32_0, %c0_i32_1 : i32, i32, i32
  }
  func.func @transform_4(%arg0: i32) -> (i32, i32, i32, i32) {
    %c0_i32 = arith.constant 0 : i32
    %c0_i32_0 = arith.constant 0 : i32
    %c0_i32_1 = arith.constant 0 : i32
    %c0_i32_2 = arith.constant 0 : i32
    return %arg0, %c0_i32, %c0_i32_0, %c0_i32_1 : i32, i32, i32, i32
  }
  func.func @transform_5(%arg0: i32) -> (i32, i32, i32) {
    %c0_i32 = arith.constant 0 : i32
    %c0_i32_0 = arith.constant 0 : i32
    %c0_i32_1 = arith.constant 0 : i32
    return %arg0, %c0_i32, %c0_i32_0 : i32, i32, i32
  }
}

module attributes {stable_mosaic.version = 11 : i64} {
  func.func @_bn_relu_conv1_kernel(%arg0: i32, %arg1: i32, %arg2: memref<1x8x16x128xf32, #tpu.memory_space<vmem>>, %arg3: memref<1x128xf32, #tpu.memory_space<vmem>>, %arg4: memref<1x128xf32, #tpu.memory_space<vmem>>, %arg5: memref<128x128xf32, #tpu.memory_space<vmem>>, %arg6: memref<1x8x16x128xf32, #tpu.memory_space<vmem>>, %arg7: memref<1x1x2x128xf32, #tpu.memory_space<vmem>>) attributes {dimension_semantics = [#tpu.dimension_semantics<parallel>, #tpu.dimension_semantics<parallel>], iteration_bounds = array<i64: 2, 2>, scalar_prefetch = 0 : i64, scratch_operands = 0 : i64, tpu.core_type = #tpu.core_type<tc>, window_params = [{transform_indices = @transform_0, window_bounds = array<i64: 1, 8, 16, 128>}, {pipeline_mode = #tpu.pipeline_mode<synchronous>, transform_indices = @transform_1, window_bounds = array<i64: 1, 128>}, {pipeline_mode = #tpu.pipeline_mode<synchronous>, transform_indices = @transform_2, window_bounds = array<i64: 1, 128>}, {pipeline_mode = #tpu.pipeline_mode<synchronous>, transform_indices = @transform_3, window_bounds = array<i64: 128, 128>}, {transform_indices = @transform_4, window_bounds = array<i64: 1, 8, 16, 128>}, {transform_indices = @transform_5, window_bounds = array<i64: 1, 1, 2, 128>}]} {
    %c0 = arith.constant 0 : index
    %c0_0 = arith.constant 0 : index
    %c0_1 = arith.constant 0 : index
    %c0_2 = arith.constant 0 : index
    %0 = vector.load %arg2[%c0, %c0_0, %c0_1, %c0_2] : memref<1x8x16x128xf32, #tpu.memory_space<vmem>>, vector<1x8x16x128xf32>
    %1 = vector.shape_cast %0 : vector<1x8x16x128xf32> to vector<128x128xf32>
    %c0_3 = arith.constant 0 : index
    %c0_4 = arith.constant 0 : index
    %2 = vector.load %arg3[%c0_3, %c0_4] : memref<1x128xf32, #tpu.memory_space<vmem>>, vector<1x128xf32>
    %3 = vector.broadcast %2 : vector<1x128xf32> to vector<128x128xf32>
    %4 = arith.mulf %1, %3 : vector<128x128xf32>
    %c0_5 = arith.constant 0 : index
    %c0_6 = arith.constant 0 : index
    %5 = vector.load %arg4[%c0_5, %c0_6] : memref<1x128xf32, #tpu.memory_space<vmem>>, vector<1x128xf32>
    %6 = vector.broadcast %5 : vector<1x128xf32> to vector<128x128xf32>
    %7 = arith.addf %4, %6 : vector<128x128xf32>
    %cst = arith.constant 0.000000e+00 : f32
    %8 = vector.broadcast %cst : f32 to vector<128x128xf32>
    %9 = arith.maximumf %7, %8 : vector<128x128xf32>
    %c0_7 = arith.constant 0 : index
    %c0_8 = arith.constant 0 : index
    %10 = vector.load %arg5[%c0_7, %c0_8] : memref<128x128xf32, #tpu.memory_space<vmem>>, vector<128x128xf32>
    %cst_9 = arith.constant dense<0.000000e+00> : vector<128x128xf32>
    %11 = tpu.matmul %9, %10, %cst_9 {dimension_numbers = #tpu.dot_dimension_numbers<[1], [0], [0], [1], [0, 0, 1, 1], [], []>} : vector<128x128xf32>, vector<128x128xf32>, vector<128x128xf32> -> vector<128x128xf32>
    %12 = vector.shape_cast %11 : vector<128x128xf32> to vector<1x8x16x128xf32>
    %c0_10 = arith.constant 0 : index
    %c0_11 = arith.constant 0 : index
    %c0_12 = arith.constant 0 : index
    %c0_13 = arith.constant 0 : index
    %13 = vector.load %arg6[%c0_10, %c0_11, %c0_12, %c0_13] : memref<1x8x16x128xf32, #tpu.memory_space<vmem>>, vector<1x8x16x128xf32>
    tpu.vector_store %arg6[%c0_10, %c0_11, %c0_12, %c0_13], %12 {strides = array<i32>} : memref<1x8x16x128xf32, #tpu.memory_space<vmem>>, vector<1x8x16x128xf32>,
    %cst_14 = arith.constant dense<0.000000e+00> : vector<128xf32>
    %14 = vector.multi_reduction <add>, %11, %cst_14 [0] : vector<128x128xf32> to vector<128xf32>
    %15 = vector.shape_cast %14 : vector<128xf32> to vector<1x128xf32>
    %cst_15 = arith.constant 1.280000e+02 : f32
    %16 = vector.broadcast %cst_15 : f32 to vector<1x128xf32>
    %17 = arith.divf %15, %16 : vector<1x128xf32>
    %18 = vector.broadcast %17 : vector<1x128xf32> to vector<128x128xf32>
    %19 = arith.subf %11, %18 : vector<128x128xf32>
    %20 = arith.mulf %19, %19 : vector<128x128xf32>
    %cst_16 = arith.constant dense<0.000000e+00> : vector<128xf32>
    %21 = vector.multi_reduction <add>, %20, %cst_16 [0] : vector<128x128xf32> to vector<128xf32>
    %22 = vector.shape_cast %21 : vector<128xf32> to vector<1x128xf32>
    %23 = tpu.concatenate %17, %22 in 0 : vector<1x128xf32>, vector<1x128xf32> -> vector<2x128xf32>
    %24 = vector.shape_cast %23 : vector<2x128xf32> to vector<1x1x2x128xf32>
    %c0_17 = arith.constant 0 : index
    %c0_18 = arith.constant 0 : index
    %c0_19 = arith.constant 0 : index
    %c0_20 = arith.constant 0 : index
    %25 = vector.load %arg7[%c0_17, %c0_18, %c0_19, %c0_20] : memref<1x1x2x128xf32, #tpu.memory_space<vmem>>, vector<1x1x2x128xf32>
    tpu.vector_store %arg7[%c0_17, %c0_18, %c0_19, %c0_20], %24 {strides = array<i32>} : memref<1x1x2x128xf32, #tpu.memory_space<vmem>>, vector<1x1x2x128xf32>,
    return
  }
  func.func @transform_0(%arg0: i32, %arg1: i32) -> (i32, i32, i32, i32) {
    %c0_i32 = arith.constant 0 : i32
    %c0_i32_0 = arith.constant 0 : i32
    %c0_i32_1 = arith.constant 0 : i32
    return %arg0, %arg1, %c0_i32, %c0_i32_0 : i32, i32, i32, i32
  }
  func.func @transform_1(%arg0: i32, %arg1: i32) -> (i32, i32) {
    %c0_i32 = arith.constant 0 : i32
    %c0_i32_0 = arith.constant 0 : i32
    %c0_i32_1 = arith.constant 0 : i32
    return %c0_i32, %c0_i32_0 : i32, i32
  }
  func.func @transform_2(%arg0: i32, %arg1: i32) -> (i32, i32) {
    %c0_i32 = arith.constant 0 : i32
    %c0_i32_0 = arith.constant 0 : i32
    %c0_i32_1 = arith.constant 0 : i32
    return %c0_i32, %c0_i32_0 : i32, i32
  }
  func.func @transform_3(%arg0: i32, %arg1: i32) -> (i32, i32) {
    %c0_i32 = arith.constant 0 : i32
    %c0_i32_0 = arith.constant 0 : i32
    %c0_i32_1 = arith.constant 0 : i32
    return %c0_i32, %c0_i32_0 : i32, i32
  }
  func.func @transform_4(%arg0: i32, %arg1: i32) -> (i32, i32, i32, i32) {
    %c0_i32 = arith.constant 0 : i32
    %c0_i32_0 = arith.constant 0 : i32
    %c0_i32_1 = arith.constant 0 : i32
    return %arg0, %arg1, %c0_i32, %c0_i32_0 : i32, i32, i32, i32
  }
  func.func @transform_5(%arg0: i32, %arg1: i32) -> (i32, i32, i32, i32) {
    %c0_i32 = arith.constant 0 : i32
    %c0_i32_0 = arith.constant 0 : i32
    %c0_i32_1 = arith.constant 0 : i32
    return %arg0, %arg1, %c0_i32, %c0_i32_0 : i32, i32, i32, i32
  }
}

module attributes {stable_mosaic.version = 11 : i64} {
  func.func @_bn_add_relu_kernel(%arg0: i32, %arg1: i32, %arg2: memref<1x8x16x128xf32, #tpu.memory_space<vmem>>, %arg3: memref<1x128xf32, #tpu.memory_space<vmem>>, %arg4: memref<1x128xf32, #tpu.memory_space<vmem>>, %arg5: memref<1x8x16x128xf32, #tpu.memory_space<vmem>>, %arg6: memref<1x8x16x16xf32, #tpu.memory_space<vmem>>) attributes {dimension_semantics = [#tpu.dimension_semantics<parallel>, #tpu.dimension_semantics<parallel>], iteration_bounds = array<i64: 2, 2>, scalar_prefetch = 0 : i64, scratch_operands = 0 : i64, tpu.core_type = #tpu.core_type<tc>, window_params = [{transform_indices = @transform_0, window_bounds = array<i64: 1, 8, 16, 128>}, {pipeline_mode = #tpu.pipeline_mode<synchronous>, transform_indices = @transform_1, window_bounds = array<i64: 1, 128>}, {pipeline_mode = #tpu.pipeline_mode<synchronous>, transform_indices = @transform_2, window_bounds = array<i64: 1, 128>}, {transform_indices = @transform_3, window_bounds = array<i64: 1, 8, 16, 128>}, {transform_indices = @transform_4, window_bounds = array<i64: 1, 8, 16, 16>}]} {
    %c0 = arith.constant 0 : index
    %c0_0 = arith.constant 0 : index
    %0 = vector.load %arg3[%c0, %c0_0] : memref<1x128xf32, #tpu.memory_space<vmem>>, vector<1x128xf32>
    %1 = vector.shape_cast %0 : vector<1x128xf32> to vector<1x1x1x128xf32>
    %c0_1 = arith.constant 0 : index
    %c0_2 = arith.constant 0 : index
    %2 = vector.load %arg4[%c0_1, %c0_2] : memref<1x128xf32, #tpu.memory_space<vmem>>, vector<1x128xf32>
    %3 = vector.shape_cast %2 : vector<1x128xf32> to vector<1x1x1x128xf32>
    %c0_3 = arith.constant 0 : index
    %c0_4 = arith.constant 0 : index
    %c0_5 = arith.constant 0 : index
    %c0_6 = arith.constant 0 : index
    %4 = vector.load %arg2[%c0_3, %c0_4, %c0_5, %c0_6] : memref<1x8x16x128xf32, #tpu.memory_space<vmem>>, vector<1x8x16x128xf32>
    %c0_7 = arith.constant 0 : index
    %c0_8 = arith.constant 0 : index
    %c0_9 = arith.constant 0 : index
    %c0_10 = arith.constant 0 : index
    %5 = vector.load %arg5[%c0_7, %c0_8, %c0_9, %c0_10] : memref<1x8x16x128xf32, #tpu.memory_space<vmem>>, vector<1x8x16x128xf32>
    %6 = vector.broadcast %1 : vector<1x1x1x128xf32> to vector<1x8x16x128xf32>
    %7 = arith.mulf %4, %6 : vector<1x8x16x128xf32>
    %8 = vector.broadcast %3 : vector<1x1x1x128xf32> to vector<1x8x16x128xf32>
    %9 = arith.addf %7, %8 : vector<1x8x16x128xf32>
    %10 = arith.addf %9, %5 : vector<1x8x16x128xf32>
    %cst = arith.constant 0.000000e+00 : f32
    %11 = vector.broadcast %cst : f32 to vector<1x8x16x128xf32>
    %12 = arith.maximumf %10, %11 : vector<1x8x16x128xf32>
    %13 = vector.extract_strided_slice %12 {offsets = [0, 0, 0, 0], sizes = [1, 8, 16, 16], strides = [1, 1, 1, 1]} : vector<1x8x16x128xf32> to vector<1x8x16x16xf32>
    %c0_11 = arith.constant 0 : index
    %c0_12 = arith.constant 0 : index
    %c0_13 = arith.constant 0 : index
    %c0_14 = arith.constant 0 : index
    %14 = vector.load %arg6[%c0_11, %c0_12, %c0_13, %c0_14] : memref<1x8x16x16xf32, #tpu.memory_space<vmem>>, vector<1x8x16x16xf32>
    tpu.vector_store %arg6[%c0_11, %c0_12, %c0_13, %c0_14], %13 {strides = array<i32>} : memref<1x8x16x16xf32, #tpu.memory_space<vmem>>, vector<1x8x16x16xf32>,
    return
  }
  func.func @transform_0(%arg0: i32, %arg1: i32) -> (i32, i32, i32, i32) {
    %c0_i32 = arith.constant 0 : i32
    %c0_i32_0 = arith.constant 0 : i32
    %c0_i32_1 = arith.constant 0 : i32
    return %arg0, %arg1, %c0_i32, %c0_i32_0 : i32, i32, i32, i32
  }
  func.func @transform_1(%arg0: i32, %arg1: i32) -> (i32, i32) {
    %c0_i32 = arith.constant 0 : i32
    %c0_i32_0 = arith.constant 0 : i32
    %c0_i32_1 = arith.constant 0 : i32
    return %c0_i32, %c0_i32_0 : i32, i32
  }
  func.func @transform_2(%arg0: i32, %arg1: i32) -> (i32, i32) {
    %c0_i32 = arith.constant 0 : i32
    %c0_i32_0 = arith.constant 0 : i32
    %c0_i32_1 = arith.constant 0 : i32
    return %c0_i32, %c0_i32_0 : i32, i32
  }
  func.func @transform_3(%arg0: i32, %arg1: i32) -> (i32, i32, i32, i32) {
    %c0_i32 = arith.constant 0 : i32
    %c0_i32_0 = arith.constant 0 : i32
    %c0_i32_1 = arith.constant 0 : i32
    return %arg0, %arg1, %c0_i32, %c0_i32_0 : i32, i32, i32, i32
  }
  func.func @transform_4(%arg0: i32, %arg1: i32) -> (i32, i32, i32, i32) {
    %c0_i32 = arith.constant 0 : i32
    %c0_i32_0 = arith.constant 0 : i32
    %c0_i32_1 = arith.constant 0 : i32
    return %arg0, %arg1, %c0_i32, %c0_i32_0 : i32, i32, i32, i32
  }
}

</mosaic_0001>

<llo_original>
// kernel: bottleneck_pallas.4
$region0: #{bottleneck_pallas.4}
  #allocation0 [shape = 'u32[]', space=smem, size = 0x4, offset = 0x4, fixed_abs, tag = 'smem constant byte address 0x4 - core index']
  #allocation1 [shape = 'u32[144,128]{1,0:T(1,128)}', space=vmem, size = 0x12000, scoped, tag = 'internal scratch']
  %s0 = inlined_call_operand.vmem [shape: f32[2,16,16,128], index: 0, kind: input, shape index: {}]
  %s1 = inlined_call_operand.vmem [shape: f32[128,128], index: 1, kind: input, shape index: {}]
  %s2 = inlined_call_operand.vmem [shape: f32[2,16,16,128], index: 2, kind: output, shape index: {0}]
  %s3 = inlined_call_operand.vmem [shape: f32[2,2,2,128], index: 3, kind: output, shape index: {1}]
  %4 = xla_tuple %s2, %s3
  %s5 = sld [smem:[#allocation0]]
  $region49: #{bottleneck_pallas.4} parent=0
    _
  %s7 = ssub.s32 1, %s5
  %s8 = scalar_select 0, %s7, %s5
  loop: start=0, step=1, limit=6
  $region2: #{bottleneck_pallas.4} parent=0 // loop_pre_header
    _
  $region3: #{bottleneck_pallas.4} parent=0 // loop_header
    %s10 = sphi 0, %s14
    %p11 = scmp.ge.s32.totalorder %s10, 6
    %s17 = sphi 0, %s29
    %s18 = sphi 0, %s25
    %s19 = sphi 0, %s17
    %s20 = sphi 0, %s18
    %s21 = sphi 0, %s19
    %s22 = sphi 0, %s20
    %s34 = sphi 0, %s36
    %s37 = sphi 0, %s34
    %s38 = sphi 0, %s37
    %s54 = sphi 0, %s38
    %s58 = sphi 0, %s58
    %s60 = sphi 0, %s58
    %s61 = sphi 0, %s60
    %s75 = sphi 0, %s61
    %s83 = sphi 0, %s85
    %s86 = sphi 0, %s83
    %s87 = sphi 0, %s86
    %s103 = sphi 0, %s87
    %s111 = sphi 0, %s113
    %s114 = sphi 0, %s111
    %s115 = sphi 0, %s114
    %s131 = sphi 0, %s115
  $region4: #{bottleneck_pallas.4} parent=0 // loop_header_branch
    %13 = sbr.rel (%p11) target = $region8
  $region5: #{bottleneck_pallas.4} parent=0 // loop_body
    %s15 = ssub.s32 %s10, 1
    %s16 = ssub.s32 %s10, 2
    %s23 = sadd.s32 1, %s18
    %p24 = scmp.ge.s32.totalorder %s23, 2
    %s25 = scalar_select %p24, 0, %s23
    %s26 = sadd.s32 1, %s17
    %s27 = scalar_select %p24, %s26, %s17
    %p28 = scmp.ge.s32.totalorder %s27, 2
    %s29 = scalar_select %p28, 0, %s27
    %s30 = ssub.s32 %s17, %s29
    %s31 = ssub.s32 %s18, %s25
    %s32 = sor.u32 %s30, %s31
    %p33 = scmp.eq.s32.totalorder %s32, 0
    %s35 = sadd.s32 %s34, 1
    %s36 = scalar_select %p33, %s34, %s35
    %p39 = pneg %p33
    %p40 = scmp.eq.s32.totalorder %s10, 3
    %p41 = por %p39, %p40
    %p42 = scmp.ne.s32.totalorder %s34, %s37
    %p43 = scmp.eq.s32.totalorder %s10, 0
    %p44 = por %p42, %p43
    %p45 = scmp.ne.s32.totalorder %s34, %s37
    %p46 = scmp.eq.s32.totalorder %s15, 3
    %p47 = por %p45, %p46
    %p48 = scmp.ne.s32.totalorder %s37, %s38
    %p49 = scmp.eq.s32.totalorder %s15, 0
    %p50 = por %p48, %p49
    %p51 = scmp.ne.s32.totalorder %s37, %s38
    %p52 = scmp.eq.s32.totalorder %s16, 3
    %p53 = por %p51, %p52
    %p55 = scmp.ne.s32.totalorder %s38, %s54
    %p56 = scmp.eq.s32.totalorder %s16, 0
    %p57 = por %p55, %p56
    %s59 = sadd.s32 %s58, 1
    %p62 = scmp.eq.s32.totalorder %s10, 3
    %p63 = scmp.ne.s32.totalorder %s58, %s60
    %p64 = scmp.eq.s32.totalorder %s10, 0
    %p65 = por %p63, %p64
    %p66 = scmp.ne.s32.totalorder %s58, %s60
    %p67 = scmp.eq.s32.totalorder %s15, 3
    %p68 = por %p66, %p67
    %p69 = scmp.ne.s32.totalorder %s60, %s61
    %p70 = scmp.eq.s32.totalorder %s15, 0
    %p71 = por %p69, %p70
    %p72 = scmp.ne.s32.totalorder %s60, %s61
    %p73 = scmp.eq.s32.totalorder %s16, 3
    %p74 = por %p72, %p73
    %p76 = scmp.ne.s32.totalorder %s61, %s75
    %p77 = scmp.eq.s32.totalorder %s16, 0
    %p78 = por %p76, %p77
    %s79 = ssub.s32 %s17, %s29
    %s80 = ssub.s32 %s18, %s25
    %s81 = sor.u32 %s79, %s80
    %p82 = scmp.eq.s32.totalorder %s81, 0
    %s84 = sadd.s32 %s83, 1
    %s85 = scalar_select %p82, %s83, %s84
    %p88 = pneg %p82
    %p89 = scmp.eq.s32.totalorder %s10, 3
    %p90 = por %p88, %p89
    %p91 = scmp.ne.s32.totalorder %s83, %s86
    %p92 = scmp.eq.s32.totalorder %s10, 0
    %p93 = por %p91, %p92
    %p94 = scmp.ne.s32.totalorder %s83, %s86
    %p95 = scmp.eq.s32.totalorder %s15, 3
    %p96 = por %p94, %p95
    %p97 = scmp.ne.s32.totalorder %s86, %s87
    %p98 = scmp.eq.s32.totalorder %s15, 0
    %p99 = por %p97, %p98
    %p100 = scmp.ne.s32.totalorder %s86, %s87
    %p101 = scmp.eq.s32.totalorder %s16, 3
    %p102 = por %p100, %p101
    %p104 = scmp.ne.s32.totalorder %s87, %s103
    %p105 = scmp.eq.s32.totalorder %s16, 0
    %p106 = por %p104, %p105
    %s107 = ssub.s32 %s17, %s29
    %s108 = ssub.s32 %s18, %s25
    %s109 = sor.u32 %s107, %s108
    %p110 = scmp.eq.s32.totalorder %s109, 0
    %s112 = sadd.s32 %s111, 1
    %s113 = scalar_select %p110, %s111, %s112
    %p116 = pneg %p110
    %p117 = scmp.eq.s32.totalorder %s10, 3
    %p118 = por %p116, %p117
    %p119 = scmp.ne.s32.totalorder %s111, %s114
    %p120 = scmp.eq.s32.totalorder %s10, 0
    %p121 = por %p119, %p120
    %p122 = scmp.ne.s32.totalorder %s111, %s114
    %p123 = scmp.eq.s32.totalorder %s15, 3
    %p124 = por %p122, %p123
    %p125 = scmp.ne.s32.totalorder %s114, %s115
    %p126 = scmp.eq.s32.totalorder %s15, 0
    %p127 = por %p125, %p126
    %p128 = scmp.ne.s32.totalorder %s114, %s115
    %p129 = scmp.eq.s32.totalorder %s16, 3
    %p130 = por %p128, %p129
    %p132 = scmp.ne.s32.totalorder %s115, %s131
    %p133 = scmp.eq.s32.totalorder %s16, 0
    %p134 = por %p132, %p133
    %p135 = scmp.le.s32.totalorder 1, %s10
    %p136 = scmp.lt.s32.totalorder %s10, 5
    %p137 = pnand %p135, %p136
    %p138 = pneg %p137
    // Predicated region
    $region9: #{bottleneck_pallas.4} parent=5 // pred_check
      _
    $region10: #{bottleneck_pallas.4} parent=5 // pred_check_branch
      %140 = sbr.rel (%p137) target = $region12
    $region11: #{bottleneck_pallas.4} parent=5 // pred_region
      %s141 = ssub.s32 %s10, 1
      // Predicated region
      $region13: #{bottleneck_pallas.4} parent=11 // pred_check
        %p142 = pneg %p71
      $region14: #{bottleneck_pallas.4} parent=11 // pred_check_branch
        %144 = sbr.rel (%p142) target = $region16
      $region15: #{bottleneck_pallas.4} parent=11 // pred_region
        _
      $region16: #{bottleneck_pallas.4} parent=11 // pred_fallthru
        _
    $region12: #{bottleneck_pallas.4} parent=5 // pred_fallthru
      _
    %p145 = scmp.lt.s32.totalorder %s10, 4
    // Predicated region
    $region17: #{bottleneck_pallas.4} parent=5 // pred_check
      %p146 = pneg %p145
    $region18: #{bottleneck_pallas.4} parent=5 // pred_check_branch
      %148 = sbr.rel (%p146) target = $region20
    $region19: #{bottleneck_pallas.4} parent=5 // pred_region
      // Predicated region
      $region21: #{bottleneck_pallas.4} parent=19 // pred_check
        %p149 = pneg %p44
      $region22: #{bottleneck_pallas.4} parent=19 // pred_check_branch
        %151 = sbr.rel (%p149) target = $region24
      $region23: #{bottleneck_pallas.4} parent=19 // pred_region
        %s152 = smul.u32 8, %s18
        %p153 = scmp.lt.s32.totalorder %s17, 1
        %s154 = scalar_select %p153, %s17, 1
        %p155 = scmp.lt.s32.totalorder %s152, 15
        %s156 = scalar_select %p155, %s152, 15
        %s157 = smul.addr %s156, 2
        %s158 = smul.addr %s154, 32
        %s159 = sadd.s32 %s157, %s158
        %s160 = smul.addr %s159, 8
        %s161 = scalar_lea.vmem %s0, %s160
        %s162 = smul.u32 8, %s18
      $region24: #{bottleneck_pallas.4} parent=19 // pred_fallthru
        _
    $region20: #{bottleneck_pallas.4} parent=5 // pred_fallthru
      _
    %p163 = scmp.le.s32.totalorder 1, %s10
    %p164 = scmp.lt.s32.totalorder %s10, 5
    %p165 = pnand %p163, %p164
    %p166 = pneg %p165
    // Predicated region
    $region25: #{bottleneck_pallas.4} parent=5 // pred_check
      _
    $region26: #{bottleneck_pallas.4} parent=5 // pred_check_branch
      %168 = sbr.rel (%p165) target = $region28
    $region27: #{bottleneck_pallas.4} parent=5 // pred_region
      %s169 = ssub.s32 %s10, 1
      %s170 = smul.u32 8, %s20
      %p171 = scmp.lt.s32.totalorder %s19, 1
      %s172 = scalar_select %p171, %s19, 1
      %p173 = scmp.lt.s32.totalorder %s170, 15
      %s174 = scalar_select %p173, %s170, 15
      %s175 = smul.addr %s174, 2
      %s176 = smul.addr %s172, 32
      %s177 = sadd.s32 %s175, %s176
      %s178 = smul.addr %s177, 8
      %s179 = scalar_lea.vmem %s0, %s178
      %p180 = pneg %p50
      %p181 = pneg %p47
      %p182 = pneg %p71
      %p183 = pneg %p68
      %p184 = pneg %p99
      %p185 = pneg %p96
      %s186 = smul.u32 8, %s20
      %p187 = scmp.lt.s32.totalorder %s19, 1
      %s188 = scalar_select %p187, %s19, 1
      %p189 = scmp.lt.s32.totalorder %s186, 15
      %s190 = scalar_select %p189, %s186, 15
      %s191 = smul.addr %s190, 2
      %s192 = smul.addr %s188, 32
      %s193 = sadd.s32 %s191, %s192
      %s194 = smul.addr %s193, 8
      %s195 = scalar_lea.vmem %s2, %s194
      %p196 = pneg %p127
      %p197 = pneg %p124
      %p198 = scmp.lt.s32.totalorder %s19, 1
      %s199 = scalar_select %p198, %s19, 1
      %p200 = scmp.lt.s32.totalorder %s20, 1
      %s201 = scalar_select %p200, %s20, 1
      %s202 = smul.addr %s199, 2
      %s203 = sadd.s32 %s201, %s202
      %s204 = smul.addr %s203, 2
      %s205 = scalar_lea.vmem %s3, %s204
      %s206 = smul.u32 8, %s20
      %p207 = scmp.lt.s32.totalorder %s19, 1
      %s208 = scalar_select %p207, %s19, 1
      %p209 = scmp.lt.s32.totalorder %s206, 15
      %s210 = scalar_select %p209, %s206, 15
      %s211 = smul.addr %s210, 2
      %s212 = smul.addr %s208, 32
      %s213 = sadd.s32 %s211, %s212
      %s214 = smul.addr %s213, 8
      %s215 = scalar_lea.vmem %s0, %s214
      %s216 = smul.u32 8, %s20
      %s217 = smul.u32 8, %s20
      %p218 = scmp.lt.s32.totalorder %s19, 1
      %s219 = scalar_select %p218, %s19, 1
      %p220 = scmp.lt.s32.totalorder %s217, 15
      %s221 = scalar_select %p220, %s217, 15
      %s222 = smul.addr %s221, 2
      %s223 = smul.addr %s219, 32
      %s224 = sadd.s32 %s222, %s223
      %s225 = smul.addr %s224, 8
      %s226 = scalar_lea.vmem %s2, %s225
      %s227 = smul.u32 8, %s20
      %p228 = scmp.lt.s32.totalorder %s19, 1
      %s229 = scalar_select %p228, %s19, 1
      %p230 = scmp.lt.s32.totalorder %s20, 1
      %s231 = scalar_select %p230, %s20, 1
      %s232 = smul.addr %s229, 2
      %s233 = sadd.s32 %s231, %s232
      %s234 = smul.addr %s233, 2
      %s235 = scalar_lea.vmem %s3, %s234
      %v236 = vld [vmem:[%s215] sm:$0xff]
      %v237 = vld [vmem:[%s215 + $0x8] sm:$0xff]
      %v238 = vld [vmem:[%s215 + $0x10] sm:$0xff]
      %v239 = vld [vmem:[%s215 + $0x18] sm:$0xff]
      %v240 = vld [vmem:[%s215 + $0x20] sm:$0xff]
      %v241 = vld [vmem:[%s215 + $0x28] sm:$0xff]
      %v242 = vld [vmem:[%s215 + $0x30] sm:$0xff]
      %v243 = vld [vmem:[%s215 + $0x38] sm:$0xff]
      %v244 = vld [vmem:[%s215 + $0x40] sm:$0xff]
      %v245 = vld [vmem:[%s215 + $0x48] sm:$0xff]
      %v246 = vld [vmem:[%s215 + $0x50] sm:$0xff]
      %v247 = vld [vmem:[%s215 + $0x58] sm:$0xff]
      %v248 = vld [vmem:[%s215 + $0x60] sm:$0xff]
      %v249 = vld [vmem:[%s215 + $0x68] sm:$0xff]
      %v250 = vld [vmem:[%s215 + $0x70] sm:$0xff]
      %v251 = vld [vmem:[%s215 + $0x78] sm:$0xff]
      %v252 = vld [vmem:[%s1] sm:$0xff]
      %v253 = vld [vmem:[%s1 + $0x8] sm:$0xff]
      %v254 = vld [vmem:[%s1 + $0x10] sm:$0xff]
      %v255 = vld [vmem:[%s1 + $0x18] sm:$0xff]
      %v256 = vld [vmem:[%s1 + $0x20] sm:$0xff]
      %v257 = vld [vmem:[%s1 + $0x28] sm:$0xff]
      %v258 = vld [vmem:[%s1 + $0x30] sm:$0xff]
      %v259 = vld [vmem:[%s1 + $0x38] sm:$0xff]
      %v260 = vld [vmem:[%s1 + $0x40] sm:$0xff]
      %v261 = vld [vmem:[%s1 + $0x48] sm:$0xff]
      %v262 = vld [vmem:[%s1 + $0x50] sm:$0xff]
      %v263 = vld [vmem:[%s1 + $0x58] sm:$0xff]
      %v264 = vld [vmem:[%s1 + $0x60] sm:$0xff]
      %v265 = vld [vmem:[%s1 + $0x68] sm:$0xff]
      %v266 = vld [vmem:[%s1 + $0x70] sm:$0xff]
      %v267 = vld [vmem:[%s1 + $0x78] sm:$0xff]
      %268 = vmatprep.subr.mxu0 0.0
      %269 = vmatpush1.msra.mxu0 %v267
      %270 = vmatprep.subr.mxu0 0.0
      %271 = vmatpush1.msra.mxu0 %v266
      %272 = vmatprep.subr.mxu0 0.0
      %273 = vmatpush1.msra.mxu0 %v265
      %274 = vmatprep.subr.mxu0 0.0
      %275 = vmatpush1.msra.mxu0 %v264
      %276 = vmatprep.subr.mxu0 0.0
      %277 = vmatpush1.msra.mxu0 %v263
      %278 = vmatprep.subr.mxu0 0.0
      %279 = vmatpush1.msra.mxu0 %v262
      %280 = vmatprep.subr.mxu0 0.0
      %281 = vmatpush1.msra.mxu0 %v261
      %282 = vmatprep.subr.mxu0 0.0
      %283 = vmatpush1.msra.mxu0 %v260
      %284 = vmatprep.subr.mxu0 0.0
      %285 = vmatpush1.msra.mxu0 %v259
      %286 = vmatprep.subr.mxu0 0.0
      %287 = vmatpush1.msra.mxu0 %v258
      %288 = vmatprep.subr.mxu0 0.0
      %289 = vmatpush1.msra.mxu0 %v257
      %290 = vmatprep.subr.mxu0 0.0
      %291 = vmatpush1.msra.mxu0 %v256
      %292 = vmatprep.subr.mxu0 0.0
      %293 = vmatpush1.msra.mxu0 %v255
      %294 = vmatprep.subr.mxu0 0.0
      %295 = vmatpush1.msra.mxu0 %v254
      %296 = vmatprep.subr.mxu0 0.0
      %297 = vmatpush1.msra.mxu0 %v253
      %298 = vmatprep.subr.mxu0 0.0
      %299 = vmatpush1.msra.mxu0 %v252
      %300 = vmatprep.subr.mxu0 0.0
      %301 = vmatpush2.msra.mxu0 0.0
      %302 = vmatprep.subr.mxu0 0.0
      %303 = vmatpush2.msra.mxu0 0.0
      %304 = vmatprep.subr.mxu0 0.0
      %305 = vmatpush2.msra.mxu0 0.0
      %306 = vmatprep.subr.mxu0 0.0
      %307 = vmatpush2.msra.mxu0 0.0
      %308 = vmatprep.subr.mxu0 0.0
      %309 = vmatpush2.msra.mxu0 0.0
      %310 = vmatprep.subr.mxu0 0.0
      %311 = vmatpush2.msra.mxu0 0.0
      %312 = vmatprep.subr.mxu0 0.0
      %313 = vmatpush2.msra.mxu0 0.0
      %314 = vmatprep.subr.mxu0 0.0
      %315 = vmatpush2.msra.mxu0 0.0
      %316 = vmatprep.subr.mxu0 0.0
      %317 = vmatpush2.msra.mxu0 0.0
      %318 = vmatprep.subr.mxu0 0.0
      %319 = vmatpush2.msra.mxu0 0.0
      %320 = vmatprep.subr.mxu0 0.0
      %321 = vmatpush2.msra.mxu0 0.0
      %322 = vmatprep.subr.mxu0 0.0
      %323 = vmatpush2.msra.mxu0 0.0
      %324 = vmatprep.subr.mxu0 0.0
      %325 = vmatpush2.msra.mxu0 0.0
      %326 = vmatprep.subr.mxu0 0.0
      %327 = vmatpush2.msra.mxu0 0.0
      %328 = vmatprep.subr.mxu0 0.0
      %329 = vmatpush2.msra.mxu0 0.0
      %330 = vmatprep.subr.mxu0 0.0
      %331 = vmatpush2.msra.mxu0 0.0
      %332 = vmatprep.mubr.f32.mxu0 0.0
      %333 = vmatmul.mubr.f32.gmra.mxu0 %v236
      %v334 = vpop.f32.mrf.mxu0
      %v335 = vadd.f32 0.0, %v334
      %v336 = vpop.f32.mrf.mxu0
      %337 = vmatprep.mubr.f32.mxu0 0.0
      %338 = vmatmul.mubr.f32.gmra.mxu0 %v237
      %v339 = vpop.f32.mrf.mxu0
      %v340 = vadd.f32 0.0, %v339
      %v341 = vpop.f32.mrf.mxu0
      %342 = vmatprep.mubr.f32.mxu0 0.0
      %343 = vmatmul.mubr.f32.gmra.mxu0 %v238
      %v344 = vpop.f32.mrf.mxu0
      %v345 = vadd.f32 0.0, %v344
      %v346 = vpop.f32.mrf.mxu0
      %347 = vmatprep.mubr.f32.mxu0 0.0
      %348 = vmatmul.mubr.f32.gmra.mxu0 %v239
      %v349 = vpop.f32.mrf.mxu0
      %v350 = vadd.f32 0.0, %v349
      %v351 = vpop.f32.mrf.mxu0
      %352 = vmatprep.mubr.f32.mxu0 0.0
      %353 = vmatmul.mubr.f32.gmra.mxu0 %v240
      %v354 = vpop.f32.mrf.mxu0
      %v355 = vadd.f32 0.0, %v354
      %v356 = vpop.f32.mrf.mxu0
      %357 = vmatprep.mubr.f32.mxu0 0.0
      %358 = vmatmul.mubr.f32.gmra.mxu0 %v241
      %v359 = vpop.f32.mrf.mxu0
      %v360 = vadd.f32 0.0, %v359
      %v361 = vpop.f32.mrf.mxu0
      %362 = vmatprep.mubr.f32.mxu0 0.0
      %363 = vmatmul.mubr.f32.gmra.mxu0 %v242
      %v364 = vpop.f32.mrf.mxu0
      %v365 = vadd.f32 0.0, %v364
      %v366 = vpop.f32.mrf.mxu0
      %367 = vmatprep.mubr.f32.mxu0 0.0
      %368 = vmatmul.mubr.f32.gmra.mxu0 %v243
      %v369 = vpop.f32.mrf.mxu0
      %v370 = vadd.f32 0.0, %v369
      %v371 = vpop.f32.mrf.mxu0
      %372 = vmatprep.mubr.f32.mxu0 0.0
      %373 = vmatmul.mubr.f32.gmra.mxu0 %v244
      %v374 = vpop.f32.mrf.mxu0
      %v375 = vadd.f32 0.0, %v374
      %v376 = vpop.f32.mrf.mxu0
      %377 = vmatprep.mubr.f32.mxu0 0.0
      %378 = vmatmul.mubr.f32.gmra.mxu0 %v245
      %v379 = vpop.f32.mrf.mxu0
      %v380 = vadd.f32 0.0, %v379
      %v381 = vpop.f32.mrf.mxu0
      %382 = vmatprep.mubr.f32.mxu0 0.0
      %383 = vmatmul.mubr.f32.gmra.mxu0 %v246
      %v384 = vpop.f32.mrf.mxu0
      %v385 = vadd.f32 0.0, %v384
      %v386 = vpop.f32.mrf.mxu0
      %387 = vmatprep.mubr.f32.mxu0 0.0
      %388 = vmatmul.mubr.f32.gmra.mxu0 %v247
      %v389 = vpop.f32.mrf.mxu0
      %v390 = vadd.f32 0.0, %v389
      %v391 = vpop.f32.mrf.mxu0
      %392 = vmatprep.mubr.f32.mxu0 0.0
      %393 = vmatmul.mubr.f32.gmra.mxu0 %v248
      %v394 = vpop.f32.mrf.mxu0
      %v395 = vadd.f32 0.0, %v394
      %v396 = vpop.f32.mrf.mxu0
      %397 = vmatprep.mubr.f32.mxu0 0.0
      %398 = vmatmul.mubr.f32.gmra.mxu0 %v249
      %v399 = vpop.f32.mrf.mxu0
      %v400 = vadd.f32 0.0, %v399
      %v401 = vpop.f32.mrf.mxu0
      %402 = vmatprep.mubr.f32.mxu0 0.0
      %403 = vmatmul.mubr.f32.gmra.mxu0 %v250
      %v404 = vpop.f32.mrf.mxu0
      %v405 = vadd.f32 0.0, %v404
      %v406 = vpop.f32.mrf.mxu0
      %407 = vmatprep.mubr.f32.mxu0 0.0
      %408 = vmatmul.mubr.f32.gmra.mxu0 %v251
      %v409 = vpop.f32.mrf.mxu0
      %v410 = vadd.f32 0.0, %v409
      %v411 = vpop.f32.mrf.mxu0
      %412 = vdwg.mxu0
      %413 = vst [vmem:[%s226] sm:$0xff] %v335
      %414 = vst [vmem:[%s226 + $0x8] sm:$0xff] %v340
      %415 = vst [vmem:[%s226 + $0x10] sm:$0xff] %v345
      %416 = vst [vmem:[%s226 + $0x18] sm:$0xff] %v350
      %417 = vst [vmem:[%s226 + $0x20] sm:$0xff] %v355
      %418 = vst [vmem:[%s226 + $0x28] sm:$0xff] %v360
      %419 = vst [vmem:[%s226 + $0x30] sm:$0xff] %v365
      %420 = vst [vmem:[%s226 + $0x38] sm:$0xff] %v370
      %421 = vst [vmem:[%s226 + $0x40] sm:$0xff] %v375
      %422 = vst [vmem:[%s226 + $0x48] sm:$0xff] %v380
      %423 = vst [vmem:[%s226 + $0x50] sm:$0xff] %v385
      %424 = vst [vmem:[%s226 + $0x58] sm:$0xff] %v390
      %425 = vst [vmem:[%s226 + $0x60] sm:$0xff] %v395
      %426 = vst [vmem:[%s226 + $0x68] sm:$0xff] %v400
      %427 = vst [vmem:[%s226 + $0x70] sm:$0xff] %v405
      %428 = vst [vmem:[%s226 + $0x78] sm:$0xff] %v410
      %v429 = vadd.f32 %v335, %v340
      %v430 = vadd.f32 %v429, %v345
      %v431 = vadd.f32 %v430, %v350
      %v432 = vadd.f32 %v431, %v355
      %v433 = vadd.f32 %v432, %v360
      %v434 = vadd.f32 %v433, %v365
      %v435 = vadd.f32 %v434, %v370
      %v436 = vadd.f32 %v435, %v375
      %v437 = vadd.f32 %v436, %v380
      %v438 = vadd.f32 %v437, %v385
      %v439 = vadd.f32 %v438, %v390
      %v440 = vadd.f32 %v439, %v395
      %v441 = vadd.f32 %v440, %v400
      %v442 = vadd.f32 %v441, %v405
      %v443 = vadd.f32 %v442, %v410
      %v444 = vrot.slane %v443, 4
      %v445 = vadd.f32 %v443, %v444
      %v446 = vrot.slane %v445, 2
      %v447 = vadd.f32 %v445, %v446
      %v448 = vrot.slane %v447, 1
      %v449 = vadd.f32 %v447, %v448
      %v450 = vrcp.pop 128.0
      %v451 = vmul.f32 %v449, %v450
      %v452 = vsub.f32 %v335, %v451
      %v453 = vsub.f32 %v340, %v451
      %v454 = vsub.f32 %v345, %v451
      %v455 = vsub.f32 %v350, %v451
      %v456 = vsub.f32 %v355, %v451
      %v457 = vsub.f32 %v360, %v451
      %v458 = vsub.f32 %v365, %v451
      %v459 = vsub.f32 %v370, %v451
      %v460 = vsub.f32 %v375, %v451
      %v461 = vsub.f32 %v380, %v451
      %v462 = vsub.f32 %v385, %v451
      %v463 = vsub.f32 %v390, %v451
      %v464 = vsub.f32 %v395, %v451
      %v465 = vsub.f32 %v400, %v451
      %v466 = vsub.f32 %v405, %v451
      %v467 = vsub.f32 %v410, %v451
      %v468 = vmul.f32 %v452, %v452
      %v469 = vmul.f32 %v453, %v453
      %v470 = vmul.f32 %v454, %v454
      %v471 = vmul.f32 %v455, %v455
      %v472 = vmul.f32 %v456, %v456
      %v473 = vmul.f32 %v457, %v457
      %v474 = vmul.f32 %v458, %v458
      %v475 = vmul.f32 %v459, %v459
      %v476 = vmul.f32 %v460, %v460
      %v477 = vmul.f32 %v461, %v461
      %v478 = vmul.f32 %v462, %v462
      %v479 = vmul.f32 %v463, %v463
      %v480 = vmul.f32 %v464, %v464
      %v481 = vmul.f32 %v465, %v465
      %v482 = vmul.f32 %v466, %v466
      %v483 = vmul.f32 %v467, %v467
      %v484 = vadd.f32 %v468, %v469
      %v485 = vadd.f32 %v484, %v470
      %v486 = vadd.f32 %v485, %v471
      %v487 = vadd.f32 %v486, %v472
      %v488 = vadd.f32 %v487, %v473
      %v489 = vadd.f32 %v488, %v474
      %v490 = vadd.f32 %v489, %v475
      %v491 = vadd.f32 %v490, %v476
      %v492 = vadd.f32 %v491, %v477
      %v493 = vadd.f32 %v492, %v478
      %v494 = vadd.f32 %v493, %v479
      %v495 = vadd.f32 %v494, %v480
      %v496 = vadd.f32 %v495, %v481
      %v497 = vadd.f32 %v496, %v482
      %v498 = vadd.f32 %v497, %v483
      %v499 = vrot.slane %v498, 4
      %v500 = vadd.f32 %v498, %v499
      %v501 = vrot.slane %v500, 2
      %v502 = vadd.f32 %v500, %v501
      %v503 = vrot.slane %v502, 1
      %v504 = vadd.f32 %v502, %v503
      %vm505 = vcmask 1040384
      %v506 = vsel %vm505, %v451, %v504
      %507 = vst [vmem:[%s235] sm:$0x3] %v506
      %s508 = smul.u32 8, %s20
      %p509 = scmp.lt.s32.totalorder %s19, 1
      %s510 = scalar_select %p509, %s19, 1
      %p511 = scmp.lt.s32.totalorder %s508, 15
      %s512 = scalar_select %p511, %s508, 15
      %s513 = smul.addr %s512, 2
      %s514 = smul.addr %s510, 32
      %s515 = sadd.s32 %s513, %s514
      %s516 = smul.addr %s515, 8
      %s517 = scalar_lea.vmem %s2, %s516
      %p518 = scmp.lt.s32.totalorder %s19, 1
      %s519 = scalar_select %p518, %s19, 1
      %p520 = scmp.lt.s32.totalorder %s20, 1
      %s521 = scalar_select %p520, %s20, 1
      %s522 = smul.addr %s519, 2
      %s523 = sadd.s32 %s521, %s522
      %s524 = smul.addr %s523, 2
      %s525 = scalar_lea.vmem %s3, %s524
      // Predicated region
      $region29: #{bottleneck_pallas.4} parent=27 // pred_check
        %p526 = pneg %p96
      $region30: #{bottleneck_pallas.4} parent=27 // pred_check_branch
        %528 = sbr.rel (%p526) target = $region32
      $region31: #{bottleneck_pallas.4} parent=27 // pred_region
        %s529 = smul.u32 8, %s20
      $region32: #{bottleneck_pallas.4} parent=27 // pred_fallthru
        _
      // Predicated region
      $region33: #{bottleneck_pallas.4} parent=27 // pred_check
        %p530 = pneg %p124
      $region34: #{bottleneck_pallas.4} parent=27 // pred_check_branch
        %532 = sbr.rel (%p530) target = $region36
      $region35: #{bottleneck_pallas.4} parent=27 // pred_region
        _
      $region36: #{bottleneck_pallas.4} parent=27 // pred_fallthru
        _
    $region28: #{bottleneck_pallas.4} parent=5 // pred_fallthru
      _
    %p533 = scmp.le.s32.totalorder 2, %s10
    // Predicated region
    $region37: #{bottleneck_pallas.4} parent=5 // pred_check
      %p534 = pneg %p533
    $region38: #{bottleneck_pallas.4} parent=5 // pred_check_branch
      %536 = sbr.rel (%p534) target = $region40
    $region39: #{bottleneck_pallas.4} parent=5 // pred_region
      %s537 = ssub.s32 %s10, 2
      // Predicated region
      $region41: #{bottleneck_pallas.4} parent=39 // pred_check
        %p538 = pneg %p102
      $region42: #{bottleneck_pallas.4} parent=39 // pred_check_branch
        %540 = sbr.rel (%p538) target = $region44
      $region43: #{bottleneck_pallas.4} parent=39 // pred_region
        %s541 = smul.u32 8, %s22
        %p542 = scmp.lt.s32.totalorder %s21, 1
        %s543 = scalar_select %p542, %s21, 1
        %p544 = scmp.lt.s32.totalorder %s541, 15
        %s545 = scalar_select %p544, %s541, 15
        %s546 = smul.addr %s545, 2
        %s547 = smul.addr %s543, 32
        %s548 = sadd.s32 %s546, %s547
        %s549 = smul.addr %s548, 8
        %s550 = scalar_lea.vmem %s2, %s549
      $region44: #{bottleneck_pallas.4} parent=39 // pred_fallthru
        _
      // Predicated region
      $region45: #{bottleneck_pallas.4} parent=39 // pred_check
        %p551 = pneg %p130
      $region46: #{bottleneck_pallas.4} parent=39 // pred_check_branch
        %553 = sbr.rel (%p551) target = $region48
      $region47: #{bottleneck_pallas.4} parent=39 // pred_region
        %p554 = scmp.lt.s32.totalorder %s21, 1
        %s555 = scalar_select %p554, %s21, 1
        %p556 = scmp.lt.s32.totalorder %s22, 1
        %s557 = scalar_select %p556, %s22, 1
        %s558 = smul.addr %s555, 2
        %s559 = sadd.s32 %s557, %s558
        %s560 = smul.addr %s559, 2
        %s561 = scalar_lea.vmem %s3, %s560
      $region48: #{bottleneck_pallas.4} parent=39 // pred_fallthru
        _
    $region40: #{bottleneck_pallas.4} parent=5 // pred_fallthru
      _
  $region6: #{bottleneck_pallas.4} parent=0 // loop_footer
    %s14 = sadd.s32 1, %s10
  $region7: #{bottleneck_pallas.4} parent=0 // loop_footer_branch
    %9 = sbr.rel target = $region3
  $region8: #{bottleneck_pallas.4} parent=0 // loop_exit
    _

// kernel: bottleneck_pallas.7
$region0: #{bottleneck_pallas.7}
  #allocation0 [shape = 'u32[]', space=smem, size = 0x4, offset = 0x4, fixed_abs, tag = 'smem constant byte address 0x4 - core index']
  #allocation1 [shape = 'u32[144,128]{1,0:T(1,128)}', space=vmem, size = 0x12000, scoped, tag = 'internal scratch']
  %s0 = inlined_call_operand.vmem [shape: f32[2,16,16,128], index: 0, kind: input, shape index: {}]
  %s1 = inlined_call_operand.vmem [shape: f32[1,128], index: 1, kind: input, shape index: {}]
  %s2 = inlined_call_operand.vmem [shape: f32[1,128], index: 2, kind: input, shape index: {}]
  %s3 = inlined_call_operand.vmem [shape: f32[2,16,16,128], index: 3, kind: input, shape index: {}]
  %s4 = inlined_call_operand.vmem [shape: f32[2,16,16,16], index: 4, kind: output, shape index: {}]
  %s5 = sld [smem:[#allocation0]]
  $region49: #{bottleneck_pallas.7} parent=0
    _
  %s7 = ssub.s32 1, %s5
  %s8 = scalar_select 0, %s7, %s5
  loop: start=0, step=1, limit=6
  $region2: #{bottleneck_pallas.7} parent=0 // loop_pre_header
    _
  $region3: #{bottleneck_pallas.7} parent=0 // loop_header
    %s10 = sphi 0, %s14
    %p11 = scmp.ge.s32.totalorder %s10, 6
    %s17 = sphi 0, %s29
    %s18 = sphi 0, %s25
    %s19 = sphi 0, %s17
    %s20 = sphi 0, %s18
    %s21 = sphi 0, %s19
    %s22 = sphi 0, %s20
    %s34 = sphi 0, %s36
    %s37 = sphi 0, %s34
    %s38 = sphi 0, %s37
    %s54 = sphi 0, %s38
    %s58 = sphi 0, %s58
    %s60 = sphi 0, %s58
    %s61 = sphi 0, %s60
    %s75 = sphi 0, %s61
    %s79 = sphi 0, %s79
    %s81 = sphi 0, %s79
    %s82 = sphi 0, %s81
    %s96 = sphi 0, %s82
    %s104 = sphi 0, %s106
    %s107 = sphi 0, %s104
    %s108 = sphi 0, %s107
    %s124 = sphi 0, %s108
    %s132 = sphi 0, %s134
    %s135 = sphi 0, %s132
    %s136 = sphi 0, %s135
    %s152 = sphi 0, %s136
  $region4: #{bottleneck_pallas.7} parent=0 // loop_header_branch
    %13 = sbr.rel (%p11) target = $region8
  $region5: #{bottleneck_pallas.7} parent=0 // loop_body
    %s15 = ssub.s32 %s10, 1
    %s16 = ssub.s32 %s10, 2
    %s23 = sadd.s32 1, %s18
    %p24 = scmp.ge.s32.totalorder %s23, 2
    %s25 = scalar_select %p24, 0, %s23
    %s26 = sadd.s32 1, %s17
    %s27 = scalar_select %p24, %s26, %s17
    %p28 = scmp.ge.s32.totalorder %s27, 2
    %s29 = scalar_select %p28, 0, %s27
    %s30 = ssub.s32 %s17, %s29
    %s31 = ssub.s32 %s18, %s25
    %s32 = sor.u32 %s30, %s31
    %p33 = scmp.eq.s32.totalorder %s32, 0
    %s35 = sadd.s32 %s34, 1
    %s36 = scalar_select %p33, %s34, %s35
    %p39 = pneg %p33
    %p40 = scmp.eq.s32.totalorder %s10, 3
    %p41 = por %p39, %p40
    %p42 = scmp.ne.s32.totalorder %s34, %s37
    %p43 = scmp.eq.s32.totalorder %s10, 0
    %p44 = por %p42, %p43
    %p45 = scmp.ne.s32.totalorder %s34, %s37
    %p46 = scmp.eq.s32.totalorder %s15, 3
    %p47 = por %p45, %p46
    %p48 = scmp.ne.s32.totalorder %s37, %s38
    %p49 = scmp.eq.s32.totalorder %s15, 0
    %p50 = por %p48, %p49
    %p51 = scmp.ne.s32.totalorder %s37, %s38
    %p52 = scmp.eq.s32.totalorder %s16, 3
    %p53 = por %p51, %p52
    %p55 = scmp.ne.s32.totalorder %s38, %s54
    %p56 = scmp.eq.s32.totalorder %s16, 0
    %p57 = por %p55, %p56
    %s59 = sadd.s32 %s58, 1
    %p62 = scmp.eq.s32.totalorder %s10, 3
    %p63 = scmp.ne.s32.totalorder %s58, %s60
    %p64 = scmp.eq.s32.totalorder %s10, 0
    %p65 = por %p63, %p64
    %p66 = scmp.ne.s32.totalorder %s58, %s60
    %p67 = scmp.eq.s32.totalorder %s15, 3
    %p68 = por %p66, %p67
    %p69 = scmp.ne.s32.totalorder %s60, %s61
    %p70 = scmp.eq.s32.totalorder %s15, 0
    %p71 = por %p69, %p70
    %p72 = scmp.ne.s32.totalorder %s60, %s61
    %p73 = scmp.eq.s32.totalorder %s16, 3
    %p74 = por %p72, %p73
    %p76 = scmp.ne.s32.totalorder %s61, %s75
    %p77 = scmp.eq.s32.totalorder %s16, 0
    %p78 = por %p76, %p77
    %s80 = sadd.s32 %s79, 1
    %p83 = scmp.eq.s32.totalorder %s10, 3
    %p84 = scmp.ne.s32.totalorder %s79, %s81
    %p85 = scmp.eq.s32.totalorder %s10, 0
    %p86 = por %p84, %p85
    %p87 = scmp.ne.s32.totalorder %s79, %s81
    %p88 = scmp.eq.s32.totalorder %s15, 3
    %p89 = por %p87, %p88
    %p90 = scmp.ne.s32.totalorder %s81, %s82
    %p91 = scmp.eq.s32.totalorder %s15, 0
    %p92 = por %p90, %p91
    %p93 = scmp.ne.s32.totalorder %s81, %s82
    %p94 = scmp.eq.s32.totalorder %s16, 3
    %p95 = por %p93, %p94
    %p97 = scmp.ne.s32.totalorder %s82, %s96
    %p98 = scmp.eq.s32.totalorder %s16, 0
    %p99 = por %p97, %p98
    %s100 = ssub.s32 %s17, %s29
    %s101 = ssub.s32 %s18, %s25
    %s102 = sor.u32 %s100, %s101
    %p103 = scmp.eq.s32.totalorder %s102, 0
    %s105 = sadd.s32 %s104, 1
    %s106 = scalar_select %p103, %s104, %s105
    %p109 = pneg %p103
    %p110 = scmp.eq.s32.totalorder %s10, 3
    %p111 = por %p109, %p110
    %p112 = scmp.ne.s32.totalorder %s104, %s107
    %p113 = scmp.eq.s32.totalorder %s10, 0
    %p114 = por %p112, %p113
    %p115 = scmp.ne.s32.totalorder %s104, %s107
    %p116 = scmp.eq.s32.totalorder %s15, 3
    %p117 = por %p115, %p116
    %p118 = scmp.ne.s32.totalorder %s107, %s108
    %p119 = scmp.eq.s32.totalorder %s15, 0
    %p120 = por %p118, %p119
    %p121 = scmp.ne.s32.totalorder %s107, %s108
    %p122 = scmp.eq.s32.totalorder %s16, 3
    %p123 = por %p121, %p122
    %p125 = scmp.ne.s32.totalorder %s108, %s124
    %p126 = scmp.eq.s32.totalorder %s16, 0
    %p127 = por %p125, %p126
    %s128 = ssub.s32 %s17, %s29
    %s129 = ssub.s32 %s18, %s25
    %s130 = sor.u32 %s128, %s129
    %p131 = scmp.eq.s32.totalorder %s130, 0
    %s133 = sadd.s32 %s132, 1
    %s134 = scalar_select %p131, %s132, %s133
    %p137 = pneg %p131
    %p138 = scmp.eq.s32.totalorder %s10, 3
    %p139 = por %p137, %p138
    %p140 = scmp.ne.s32.totalorder %s132, %s135
    %p141 = scmp.eq.s32.totalorder %s10, 0
    %p142 = por %p140, %p141
    %p143 = scmp.ne.s32.totalorder %s132, %s135
    %p144 = scmp.eq.s32.totalorder %s15, 3
    %p145 = por %p143, %p144
    %p146 = scmp.ne.s32.totalorder %s135, %s136
    %p147 = scmp.eq.s32.totalorder %s15, 0
    %p148 = por %p146, %p147
    %p149 = scmp.ne.s32.totalorder %s135, %s136
    %p150 = scmp.eq.s32.totalorder %s16, 3
    %p151 = por %p149, %p150
    %p153 = scmp.ne.s32.totalorder %s136, %s152
    %p154 = scmp.eq.s32.totalorder %s16, 0
    %p155 = por %p153, %p154
    %p156 = scmp.le.s32.totalorder 1, %s10
    %p157 = scmp.lt.s32.totalorder %s10, 5
    %p158 = pnand %p156, %p157
    %p159 = pneg %p158
    // Predicated region
    $region9: #{bottleneck_pallas.7} parent=5 // pred_check
      _
    $region10: #{bottleneck_pallas.7} parent=5 // pred_check_branch
      %161 = sbr.rel (%p158) target = $region12
    $region11: #{bottleneck_pallas.7} parent=5 // pred_region
      %s162 = ssub.s32 %s10, 1
      // Predicated region
      $region13: #{bottleneck_pallas.7} parent=11 // pred_check
        %p163 = pneg %p71
      $region14: #{bottleneck_pallas.7} parent=11 // pred_check_branch
        %165 = sbr.rel (%p163) target = $region16
      $region15: #{bottleneck_pallas.7} parent=11 // pred_region
        _
      $region16: #{bottleneck_pallas.7} parent=11 // pred_fallthru
        _
      // Predicated region
      $region17: #{bottleneck_pallas.7} parent=11 // pred_check
        %p166 = pneg %p92
      $region18: #{bottleneck_pallas.7} parent=11 // pred_check_branch
        %168 = sbr.rel (%p166) target = $region20
      $region19: #{bottleneck_pallas.7} parent=11 // pred_region
        _
      $region20: #{bottleneck_pallas.7} parent=11 // pred_fallthru
        _
    $region12: #{bottleneck_pallas.7} parent=5 // pred_fallthru
      _
    %p169 = scmp.lt.s32.totalorder %s10, 4
    // Predicated region
    $region21: #{bottleneck_pallas.7} parent=5 // pred_check
      %p170 = pneg %p169
    $region22: #{bottleneck_pallas.7} parent=5 // pred_check_branch
      %172 = sbr.rel (%p170) target = $region24
    $region23: #{bottleneck_pallas.7} parent=5 // pred_region
      // Predicated region
      $region25: #{bottleneck_pallas.7} parent=23 // pred_check
        %p173 = pneg %p44
      $region26: #{bottleneck_pallas.7} parent=23 // pred_check_branch
        %175 = sbr.rel (%p173) target = $region28
      $region27: #{bottleneck_pallas.7} parent=23 // pred_region
        %s176 = smul.u32 8, %s18
        %p177 = scmp.lt.s32.totalorder %s17, 1
        %s178 = scalar_select %p177, %s17, 1
        %p179 = scmp.lt.s32.totalorder %s176, 15
        %s180 = scalar_select %p179, %s176, 15
        %s181 = smul.addr %s180, 2
        %s182 = smul.addr %s178, 32
        %s183 = sadd.s32 %s181, %s182
        %s184 = smul.addr %s183, 8
        %s185 = scalar_lea.vmem %s0, %s184
        %s186 = smul.u32 8, %s18
      $region28: #{bottleneck_pallas.7} parent=23 // pred_fallthru
        _
      // Predicated region
      $region29: #{bottleneck_pallas.7} parent=23 // pred_check
        %p187 = pneg %p114
      $region30: #{bottleneck_pallas.7} parent=23 // pred_check_branch
        %189 = sbr.rel (%p187) target = $region32
      $region31: #{bottleneck_pallas.7} parent=23 // pred_region
        %s190 = smul.u32 8, %s18
        %p191 = scmp.lt.s32.totalorder %s17, 1
        %s192 = scalar_select %p191, %s17, 1
        %p193 = scmp.lt.s32.totalorder %s190, 15
        %s194 = scalar_select %p193, %s190, 15
        %s195 = smul.addr %s194, 2
        %s196 = smul.addr %s192, 32
        %s197 = sadd.s32 %s195, %s196
        %s198 = smul.addr %s197, 8
        %s199 = scalar_lea.vmem %s3, %s198
        %s200 = smul.u32 8, %s18
      $region32: #{bottleneck_pallas.7} parent=23 // pred_fallthru
        _
    $region24: #{bottleneck_pallas.7} parent=5 // pred_fallthru
      _
    %p201 = scmp.le.s32.totalorder 1, %s10
    %p202 = scmp.lt.s32.totalorder %s10, 5
    %p203 = pnand %p201, %p202
    %p204 = pneg %p203
    // Predicated region
    $region33: #{bottleneck_pallas.7} parent=5 // pred_check
      _
    $region34: #{bottleneck_pallas.7} parent=5 // pred_check_branch
      %206 = sbr.rel (%p203) target = $region36
    $region35: #{bottleneck_pallas.7} parent=5 // pred_region
      %s207 = ssub.s32 %s10, 1
      %s208 = smul.u32 8, %s20
      %p209 = scmp.lt.s32.totalorder %s19, 1
      %s210 = scalar_select %p209, %s19, 1
      %p211 = scmp.lt.s32.totalorder %s208, 15
      %s212 = scalar_select %p211, %s208, 15
      %s213 = smul.addr %s212, 2
      %s214 = smul.addr %s210, 32
      %s215 = sadd.s32 %s213, %s214
      %s216 = smul.addr %s215, 8
      %s217 = scalar_lea.vmem %s0, %s216
      %p218 = pneg %p50
      %p219 = pneg %p47
      %p220 = pneg %p71
      %p221 = pneg %p68
      %p222 = pneg %p92
      %p223 = pneg %p89
      %s224 = smul.u32 8, %s20
      %p225 = scmp.lt.s32.totalorder %s19, 1
      %s226 = scalar_select %p225, %s19, 1
      %p227 = scmp.lt.s32.totalorder %s224, 15
      %s228 = scalar_select %p227, %s224, 15
      %s229 = smul.addr %s228, 2
      %s230 = smul.addr %s226, 32
      %s231 = sadd.s32 %s229, %s230
      %s232 = smul.addr %s231, 8
      %s233 = scalar_lea.vmem %s3, %s232
      %p234 = pneg %p120
      %p235 = pneg %p117
      %p236 = pneg %p148
      %p237 = pneg %p145
      %s238 = smul.u32 8, %s20
      %p239 = scmp.lt.s32.totalorder %s19, 1
      %s240 = scalar_select %p239, %s19, 1
      %p241 = scmp.lt.s32.totalorder %s238, 15
      %s242 = scalar_select %p241, %s238, 15
      %s243 = smul.addr %s242, 2
      %s244 = smul.addr %s240, 32
      %s245 = sadd.s32 %s243, %s244
      %s246 = smul.addr %s245, 8
      %s247 = scalar_lea.vmem %s4, %s246
      %s248 = smul.u32 8, %s20
      %p249 = scmp.lt.s32.totalorder %s19, 1
      %s250 = scalar_select %p249, %s19, 1
      %p251 = scmp.lt.s32.totalorder %s248, 15
      %s252 = scalar_select %p251, %s248, 15
      %s253 = smul.addr %s252, 2
      %s254 = smul.addr %s250, 32
      %s255 = sadd.s32 %s253, %s254
      %s256 = smul.addr %s255, 8
      %s257 = scalar_lea.vmem %s0, %s256
      %s258 = smul.u32 8, %s20
      %s259 = smul.u32 8, %s20
      %p260 = scmp.lt.s32.totalorder %s19, 1
      %s261 = scalar_select %p260, %s19, 1
      %p262 = scmp.lt.s32.totalorder %s259, 15
      %s263 = scalar_select %p262, %s259, 15
      %s264 = smul.addr %s263, 2
      %s265 = smul.addr %s261, 32
      %s266 = sadd.s32 %s264, %s265
      %s267 = smul.addr %s266, 8
      %s268 = scalar_lea.vmem %s3, %s267
      %s269 = smul.u32 8, %s20
      %s270 = smul.u32 8, %s20
      %p271 = scmp.lt.s32.totalorder %s19, 1
      %s272 = scalar_select %p271, %s19, 1
      %p273 = scmp.lt.s32.totalorder %s270, 15
      %s274 = scalar_select %p273, %s270, 15
      %s275 = smul.addr %s274, 2
      %s276 = smul.addr %s272, 32
      %s277 = sadd.s32 %s275, %s276
      %s278 = smul.addr %s277, 8
      %s279 = scalar_lea.vmem %s4, %s278
      %s280 = smul.u32 8, %s20
      %v281 = vld [vmem:[%s1] sm:$0x1]
      %v282 = vld [vmem:[%s2] sm:$0x1]
      %v283 = vld [vmem:[%s257] sm:$0xff]
      %v284 = vld [vmem:[%s257 + $0x8] sm:$0xff]
      %v285 = vld [vmem:[%s257 + $0x10] sm:$0xff]
      %v286 = vld [vmem:[%s257 + $0x18] sm:$0xff]
      %v287 = vld [vmem:[%s257 + $0x20] sm:$0xff]
      %v288 = vld [vmem:[%s257 + $0x28] sm:$0xff]
      %v289 = vld [vmem:[%s257 + $0x30] sm:$0xff]
      %v290 = vld [vmem:[%s257 + $0x38] sm:$0xff]
      %v291 = vld [vmem:[%s257 + $0x40] sm:$0xff]
      %v292 = vld [vmem:[%s257 + $0x48] sm:$0xff]
      %v293 = vld [vmem:[%s257 + $0x50] sm:$0xff]
      %v294 = vld [vmem:[%s257 + $0x58] sm:$0xff]
      %v295 = vld [vmem:[%s257 + $0x60] sm:$0xff]
      %v296 = vld [vmem:[%s257 + $0x68] sm:$0xff]
      %v297 = vld [vmem:[%s257 + $0x70] sm:$0xff]
      %v298 = vld [vmem:[%s257 + $0x78] sm:$0xff]
      %v299 = vld [vmem:[%s268] sm:$0xff]
      %v300 = vld [vmem:[%s268 + $0x8] sm:$0xff]
      %v301 = vld [vmem:[%s268 + $0x10] sm:$0xff]
      %v302 = vld [vmem:[%s268 + $0x18] sm:$0xff]
      %v303 = vld [vmem:[%s268 + $0x20] sm:$0xff]
      %v304 = vld [vmem:[%s268 + $0x28] sm:$0xff]
      %v305 = vld [vmem:[%s268 + $0x30] sm:$0xff]
      %v306 = vld [vmem:[%s268 + $0x38] sm:$0xff]
      %v307 = vld [vmem:[%s268 + $0x40] sm:$0xff]
      %v308 = vld [vmem:[%s268 + $0x48] sm:$0xff]
      %v309 = vld [vmem:[%s268 + $0x50] sm:$0xff]
      %v310 = vld [vmem:[%s268 + $0x58] sm:$0xff]
      %v311 = vld [vmem:[%s268 + $0x60] sm:$0xff]
      %v312 = vld [vmem:[%s268 + $0x68] sm:$0xff]
      %v313 = vld [vmem:[%s268 + $0x70] sm:$0xff]
      %v314 = vld [vmem:[%s268 + $0x78] sm:$0xff]
      %v316 = vlaneseq
      %v317 = vshrl.u32 %v316, 7
      %v318 = vsub.s32 0, %v317
      %v319 = vrot.slane %v281, %v318
      %v321 = vmul.f32 %v283, %v319
      %v322 = vmul.f32 %v284, %v319
      %v323 = vmul.f32 %v285, %v319
      %v324 = vmul.f32 %v286, %v319
      %v325 = vmul.f32 %v287, %v319
      %v326 = vmul.f32 %v288, %v319
      %v327 = vmul.f32 %v289, %v319
      %v328 = vmul.f32 %v290, %v319
      %v329 = vmul.f32 %v291, %v319
      %v330 = vmul.f32 %v292, %v319
      %v331 = vmul.f32 %v293, %v319
      %v332 = vmul.f32 %v294, %v319
      %v333 = vmul.f32 %v295, %v319
      %v334 = vmul.f32 %v296, %v319
      %v335 = vmul.f32 %v297, %v319
      %v336 = vmul.f32 %v298, %v319
      %v338 = vlaneseq
      %v339 = vshrl.u32 %v338, 7
      %v340 = vsub.s32 0, %v339
      %v341 = vrot.slane %v282, %v340
      %v343 = vadd.f32 %v321, %v341
      %v344 = vadd.f32 %v322, %v341
      %v345 = vadd.f32 %v323, %v341
      %v346 = vadd.f32 %v324, %v341
      %v347 = vadd.f32 %v325, %v341
      %v348 = vadd.f32 %v326, %v341
      %v349 = vadd.f32 %v327, %v341
      %v350 = vadd.f32 %v328, %v341
      %v351 = vadd.f32 %v329, %v341
      %v352 = vadd.f32 %v330, %v341
      %v353 = vadd.f32 %v331, %v341
      %v354 = vadd.f32 %v332, %v341
      %v355 = vadd.f32 %v333, %v341
      %v356 = vadd.f32 %v334, %v341
      %v357 = vadd.f32 %v335, %v341
      %v358 = vadd.f32 %v336, %v341
      %v359 = vadd.f32 %v343, %v299
      %v360 = vadd.f32 %v344, %v300
      %v361 = vadd.f32 %v345, %v301
      %v362 = vadd.f32 %v346, %v302
      %v363 = vadd.f32 %v347, %v303
      %v364 = vadd.f32 %v348, %v304
      %v365 = vadd.f32 %v349, %v305
      %v366 = vadd.f32 %v350, %v306
      %v367 = vadd.f32 %v351, %v307
      %v368 = vadd.f32 %v352, %v308
      %v369 = vadd.f32 %v353, %v309
      %v370 = vadd.f32 %v354, %v310
      %v371 = vadd.f32 %v355, %v311
      %v372 = vadd.f32 %v356, %v312
      %v373 = vadd.f32 %v357, %v313
      %v374 = vadd.f32 %v358, %v314
      %v375 = vmax.f32 %v359, 0.0
      %v376 = vmax.f32 %v360, 0.0
      %v377 = vmax.f32 %v361, 0.0
      %v378 = vmax.f32 %v362, 0.0
      %v379 = vmax.f32 %v363, 0.0
      %v380 = vmax.f32 %v364, 0.0
      %v381 = vmax.f32 %v365, 0.0
      %v382 = vmax.f32 %v366, 0.0
      %v383 = vmax.f32 %v367, 0.0
      %v384 = vmax.f32 %v368, 0.0
      %v385 = vmax.f32 %v369, 0.0
      %v386 = vmax.f32 %v370, 0.0
      %v387 = vmax.f32 %v371, 0.0
      %v388 = vmax.f32 %v372, 0.0
      %v389 = vmax.f32 %v373, 0.0
      %v390 = vmax.f32 %v374, 0.0
      %vm391 = vcmask 130048
      %392 = vst.msk [vmem:[%s279] sm:$0xff] %vm391, %v375
      %393 = vst.msk [vmem:[%s279 + $0x8] sm:$0xff] %vm391, %v376
      %394 = vst.msk [vmem:[%s279 + $0x10] sm:$0xff] %vm391, %v377
      %395 = vst.msk [vmem:[%s279 + $0x18] sm:$0xff] %vm391, %v378
      %396 = vst.msk [vmem:[%s279 + $0x20] sm:$0xff] %vm391, %v379
      %397 = vst.msk [vmem:[%s279 + $0x28] sm:$0xff] %vm391, %v380
      %398 = vst.msk [vmem:[%s279 + $0x30] sm:$0xff] %vm391, %v381
      %399 = vst.msk [vmem:[%s279 + $0x38] sm:$0xff] %vm391, %v382
      %400 = vst.msk [vmem:[%s279 + $0x40] sm:$0xff] %vm391, %v383
      %401 = vst.msk [vmem:[%s279 + $0x48] sm:$0xff] %vm391, %v384
      %402 = vst.msk [vmem:[%s279 + $0x50] sm:$0xff] %vm391, %v385
      %403 = vst.msk [vmem:[%s279 + $0x58] sm:$0xff] %vm391, %v386
      %404 = vst.msk [vmem:[%s279 + $0x60] sm:$0xff] %vm391, %v387
      %405 = vst.msk [vmem:[%s279 + $0x68] sm:$0xff] %vm391, %v388
      %406 = vst.msk [vmem:[%s279 + $0x70] sm:$0xff] %vm391, %v389
      %407 = vst.msk [vmem:[%s279 + $0x78] sm:$0xff] %vm391, %v390
      %s408 = smul.u32 8, %s20
      %p409 = scmp.lt.s32.totalorder %s19, 1
      %s410 = scalar_select %p409, %s19, 1
      %p411 = scmp.lt.s32.totalorder %s408, 15
      %s412 = scalar_select %p411, %s408, 15
      %s413 = smul.addr %s412, 2
      %s414 = smul.addr %s410, 32
      %s415 = sadd.s32 %s413, %s414
      %s416 = smul.addr %s415, 8
      %s417 = scalar_lea.vmem %s4, %s416
      // Predicated region
      $region37: #{bottleneck_pallas.7} parent=35 // pred_check
        %p418 = pneg %p145
      $region38: #{bottleneck_pallas.7} parent=35 // pred_check_branch
        %420 = sbr.rel (%p418) target = $region40
      $region39: #{bottleneck_pallas.7} parent=35 // pred_region
        %s421 = smul.u32 8, %s20
      $region40: #{bottleneck_pallas.7} parent=35 // pred_fallthru
        _
    $region36: #{bottleneck_pallas.7} parent=5 // pred_fallthru
      _
    %p422 = scmp.le.s32.totalorder 2, %s10
    // Predicated region
    $region41: #{bottleneck_pallas.7} parent=5 // pred_check
      %p423 = pneg %p422
    $region42: #{bottleneck_pallas.7} parent=5 // pred_check_branch
      %425 = sbr.rel (%p423) target = $region44
    $region43: #{bottleneck_pallas.7} parent=5 // pred_region
      %s426 = ssub.s32 %s10, 2
      // Predicated region
      $region45: #{bottleneck_pallas.7} parent=43 // pred_check
        %p427 = pneg %p151
      $region46: #{bottleneck_pallas.7} parent=43 // pred_check_branch
        %429 = sbr.rel (%p427) target = $region48
      $region47: #{bottleneck_pallas.7} parent=43 // pred_region
        %s430 = smul.u32 8, %s22
        %p431 = scmp.lt.s32.totalorder %s21, 1
        %s432 = scalar_select %p431, %s21, 1
        %p433 = scmp.lt.s32.totalorder %s430, 15
        %s434 = scalar_select %p433, %s430, 15
        %s435 = smul.addr %s434, 2
        %s436 = smul.addr %s432, 32
        %s437 = sadd.s32 %s435, %s436
        %s438 = smul.addr %s437, 8
        %s439 = scalar_lea.vmem %s4, %s438
      $region48: #{bottleneck_pallas.7} parent=43 // pred_fallthru
        _
    $region44: #{bottleneck_pallas.7} parent=5 // pred_fallthru
      _
  $region6: #{bottleneck_pallas.7} parent=0 // loop_footer
    %s14 = sadd.s32 1, %s10
  $region7: #{bottleneck_pallas.7} parent=0 // loop_footer_branch
    %9 = sbr.rel target = $region3
  $region8: #{bottleneck_pallas.7} parent=0 // loop_exit
    _

// kernel: bottleneck_pallas.6
$region0: #{bottleneck_pallas.6}
  #allocation0 [shape = 'u32[]', space=smem, size = 0x4, offset = 0x4, fixed_abs, tag = 'smem constant byte address 0x4 - core index']
  #allocation1 [shape = 'u32[144,128]{1,0:T(1,128)}', space=vmem, size = 0x12000, scoped, tag = 'internal scratch']
  %s0 = inlined_call_operand.vmem [shape: f32[2,16,16,128], index: 0, kind: input, shape index: {}]
  %s1 = inlined_call_operand.vmem [shape: f32[1,128], index: 1, kind: input, shape index: {}]
  %s2 = inlined_call_operand.vmem [shape: f32[1,128], index: 2, kind: input, shape index: {}]
  %s3 = inlined_call_operand.vmem [shape: f32[128,128], index: 3, kind: input, shape index: {}]
  %s4 = inlined_call_operand.vmem [shape: f32[2,16,16,128], index: 4, kind: output, shape index: {0}]
  %s5 = inlined_call_operand.vmem [shape: f32[2,2,2,128], index: 5, kind: output, shape index: {1}]
  %6 = xla_tuple %s4, %s5
  %s7 = sld [smem:[#allocation0]]
  $region57: #{bottleneck_pallas.6} parent=0
    _
  %s9 = ssub.s32 1, %s7
  %s10 = scalar_select 0, %s9, %s7
  loop: start=0, step=1, limit=6
  $region2: #{bottleneck_pallas.6} parent=0 // loop_pre_header
    _
  $region3: #{bottleneck_pallas.6} parent=0 // loop_header
    %s12 = sphi 0, %s16
    %p13 = scmp.ge.s32.totalorder %s12, 6
    %s19 = sphi 0, %s31
    %s20 = sphi 0, %s27
    %s21 = sphi 0, %s19
    %s22 = sphi 0, %s20
    %s23 = sphi 0, %s21
    %s24 = sphi 0, %s22
    %s36 = sphi 0, %s38
    %s39 = sphi 0, %s36
    %s40 = sphi 0, %s39
    %s56 = sphi 0, %s40
    %s60 = sphi 0, %s60
    %s62 = sphi 0, %s60
    %s63 = sphi 0, %s62
    %s77 = sphi 0, %s63
    %s81 = sphi 0, %s81
    %s83 = sphi 0, %s81
    %s84 = sphi 0, %s83
    %s98 = sphi 0, %s84
    %s102 = sphi 0, %s102
    %s104 = sphi 0, %s102
    %s105 = sphi 0, %s104
    %s119 = sphi 0, %s105
    %s127 = sphi 0, %s129
    %s130 = sphi 0, %s127
    %s131 = sphi 0, %s130
    %s147 = sphi 0, %s131
    %s155 = sphi 0, %s157
    %s158 = sphi 0, %s155
    %s159 = sphi 0, %s158
    %s175 = sphi 0, %s159
  $region4: #{bottleneck_pallas.6} parent=0 // loop_header_branch
    %15 = sbr.rel (%p13) target = $region8
  $region5: #{bottleneck_pallas.6} parent=0 // loop_body
    %s17 = ssub.s32 %s12, 1
    %s18 = ssub.s32 %s12, 2
    %s25 = sadd.s32 1, %s20
    %p26 = scmp.ge.s32.totalorder %s25, 2
    %s27 = scalar_select %p26, 0, %s25
    %s28 = sadd.s32 1, %s19
    %s29 = scalar_select %p26, %s28, %s19
    %p30 = scmp.ge.s32.totalorder %s29, 2
    %s31 = scalar_select %p30, 0, %s29
    %s32 = ssub.s32 %s19, %s31
    %s33 = ssub.s32 %s20, %s27
    %s34 = sor.u32 %s32, %s33
    %p35 = scmp.eq.s32.totalorder %s34, 0
    %s37 = sadd.s32 %s36, 1
    %s38 = scalar_select %p35, %s36, %s37
    %p41 = pneg %p35
    %p42 = scmp.eq.s32.totalorder %s12, 3
    %p43 = por %p41, %p42
    %p44 = scmp.ne.s32.totalorder %s36, %s39
    %p45 = scmp.eq.s32.totalorder %s12, 0
    %p46 = por %p44, %p45
    %p47 = scmp.ne.s32.totalorder %s36, %s39
    %p48 = scmp.eq.s32.totalorder %s17, 3
    %p49 = por %p47, %p48
    %p50 = scmp.ne.s32.totalorder %s39, %s40
    %p51 = scmp.eq.s32.totalorder %s17, 0
    %p52 = por %p50, %p51
    %p53 = scmp.ne.s32.totalorder %s39, %s40
    %p54 = scmp.eq.s32.totalorder %s18, 3
    %p55 = por %p53, %p54
    %p57 = scmp.ne.s32.totalorder %s40, %s56
    %p58 = scmp.eq.s32.totalorder %s18, 0
    %p59 = por %p57, %p58
    %s61 = sadd.s32 %s60, 1
    %p64 = scmp.eq.s32.totalorder %s12, 3
    %p65 = scmp.ne.s32.totalorder %s60, %s62
    %p66 = scmp.eq.s32.totalorder %s12, 0
    %p67 = por %p65, %p66
    %p68 = scmp.ne.s32.totalorder %s60, %s62
    %p69 = scmp.eq.s32.totalorder %s17, 3
    %p70 = por %p68, %p69
    %p71 = scmp.ne.s32.totalorder %s62, %s63
    %p72 = scmp.eq.s32.totalorder %s17, 0
    %p73 = por %p71, %p72
    %p74 = scmp.ne.s32.totalorder %s62, %s63
    %p75 = scmp.eq.s32.totalorder %s18, 3
    %p76 = por %p74, %p75
    %p78 = scmp.ne.s32.totalorder %s63, %s77
    %p79 = scmp.eq.s32.totalorder %s18, 0
    %p80 = por %p78, %p79
    %s82 = sadd.s32 %s81, 1
    %p85 = scmp.eq.s32.totalorder %s12, 3
    %p86 = scmp.ne.s32.totalorder %s81, %s83
    %p87 = scmp.eq.s32.totalorder %s12, 0
    %p88 = por %p86, %p87
    %p89 = scmp.ne.s32.totalorder %s81, %s83
    %p90 = scmp.eq.s32.totalorder %s17, 3
    %p91 = por %p89, %p90
    %p92 = scmp.ne.s32.totalorder %s83, %s84
    %p93 = scmp.eq.s32.totalorder %s17, 0
    %p94 = por %p92, %p93
    %p95 = scmp.ne.s32.totalorder %s83, %s84
    %p96 = scmp.eq.s32.totalorder %s18, 3
    %p97 = por %p95, %p96
    %p99 = scmp.ne.s32.totalorder %s84, %s98
    %p100 = scmp.eq.s32.totalorder %s18, 0
    %p101 = por %p99, %p100
    %s103 = sadd.s32 %s102, 1
    %p106 = scmp.eq.s32.totalorder %s12, 3
    %p107 = scmp.ne.s32.totalorder %s102, %s104
    %p108 = scmp.eq.s32.totalorder %s12, 0
    %p109 = por %p107, %p108
    %p110 = scmp.ne.s32.totalorder %s102, %s104
    %p111 = scmp.eq.s32.totalorder %s17, 3
    %p112 = por %p110, %p111
    %p113 = scmp.ne.s32.totalorder %s104, %s105
    %p114 = scmp.eq.s32.totalorder %s17, 0
    %p115 = por %p113, %p114
    %p116 = scmp.ne.s32.totalorder %s104, %s105
    %p117 = scmp.eq.s32.totalorder %s18, 3
    %p118 = por %p116, %p117
    %p120 = scmp.ne.s32.totalorder %s105, %s119
    %p121 = scmp.eq.s32.totalorder %s18, 0
    %p122 = por %p120, %p121
    %s123 = ssub.s32 %s19, %s31
    %s124 = ssub.s32 %s20, %s27
    %s125 = sor.u32 %s123, %s124
    %p126 = scmp.eq.s32.totalorder %s125, 0
    %s128 = sadd.s32 %s127, 1
    %s129 = scalar_select %p126, %s127, %s128
    %p132 = pneg %p126
    %p133 = scmp.eq.s32.totalorder %s12, 3
    %p134 = por %p132, %p133
    %p135 = scmp.ne.s32.totalorder %s127, %s130
    %p136 = scmp.eq.s32.totalorder %s12, 0
    %p137 = por %p135, %p136
    %p138 = scmp.ne.s32.totalorder %s127, %s130
    %p139 = scmp.eq.s32.totalorder %s17, 3
    %p140 = por %p138, %p139
    %p141 = scmp.ne.s32.totalorder %s130, %s131
    %p142 = scmp.eq.s32.totalorder %s17, 0
    %p143 = por %p141, %p142
    %p144 = scmp.ne.s32.totalorder %s130, %s131
    %p145 = scmp.eq.s32.totalorder %s18, 3
    %p146 = por %p144, %p145
    %p148 = scmp.ne.s32.totalorder %s131, %s147
    %p149 = scmp.eq.s32.totalorder %s18, 0
    %p150 = por %p148, %p149
    %s151 = ssub.s32 %s19, %s31
    %s152 = ssub.s32 %s20, %s27
    %s153 = sor.u32 %s151, %s152
    %p154 = scmp.eq.s32.totalorder %s153, 0
    %s156 = sadd.s32 %s155, 1
    %s157 = scalar_select %p154, %s155, %s156
    %p160 = pneg %p154
    %p161 = scmp.eq.s32.totalorder %s12, 3
    %p162 = por %p160, %p161
    %p163 = scmp.ne.s32.totalorder %s155, %s158
    %p164 = scmp.eq.s32.totalorder %s12, 0
    %p165 = por %p163, %p164
    %p166 = scmp.ne.s32.totalorder %s155, %s158
    %p167 = scmp.eq.s32.totalorder %s17, 3
    %p168 = por %p166, %p167
    %p169 = scmp.ne.s32.totalorder %s158, %s159
    %p170 = scmp.eq.s32.totalorder %s17, 0
    %p171 = por %p169, %p170
    %p172 = scmp.ne.s32.totalorder %s158, %s159
    %p173 = scmp.eq.s32.totalorder %s18, 3
    %p174 = por %p172, %p173
    %p176 = scmp.ne.s32.totalorder %s159, %s175
    %p177 = scmp.eq.s32.totalorder %s18, 0
    %p178 = por %p176, %p177
    %p179 = scmp.le.s32.totalorder 1, %s12
    %p180 = scmp.lt.s32.totalorder %s12, 5
    %p181 = pnand %p179, %p180
    %p182 = pneg %p181
    // Predicated region
    $region9: #{bottleneck_pallas.6} parent=5 // pred_check
      _
    $region10: #{bottleneck_pallas.6} parent=5 // pred_check_branch
      %184 = sbr.rel (%p181) target = $region12
    $region11: #{bottleneck_pallas.6} parent=5 // pred_region
      %s185 = ssub.s32 %s12, 1
      // Predicated region
      $region13: #{bottleneck_pallas.6} parent=11 // pred_check
        %p186 = pneg %p73
      $region14: #{bottleneck_pallas.6} parent=11 // pred_check_branch
        %188 = sbr.rel (%p186) target = $region16
      $region15: #{bottleneck_pallas.6} parent=11 // pred_region
        _
      $region16: #{bottleneck_pallas.6} parent=11 // pred_fallthru
        _
      // Predicated region
      $region17: #{bottleneck_pallas.6} parent=11 // pred_check
        %p189 = pneg %p94
      $region18: #{bottleneck_pallas.6} parent=11 // pred_check_branch
        %191 = sbr.rel (%p189) target = $region20
      $region19: #{bottleneck_pallas.6} parent=11 // pred_region
        _
      $region20: #{bottleneck_pallas.6} parent=11 // pred_fallthru
        _
      // Predicated region
      $region21: #{bottleneck_pallas.6} parent=11 // pred_check
        %p192 = pneg %p115
      $region22: #{bottleneck_pallas.6} parent=11 // pred_check_branch
        %194 = sbr.rel (%p192) target = $region24
      $region23: #{bottleneck_pallas.6} parent=11 // pred_region
        _
      $region24: #{bottleneck_pallas.6} parent=11 // pred_fallthru
        _
    $region12: #{bottleneck_pallas.6} parent=5 // pred_fallthru
      _
    %p195 = scmp.lt.s32.totalorder %s12, 4
    // Predicated region
    $region25: #{bottleneck_pallas.6} parent=5 // pred_check
      %p196 = pneg %p195
    $region26: #{bottleneck_pallas.6} parent=5 // pred_check_branch
      %198 = sbr.rel (%p196) target = $region28
    $region27: #{bottleneck_pallas.6} parent=5 // pred_region
      // Predicated region
      $region29: #{bottleneck_pallas.6} parent=27 // pred_check
        %p199 = pneg %p46
      $region30: #{bottleneck_pallas.6} parent=27 // pred_check_branch
        %201 = sbr.rel (%p199) target = $region32
      $region31: #{bottleneck_pallas.6} parent=27 // pred_region
        %s202 = smul.u32 8, %s20
        %p203 = scmp.lt.s32.totalorder %s19, 1
        %s204 = scalar_select %p203, %s19, 1
        %p205 = scmp.lt.s32.totalorder %s202, 15
        %s206 = scalar_select %p205, %s202, 15
        %s207 = smul.addr %s206, 2
        %s208 = smul.addr %s204, 32
        %s209 = sadd.s32 %s207, %s208
        %s210 = smul.addr %s209, 8
        %s211 = scalar_lea.vmem %s0, %s210
        %s212 = smul.u32 8, %s20
      $region32: #{bottleneck_pallas.6} parent=27 // pred_fallthru
        _
    $region28: #{bottleneck_pallas.6} parent=5 // pred_fallthru
      _
    %p213 = scmp.le.s32.totalorder 1, %s12
    %p214 = scmp.lt.s32.totalorder %s12, 5
    %p215 = pnand %p213, %p214
    %p216 = pneg %p215
    // Predicated region
    $region33: #{bottleneck_pallas.6} parent=5 // pred_check
      _
    $region34: #{bottleneck_pallas.6} parent=5 // pred_check_branch
      %218 = sbr.rel (%p215) target = $region36
    $region35: #{bottleneck_pallas.6} parent=5 // pred_region
      %s219 = ssub.s32 %s12, 1
      %s220 = smul.u32 8, %s22
      %p221 = scmp.lt.s32.totalorder %s21, 1
      %s222 = scalar_select %p221, %s21, 1
      %p223 = scmp.lt.s32.totalorder %s220, 15
      %s224 = scalar_select %p223, %s220, 15
      %s225 = smul.addr %s224, 2
      %s226 = smul.addr %s222, 32
      %s227 = sadd.s32 %s225, %s226
      %s228 = smul.addr %s227, 8
      %s229 = scalar_lea.vmem %s0, %s228
      %p230 = pneg %p52
      %p231 = pneg %p49
      %p232 = pneg %p73
      %p233 = pneg %p70
      %p234 = pneg %p94
      %p235 = pneg %p91
      %p236 = pneg %p115
      %p237 = pneg %p112
      %p238 = pneg %p143
      %p239 = pneg %p140
      %s240 = smul.u32 8, %s22
      %p241 = scmp.lt.s32.totalorder %s21, 1
      %s242 = scalar_select %p241, %s21, 1
      %p243 = scmp.lt.s32.totalorder %s240, 15
      %s244 = scalar_select %p243, %s240, 15
      %s245 = smul.addr %s244, 2
      %s246 = smul.addr %s242, 32
      %s247 = sadd.s32 %s245, %s246
      %s248 = smul.addr %s247, 8
      %s249 = scalar_lea.vmem %s4, %s248
      %p250 = pneg %p171
      %p251 = pneg %p168
      %p252 = scmp.lt.s32.totalorder %s21, 1
      %s253 = scalar_select %p252, %s21, 1
      %p254 = scmp.lt.s32.totalorder %s22, 1
      %s255 = scalar_select %p254, %s22, 1
      %s256 = smul.addr %s253, 2
      %s257 = sadd.s32 %s255, %s256
      %s258 = smul.addr %s257, 2
      %s259 = scalar_lea.vmem %s5, %s258
      %s260 = smul.u32 8, %s22
      %p261 = scmp.lt.s32.totalorder %s21, 1
      %s262 = scalar_select %p261, %s21, 1
      %p263 = scmp.lt.s32.totalorder %s260, 15
      %s264 = scalar_select %p263, %s260, 15
      %s265 = smul.addr %s264, 2
      %s266 = smul.addr %s262, 32
      %s267 = sadd.s32 %s265, %s266
      %s268 = smul.addr %s267, 8
      %s269 = scalar_lea.vmem %s0, %s268
      %s270 = smul.u32 8, %s22
      %s271 = smul.u32 8, %s22
      %p272 = scmp.lt.s32.totalorder %s21, 1
      %s273 = scalar_select %p272, %s21, 1
      %p274 = scmp.lt.s32.totalorder %s271, 15
      %s275 = scalar_select %p274, %s271, 15
      %s276 = smul.addr %s275, 2
      %s277 = smul.addr %s273, 32
      %s278 = sadd.s32 %s276, %s277
      %s279 = smul.addr %s278, 8
      %s280 = scalar_lea.vmem %s4, %s279
      %s281 = smul.u32 8, %s22
      %p282 = scmp.lt.s32.totalorder %s21, 1
      %s283 = scalar_select %p282, %s21, 1
      %p284 = scmp.lt.s32.totalorder %s22, 1
      %s285 = scalar_select %p284, %s22, 1
      %s286 = smul.addr %s283, 2
      %s287 = sadd.s32 %s285, %s286
      %s288 = smul.addr %s287, 2
      %s289 = scalar_lea.vmem %s5, %s288
      %v290 = vld [vmem:[%s269] sm:$0xff]
      %v291 = vld [vmem:[%s269 + $0x8] sm:$0xff]
      %v292 = vld [vmem:[%s269 + $0x10] sm:$0xff]
      %v293 = vld [vmem:[%s269 + $0x18] sm:$0xff]
      %v294 = vld [vmem:[%s269 + $0x20] sm:$0xff]
      %v295 = vld [vmem:[%s269 + $0x28] sm:$0xff]
      %v296 = vld [vmem:[%s269 + $0x30] sm:$0xff]
      %v297 = vld [vmem:[%s269 + $0x38] sm:$0xff]
      %v298 = vld [vmem:[%s269 + $0x40] sm:$0xff]
      %v299 = vld [vmem:[%s269 + $0x48] sm:$0xff]
      %v300 = vld [vmem:[%s269 + $0x50] sm:$0xff]
      %v301 = vld [vmem:[%s269 + $0x58] sm:$0xff]
      %v302 = vld [vmem:[%s269 + $0x60] sm:$0xff]
      %v303 = vld [vmem:[%s269 + $0x68] sm:$0xff]
      %v304 = vld [vmem:[%s269 + $0x70] sm:$0xff]
      %v305 = vld [vmem:[%s269 + $0x78] sm:$0xff]
      %v306 = vld [vmem:[%s1] sm:$0x1]
      %v308 = vlaneseq
      %v309 = vshrl.u32 %v308, 7
      %v310 = vsub.s32 0, %v309
      %v311 = vrot.slane %v306, %v310
      %v313 = vmul.f32 %v290, %v311
      %v314 = vmul.f32 %v291, %v311
      %v315 = vmul.f32 %v292, %v311
      %v316 = vmul.f32 %v293, %v311
      %v317 = vmul.f32 %v294, %v311
      %v318 = vmul.f32 %v295, %v311
      %v319 = vmul.f32 %v296, %v311
      %v320 = vmul.f32 %v297, %v311
      %v321 = vmul.f32 %v298, %v311
      %v322 = vmul.f32 %v299, %v311
      %v323 = vmul.f32 %v300, %v311
      %v324 = vmul.f32 %v301, %v311
      %v325 = vmul.f32 %v302, %v311
      %v326 = vmul.f32 %v303, %v311
      %v327 = vmul.f32 %v304, %v311
      %v328 = vmul.f32 %v305, %v311
      %v329 = vld [vmem:[%s2] sm:$0x1]
      %v331 = vlaneseq
      %v332 = vshrl.u32 %v331, 7
      %v333 = vsub.s32 0, %v332
      %v334 = vrot.slane %v329, %v333
      %v336 = vadd.f32 %v313, %v334
      %v337 = vadd.f32 %v314, %v334
      %v338 = vadd.f32 %v315, %v334
      %v339 = vadd.f32 %v316, %v334
      %v340 = vadd.f32 %v317, %v334
      %v341 = vadd.f32 %v318, %v334
      %v342 = vadd.f32 %v319, %v334
      %v343 = vadd.f32 %v320, %v334
      %v344 = vadd.f32 %v321, %v334
      %v345 = vadd.f32 %v322, %v334
      %v346 = vadd.f32 %v323, %v334
      %v347 = vadd.f32 %v324, %v334
      %v348 = vadd.f32 %v325, %v334
      %v349 = vadd.f32 %v326, %v334
      %v350 = vadd.f32 %v327, %v334
      %v351 = vadd.f32 %v328, %v334
      %v352 = vmax.f32 %v336, 0.0
      %v353 = vmax.f32 %v337, 0.0
      %v354 = vmax.f32 %v338, 0.0
      %v355 = vmax.f32 %v339, 0.0
      %v356 = vmax.f32 %v340, 0.0
      %v357 = vmax.f32 %v341, 0.0
      %v358 = vmax.f32 %v342, 0.0
      %v359 = vmax.f32 %v343, 0.0
      %v360 = vmax.f32 %v344, 0.0
      %v361 = vmax.f32 %v345, 0.0
      %v362 = vmax.f32 %v346, 0.0
      %v363 = vmax.f32 %v347, 0.0
      %v364 = vmax.f32 %v348, 0.0
      %v365 = vmax.f32 %v349, 0.0
      %v366 = vmax.f32 %v350, 0.0
      %v367 = vmax.f32 %v351, 0.0
      %v368 = vld [vmem:[%s3] sm:$0xff]
      %v369 = vld [vmem:[%s3 + $0x8] sm:$0xff]
      %v370 = vld [vmem:[%s3 + $0x10] sm:$0xff]
      %v371 = vld [vmem:[%s3 + $0x18] sm:$0xff]
      %v372 = vld [vmem:[%s3 + $0x20] sm:$0xff]
      %v373 = vld [vmem:[%s3 + $0x28] sm:$0xff]
      %v374 = vld [vmem:[%s3 + $0x30] sm:$0xff]
      %v375 = vld [vmem:[%s3 + $0x38] sm:$0xff]
      %v376 = vld [vmem:[%s3 + $0x40] sm:$0xff]
      %v377 = vld [vmem:[%s3 + $0x48] sm:$0xff]
      %v378 = vld [vmem:[%s3 + $0x50] sm:$0xff]
      %v379 = vld [vmem:[%s3 + $0x58] sm:$0xff]
      %v380 = vld [vmem:[%s3 + $0x60] sm:$0xff]
      %v381 = vld [vmem:[%s3 + $0x68] sm:$0xff]
      %v382 = vld [vmem:[%s3 + $0x70] sm:$0xff]
      %v383 = vld [vmem:[%s3 + $0x78] sm:$0xff]
      %384 = vmatprep.subr.mxu0 0.0
      %385 = vmatpush1.msra.mxu0 %v383
      %386 = vmatprep.subr.mxu0 0.0
      %387 = vmatpush1.msra.mxu0 %v382
      %388 = vmatprep.subr.mxu0 0.0
      %389 = vmatpush1.msra.mxu0 %v381
      %390 = vmatprep.subr.mxu0 0.0
      %391 = vmatpush1.msra.mxu0 %v380
      %392 = vmatprep.subr.mxu0 0.0
      %393 = vmatpush1.msra.mxu0 %v379
      %394 = vmatprep.subr.mxu0 0.0
      %395 = vmatpush1.msra.mxu0 %v378
      %396 = vmatprep.subr.mxu0 0.0
      %397 = vmatpush1.msra.mxu0 %v377
      %398 = vmatprep.subr.mxu0 0.0
      %399 = vmatpush1.msra.mxu0 %v376
      %400 = vmatprep.subr.mxu0 0.0
      %401 = vmatpush1.msra.mxu0 %v375
      %402 = vmatprep.subr.mxu0 0.0
      %403 = vmatpush1.msra.mxu0 %v374
      %404 = vmatprep.subr.mxu0 0.0
      %405 = vmatpush1.msra.mxu0 %v373
      %406 = vmatprep.subr.mxu0 0.0
      %407 = vmatpush1.msra.mxu0 %v372
      %408 = vmatprep.subr.mxu0 0.0
      %409 = vmatpush1.msra.mxu0 %v371
      %410 = vmatprep.subr.mxu0 0.0
      %411 = vmatpush1.msra.mxu0 %v370
      %412 = vmatprep.subr.mxu0 0.0
      %413 = vmatpush1.msra.mxu0 %v369
      %414 = vmatprep.subr.mxu0 0.0
      %415 = vmatpush1.msra.mxu0 %v368
      %416 = vmatprep.subr.mxu0 0.0
      %417 = vmatpush2.msra.mxu0 0.0
      %418 = vmatprep.subr.mxu0 0.0
      %419 = vmatpush2.msra.mxu0 0.0
      %420 = vmatprep.subr.mxu0 0.0
      %421 = vmatpush2.msra.mxu0 0.0
      %422 = vmatprep.subr.mxu0 0.0
      %423 = vmatpush2.msra.mxu0 0.0
      %424 = vmatprep.subr.mxu0 0.0
      %425 = vmatpush2.msra.mxu0 0.0
      %426 = vmatprep.subr.mxu0 0.0
      %427 = vmatpush2.msra.mxu0 0.0
      %428 = vmatprep.subr.mxu0 0.0
      %429 = vmatpush2.msra.mxu0 0.0
      %430 = vmatprep.subr.mxu0 0.0
      %431 = vmatpush2.msra.mxu0 0.0
      %432 = vmatprep.subr.mxu0 0.0
      %433 = vmatpush2.msra.mxu0 0.0
      %434 = vmatprep.subr.mxu0 0.0
      %435 = vmatpush2.msra.mxu0 0.0
      %436 = vmatprep.subr.mxu0 0.0
      %437 = vmatpush2.msra.mxu0 0.0
      %438 = vmatprep.subr.mxu0 0.0
      %439 = vmatpush2.msra.mxu0 0.0
      %440 = vmatprep.subr.mxu0 0.0
      %441 = vmatpush2.msra.mxu0 0.0
      %442 = vmatprep.subr.mxu0 0.0
      %443 = vmatpush2.msra.mxu0 0.0
      %444 = vmatprep.subr.mxu0 0.0
      %445 = vmatpush2.msra.mxu0 0.0
      %446 = vmatprep.subr.mxu0 0.0
      %447 = vmatpush2.msra.mxu0 0.0
      %448 = vmatprep.mubr.f32.mxu0 0.0
      %449 = vmatmul.mubr.f32.gmra.mxu0 %v352
      %v450 = vpop.f32.mrf.mxu0
      %v451 = vadd.f32 0.0, %v450
      %v452 = vpop.f32.mrf.mxu0
      %453 = vmatprep.mubr.f32.mxu0 0.0
      %454 = vmatmul.mubr.f32.gmra.mxu0 %v353
      %v455 = vpop.f32.mrf.mxu0
      %v456 = vadd.f32 0.0, %v455
      %v457 = vpop.f32.mrf.mxu0
      %458 = vmatprep.mubr.f32.mxu0 0.0
      %459 = vmatmul.mubr.f32.gmra.mxu0 %v354
      %v460 = vpop.f32.mrf.mxu0
      %v461 = vadd.f32 0.0, %v460
      %v462 = vpop.f32.mrf.mxu0
      %463 = vmatprep.mubr.f32.mxu0 0.0
      %464 = vmatmul.mubr.f32.gmra.mxu0 %v355
      %v465 = vpop.f32.mrf.mxu0
      %v466 = vadd.f32 0.0, %v465
      %v467 = vpop.f32.mrf.mxu0
      %468 = vmatprep.mubr.f32.mxu0 0.0
      %469 = vmatmul.mubr.f32.gmra.mxu0 %v356
      %v470 = vpop.f32.mrf.mxu0
      %v471 = vadd.f32 0.0, %v470
      %v472 = vpop.f32.mrf.mxu0
      %473 = vmatprep.mubr.f32.mxu0 0.0
      %474 = vmatmul.mubr.f32.gmra.mxu0 %v357
      %v475 = vpop.f32.mrf.mxu0
      %v476 = vadd.f32 0.0, %v475
      %v477 = vpop.f32.mrf.mxu0
      %478 = vmatprep.mubr.f32.mxu0 0.0
      %479 = vmatmul.mubr.f32.gmra.mxu0 %v358
      %v480 = vpop.f32.mrf.mxu0
      %v481 = vadd.f32 0.0, %v480
      %v482 = vpop.f32.mrf.mxu0
      %483 = vmatprep.mubr.f32.mxu0 0.0
      %484 = vmatmul.mubr.f32.gmra.mxu0 %v359
      %v485 = vpop.f32.mrf.mxu0
      %v486 = vadd.f32 0.0, %v485
      %v487 = vpop.f32.mrf.mxu0
      %488 = vmatprep.mubr.f32.mxu0 0.0
      %489 = vmatmul.mubr.f32.gmra.mxu0 %v360
      %v490 = vpop.f32.mrf.mxu0
      %v491 = vadd.f32 0.0, %v490
      %v492 = vpop.f32.mrf.mxu0
      %493 = vmatprep.mubr.f32.mxu0 0.0
      %494 = vmatmul.mubr.f32.gmra.mxu0 %v361
      %v495 = vpop.f32.mrf.mxu0
      %v496 = vadd.f32 0.0, %v495
      %v497 = vpop.f32.mrf.mxu0
      %498 = vmatprep.mubr.f32.mxu0 0.0
      %499 = vmatmul.mubr.f32.gmra.mxu0 %v362
      %v500 = vpop.f32.mrf.mxu0
      %v501 = vadd.f32 0.0, %v500
      %v502 = vpop.f32.mrf.mxu0
      %503 = vmatprep.mubr.f32.mxu0 0.0
      %504 = vmatmul.mubr.f32.gmra.mxu0 %v363
      %v505 = vpop.f32.mrf.mxu0
      %v506 = vadd.f32 0.0, %v505
      %v507 = vpop.f32.mrf.mxu0
      %508 = vmatprep.mubr.f32.mxu0 0.0
      %509 = vmatmul.mubr.f32.gmra.mxu0 %v364
      %v510 = vpop.f32.mrf.mxu0
      %v511 = vadd.f32 0.0, %v510
      %v512 = vpop.f32.mrf.mxu0
      %513 = vmatprep.mubr.f32.mxu0 0.0
      %514 = vmatmul.mubr.f32.gmra.mxu0 %v365
      %v515 = vpop.f32.mrf.mxu0
      %v516 = vadd.f32 0.0, %v515
      %v517 = vpop.f32.mrf.mxu0
      %518 = vmatprep.mubr.f32.mxu0 0.0
      %519 = vmatmul.mubr.f32.gmra.mxu0 %v366
      %v520 = vpop.f32.mrf.mxu0
      %v521 = vadd.f32 0.0, %v520
      %v522 = vpop.f32.mrf.mxu0
      %523 = vmatprep.mubr.f32.mxu0 0.0
      %524 = vmatmul.mubr.f32.gmra.mxu0 %v367
      %v525 = vpop.f32.mrf.mxu0
      %v526 = vadd.f32 0.0, %v525
      %v527 = vpop.f32.mrf.mxu0
      %528 = vdwg.mxu0
      %529 = vst [vmem:[%s280] sm:$0xff] %v451
      %530 = vst [vmem:[%s280 + $0x8] sm:$0xff] %v456
      %531 = vst [vmem:[%s280 + $0x10] sm:$0xff] %v461
      %532 = vst [vmem:[%s280 + $0x18] sm:$0xff] %v466
      %533 = vst [vmem:[%s280 + $0x20] sm:$0xff] %v471
      %534 = vst [vmem:[%s280 + $0x28] sm:$0xff] %v476
      %535 = vst [vmem:[%s280 + $0x30] sm:$0xff] %v481
      %536 = vst [vmem:[%s280 + $0x38] sm:$0xff] %v486
      %537 = vst [vmem:[%s280 + $0x40] sm:$0xff] %v491
      %538 = vst [vmem:[%s280 + $0x48] sm:$0xff] %v496
      %539 = vst [vmem:[%s280 + $0x50] sm:$0xff] %v501
      %540 = vst [vmem:[%s280 + $0x58] sm:$0xff] %v506
      %541 = vst [vmem:[%s280 + $0x60] sm:$0xff] %v511
      %542 = vst [vmem:[%s280 + $0x68] sm:$0xff] %v516
      %543 = vst [vmem:[%s280 + $0x70] sm:$0xff] %v521
      %544 = vst [vmem:[%s280 + $0x78] sm:$0xff] %v526
      %v545 = vadd.f32 %v451, %v456
      %v546 = vadd.f32 %v545, %v461
      %v547 = vadd.f32 %v546, %v466
      %v548 = vadd.f32 %v547, %v471
      %v549 = vadd.f32 %v548, %v476
      %v550 = vadd.f32 %v549, %v481
      %v551 = vadd.f32 %v550, %v486
      %v552 = vadd.f32 %v551, %v491
      %v553 = vadd.f32 %v552, %v496
      %v554 = vadd.f32 %v553, %v501
      %v555 = vadd.f32 %v554, %v506
      %v556 = vadd.f32 %v555, %v511
      %v557 = vadd.f32 %v556, %v516
      %v558 = vadd.f32 %v557, %v521
      %v559 = vadd.f32 %v558, %v526
      %v560 = vrot.slane %v559, 4
      %v561 = vadd.f32 %v559, %v560
      %v562 = vrot.slane %v561, 2
      %v563 = vadd.f32 %v561, %v562
      %v564 = vrot.slane %v563, 1
      %v565 = vadd.f32 %v563, %v564
      %v566 = vrcp.pop 128.0
      %v567 = vmul.f32 %v565, %v566
      %v568 = vsub.f32 %v451, %v567
      %v569 = vsub.f32 %v456, %v567
      %v570 = vsub.f32 %v461, %v567
      %v571 = vsub.f32 %v466, %v567
      %v572 = vsub.f32 %v471, %v567
      %v573 = vsub.f32 %v476, %v567
      %v574 = vsub.f32 %v481, %v567
      %v575 = vsub.f32 %v486, %v567
      %v576 = vsub.f32 %v491, %v567
      %v577 = vsub.f32 %v496, %v567
      %v578 = vsub.f32 %v501, %v567
      %v579 = vsub.f32 %v506, %v567
      %v580 = vsub.f32 %v511, %v567
      %v581 = vsub.f32 %v516, %v567
      %v582 = vsub.f32 %v521, %v567
      %v583 = vsub.f32 %v526, %v567
      %v584 = vmul.f32 %v568, %v568
      %v585 = vmul.f32 %v569, %v569
      %v586 = vmul.f32 %v570, %v570
      %v587 = vmul.f32 %v571, %v571
      %v588 = vmul.f32 %v572, %v572
      %v589 = vmul.f32 %v573, %v573
      %v590 = vmul.f32 %v574, %v574
      %v591 = vmul.f32 %v575, %v575
      %v592 = vmul.f32 %v576, %v576
      %v593 = vmul.f32 %v577, %v577
      %v594 = vmul.f32 %v578, %v578
      %v595 = vmul.f32 %v579, %v579
      %v596 = vmul.f32 %v580, %v580
      %v597 = vmul.f32 %v581, %v581
      %v598 = vmul.f32 %v582, %v582
      %v599 = vmul.f32 %v583, %v583
      %v600 = vadd.f32 %v584, %v585
      %v601 = vadd.f32 %v600, %v586
      %v602 = vadd.f32 %v601, %v587
      %v603 = vadd.f32 %v602, %v588
      %v604 = vadd.f32 %v603, %v589
      %v605 = vadd.f32 %v604, %v590
      %v606 = vadd.f32 %v605, %v591
      %v607 = vadd.f32 %v606, %v592
      %v608 = vadd.f32 %v607, %v593
      %v609 = vadd.f32 %v608, %v594
      %v610 = vadd.f32 %v609, %v595
      %v611 = vadd.f32 %v610, %v596
      %v612 = vadd.f32 %v611, %v597
      %v613 = vadd.f32 %v612, %v598
      %v614 = vadd.f32 %v613, %v599
      %v615 = vrot.slane %v614, 4
      %v616 = vadd.f32 %v614, %v615
      %v617 = vrot.slane %v616, 2
      %v618 = vadd.f32 %v616, %v617
      %v619 = vrot.slane %v618, 1
      %v620 = vadd.f32 %v618, %v619
      %vm621 = vcmask 1040384
      %v622 = vsel %vm621, %v567, %v620
      %623 = vst [vmem:[%s289] sm:$0x3] %v622
      %s624 = smul.u32 8, %s22
      %p625 = scmp.lt.s32.totalorder %s21, 1
      %s626 = scalar_select %p625, %s21, 1
      %p627 = scmp.lt.s32.totalorder %s624, 15
      %s628 = scalar_select %p627, %s624, 15
      %s629 = smul.addr %s628, 2
      %s630 = smul.addr %s626, 32
      %s631 = sadd.s32 %s629, %s630
      %s632 = smul.addr %s631, 8
      %s633 = scalar_lea.vmem %s4, %s632
      %p634 = scmp.lt.s32.totalorder %s21, 1
      %s635 = scalar_select %p634, %s21, 1
      %p636 = scmp.lt.s32.totalorder %s22, 1
      %s637 = scalar_select %p636, %s22, 1
      %s638 = smul.addr %s635, 2
      %s639 = sadd.s32 %s637, %s638
      %s640 = smul.addr %s639, 2
      %s641 = scalar_lea.vmem %s5, %s640
      // Predicated region
      $region37: #{bottleneck_pallas.6} parent=35 // pred_check
        %p642 = pneg %p140
      $region38: #{bottleneck_pallas.6} parent=35 // pred_check_branch
        %644 = sbr.rel (%p642) target = $region40
      $region39: #{bottleneck_pallas.6} parent=35 // pred_region
        %s645 = smul.u32 8, %s22
      $region40: #{bottleneck_pallas.6} parent=35 // pred_fallthru
        _
      // Predicated region
      $region41: #{bottleneck_pallas.6} parent=35 // pred_check
        %p646 = pneg %p168
      $region42: #{bottleneck_pallas.6} parent=35 // pred_check_branch
        %648 = sbr.rel (%p646) target = $region44
      $region43: #{bottleneck_pallas.6} parent=35 // pred_region
        _
      $region44: #{bottleneck_pallas.6} parent=35 // pred_fallthru
        _
    $region36: #{bottleneck_pallas.6} parent=5 // pred_fallthru
      _
    %p649 = scmp.le.s32.totalorder 2, %s12
    // Predicated region
    $region45: #{bottleneck_pallas.6} parent=5 // pred_check
      %p650 = pneg %p649
    $region46: #{bottleneck_pallas.6} parent=5 // pred_check_branch
      %652 = sbr.rel (%p650) target = $region48
    $region47: #{bottleneck_pallas.6} parent=5 // pred_region
      %s653 = ssub.s32 %s12, 2
      // Predicated region
      $region49: #{bottleneck_pallas.6} parent=47 // pred_check
        %p654 = pneg %p146
      $region50: #{bottleneck_pallas.6} parent=47 // pred_check_branch
        %656 = sbr.rel (%p654) target = $region52
      $region51: #{bottleneck_pallas.6} parent=47 // pred_region
        %s657 = smul.u32 8, %s24
        %p658 = scmp.lt.s32.totalorder %s23, 1
        %s659 = scalar_select %p658, %s23, 1
        %p660 = scmp.lt.s32.totalorder %s657, 15
        %s661 = scalar_select %p660, %s657, 15
        %s662 = smul.addr %s661, 2
        %s663 = smul.addr %s659, 32
        %s664 = sadd.s32 %s662, %s663
        %s665 = smul.addr %s664, 8
        %s666 = scalar_lea.vmem %s4, %s665
      $region52: #{bottleneck_pallas.6} parent=47 // pred_fallthru
        _
      // Predicated region
      $region53: #{bottleneck_pallas.6} parent=47 // pred_check
        %p667 = pneg %p174
      $region54: #{bottleneck_pallas.6} parent=47 // pred_check_branch
        %669 = sbr.rel (%p667) target = $region56
      $region55: #{bottleneck_pallas.6} parent=47 // pred_region
        %p670 = scmp.lt.s32.totalorder %s23, 1
        %s671 = scalar_select %p670, %s23, 1
        %p672 = scmp.lt.s32.totalorder %s24, 1
        %s673 = scalar_select %p672, %s24, 1
        %s674 = smul.addr %s671, 2
        %s675 = sadd.s32 %s673, %s674
        %s676 = smul.addr %s675, 2
        %s677 = scalar_lea.vmem %s5, %s676
      $region56: #{bottleneck_pallas.6} parent=47 // pred_fallthru
        _
    $region48: #{bottleneck_pallas.6} parent=5 // pred_fallthru
      _
  $region6: #{bottleneck_pallas.6} parent=0 // loop_footer
    %s16 = sadd.s32 1, %s12
  $region7: #{bottleneck_pallas.6} parent=0 // loop_footer_branch
    %11 = sbr.rel target = $region3
  $region8: #{bottleneck_pallas.6} parent=0 // loop_exit
    _

// kernel: bottleneck_pallas.5
$region0: #{bottleneck_pallas.5}
  #allocation0 [shape = 'u32[]', space=smem, size = 0x4, offset = 0x4, fixed_abs, tag = 'smem constant byte address 0x4 - core index']
  #allocation1 [shape = 'u32[144,128]{1,0:T(1,128)}', space=vmem, size = 0x12000, scoped, tag = 'internal scratch']
  %s0 = inlined_call_operand.vmem [shape: f32[2,16,16,128], index: 0, kind: input, shape index: {}]
  %s1 = inlined_call_operand.vmem [shape: f32[1,128], index: 1, kind: input, shape index: {}]
  %s2 = inlined_call_operand.vmem [shape: f32[1,128], index: 2, kind: input, shape index: {}]
  %s3 = inlined_call_operand.vmem [shape: f32[3,384,128], index: 3, kind: input, shape index: {}]
  %s4 = inlined_call_operand.vmem [shape: f32[2,16,16,128], index: 4, kind: output, shape index: {0}]
  %s5 = inlined_call_operand.vmem [shape: f32[2,2,128], index: 5, kind: output, shape index: {1}]
  %6 = xla_tuple %s4, %s5
  %s7 = sld [smem:[#allocation0]]
  $region57: #{bottleneck_pallas.5} parent=0
    _
  %s9 = ssub.s32 1, %s7
  %s10 = scalar_select 0, %s9, %s7
  loop: start=0, step=1, limit=4
  $region2: #{bottleneck_pallas.5} parent=0 // loop_pre_header
    _
  $region3: #{bottleneck_pallas.5} parent=0 // loop_header
    %s12 = sphi 0, %s16
    %p13 = scmp.ge.s32.totalorder %s12, 4
    %s22 = sphi 0, %s24
    %s25 = sphi 0, %s22
    %s26 = sphi 0, %s25
    %s42 = sphi 0, %s26
    %s46 = sphi 0, %s46
    %s48 = sphi 0, %s46
    %s49 = sphi 0, %s48
    %s63 = sphi 0, %s49
    %s67 = sphi 0, %s67
    %s69 = sphi 0, %s67
    %s70 = sphi 0, %s69
    %s84 = sphi 0, %s70
    %s88 = sphi 0, %s88
    %s90 = sphi 0, %s88
    %s91 = sphi 0, %s90
    %s105 = sphi 0, %s91
    %s111 = sphi 0, %s113
    %s114 = sphi 0, %s111
    %s115 = sphi 0, %s114
    %s131 = sphi 0, %s115
    %s137 = sphi 0, %s139
    %s140 = sphi 0, %s137
    %s141 = sphi 0, %s140
    %s157 = sphi 0, %s141
  $region4: #{bottleneck_pallas.5} parent=0 // loop_header_branch
    %15 = sbr.rel (%p13) target = $region8
  $region5: #{bottleneck_pallas.5} parent=0 // loop_body
    %s17 = ssub.s32 %s12, 1
    %s18 = ssub.s32 %s12, 2
    %s19 = sadd.s32 %s12, 1
    %s20 = ssub.s32 %s12, %s19
    %p21 = scmp.eq.s32.totalorder %s20, 0
    %s23 = sadd.s32 %s22, 1
    %s24 = scalar_select %p21, %s22, %s23
    %p27 = pneg %p21
    %p28 = scmp.eq.s32.totalorder %s12, 1
    %p29 = por %p27, %p28
    %p30 = scmp.ne.s32.totalorder %s22, %s25
    %p31 = scmp.eq.s32.totalorder %s12, 0
    %p32 = por %p30, %p31
    %p33 = scmp.ne.s32.totalorder %s22, %s25
    %p34 = scmp.eq.s32.totalorder %s17, 1
    %p35 = por %p33, %p34
    %p36 = scmp.ne.s32.totalorder %s25, %s26
    %p37 = scmp.eq.s32.totalorder %s17, 0
    %p38 = por %p36, %p37
    %p39 = scmp.ne.s32.totalorder %s25, %s26
    %p40 = scmp.eq.s32.totalorder %s18, 1
    %p41 = por %p39, %p40
    %p43 = scmp.ne.s32.totalorder %s26, %s42
    %p44 = scmp.eq.s32.totalorder %s18, 0
    %p45 = por %p43, %p44
    %s47 = sadd.s32 %s46, 1
    %p50 = scmp.eq.s32.totalorder %s12, 1
    %p51 = scmp.ne.s32.totalorder %s46, %s48
    %p52 = scmp.eq.s32.totalorder %s12, 0
    %p53 = por %p51, %p52
    %p54 = scmp.ne.s32.totalorder %s46, %s48
    %p55 = scmp.eq.s32.totalorder %s17, 1
    %p56 = por %p54, %p55
    %p57 = scmp.ne.s32.totalorder %s48, %s49
    %p58 = scmp.eq.s32.totalorder %s17, 0
    %p59 = por %p57, %p58
    %p60 = scmp.ne.s32.totalorder %s48, %s49
    %p61 = scmp.eq.s32.totalorder %s18, 1
    %p62 = por %p60, %p61
    %p64 = scmp.ne.s32.totalorder %s49, %s63
    %p65 = scmp.eq.s32.totalorder %s18, 0
    %p66 = por %p64, %p65
    %s68 = sadd.s32 %s67, 1
    %p71 = scmp.eq.s32.totalorder %s12, 1
    %p72 = scmp.ne.s32.totalorder %s67, %s69
    %p73 = scmp.eq.s32.totalorder %s12, 0
    %p74 = por %p72, %p73
    %p75 = scmp.ne.s32.totalorder %s67, %s69
    %p76 = scmp.eq.s32.totalorder %s17, 1
    %p77 = por %p75, %p76
    %p78 = scmp.ne.s32.totalorder %s69, %s70
    %p79 = scmp.eq.s32.totalorder %s17, 0
    %p80 = por %p78, %p79
    %p81 = scmp.ne.s32.totalorder %s69, %s70
    %p82 = scmp.eq.s32.totalorder %s18, 1
    %p83 = por %p81, %p82
    %p85 = scmp.ne.s32.totalorder %s70, %s84
    %p86 = scmp.eq.s32.totalorder %s18, 0
    %p87 = por %p85, %p86
    %s89 = sadd.s32 %s88, 1
    %p92 = scmp.eq.s32.totalorder %s12, 1
    %p93 = scmp.ne.s32.totalorder %s88, %s90
    %p94 = scmp.eq.s32.totalorder %s12, 0
    %p95 = por %p93, %p94
    %p96 = scmp.ne.s32.totalorder %s88, %s90
    %p97 = scmp.eq.s32.totalorder %s17, 1
    %p98 = por %p96, %p97
    %p99 = scmp.ne.s32.totalorder %s90, %s91
    %p100 = scmp.eq.s32.totalorder %s17, 0
    %p101 = por %p99, %p100
    %p102 = scmp.ne.s32.totalorder %s90, %s91
    %p103 = scmp.eq.s32.totalorder %s18, 1
    %p104 = por %p102, %p103
    %p106 = scmp.ne.s32.totalorder %s91, %s105
    %p107 = scmp.eq.s32.totalorder %s18, 0
    %p108 = por %p106, %p107
    %s109 = ssub.s32 %s12, %s19
    %p110 = scmp.eq.s32.totalorder %s109, 0
    %s112 = sadd.s32 %s111, 1
    %s113 = scalar_select %p110, %s111, %s112
    %p116 = pneg %p110
    %p117 = scmp.eq.s32.totalorder %s12, 1
    %p118 = por %p116, %p117
    %p119 = scmp.ne.s32.totalorder %s111, %s114
    %p120 = scmp.eq.s32.totalorder %s12, 0
    %p121 = por %p119, %p120
    %p122 = scmp.ne.s32.totalorder %s111, %s114
    %p123 = scmp.eq.s32.totalorder %s17, 1
    %p124 = por %p122, %p123
    %p125 = scmp.ne.s32.totalorder %s114, %s115
    %p126 = scmp.eq.s32.totalorder %s17, 0
    %p127 = por %p125, %p126
    %p128 = scmp.ne.s32.totalorder %s114, %s115
    %p129 = scmp.eq.s32.totalorder %s18, 1
    %p130 = por %p128, %p129
    %p132 = scmp.ne.s32.totalorder %s115, %s131
    %p133 = scmp.eq.s32.totalorder %s18, 0
    %p134 = por %p132, %p133
    %s135 = ssub.s32 %s12, %s19
    %p136 = scmp.eq.s32.totalorder %s135, 0
    %s138 = sadd.s32 %s137, 1
    %s139 = scalar_select %p136, %s137, %s138
    %p142 = pneg %p136
    %p143 = scmp.eq.s32.totalorder %s12, 1
    %p144 = por %p142, %p143
    %p145 = scmp.ne.s32.totalorder %s137, %s140
    %p146 = scmp.eq.s32.totalorder %s12, 0
    %p147 = por %p145, %p146
    %p148 = scmp.ne.s32.totalorder %s137, %s140
    %p149 = scmp.eq.s32.totalorder %s17, 1
    %p150 = por %p148, %p149
    %p151 = scmp.ne.s32.totalorder %s140, %s141
    %p152 = scmp.eq.s32.totalorder %s17, 0
    %p153 = por %p151, %p152
    %p154 = scmp.ne.s32.totalorder %s140, %s141
    %p155 = scmp.eq.s32.totalorder %s18, 1
    %p156 = por %p154, %p155
    %p158 = scmp.ne.s32.totalorder %s141, %s157
    %p159 = scmp.eq.s32.totalorder %s18, 0
    %p160 = por %p158, %p159
    %p161 = scmp.le.s32.totalorder 1, %s12
    %p162 = scmp.lt.s32.totalorder %s12, 3
    %p163 = pnand %p161, %p162
    %p164 = pneg %p163
    // Predicated region
    $region9: #{bottleneck_pallas.5} parent=5 // pred_check
      _
    $region10: #{bottleneck_pallas.5} parent=5 // pred_check_branch
      %166 = sbr.rel (%p163) target = $region12
    $region11: #{bottleneck_pallas.5} parent=5 // pred_region
      %s167 = ssub.s32 %s12, 1
      // Predicated region
      $region13: #{bottleneck_pallas.5} parent=11 // pred_check
        %p168 = pneg %p59
      $region14: #{bottleneck_pallas.5} parent=11 // pred_check_branch
        %170 = sbr.rel (%p168) target = $region16
      $region15: #{bottleneck_pallas.5} parent=11 // pred_region
        _
      $region16: #{bottleneck_pallas.5} parent=11 // pred_fallthru
        _
      // Predicated region
      $region17: #{bottleneck_pallas.5} parent=11 // pred_check
        %p171 = pneg %p80
      $region18: #{bottleneck_pallas.5} parent=11 // pred_check_branch
        %173 = sbr.rel (%p171) target = $region20
      $region19: #{bottleneck_pallas.5} parent=11 // pred_region
        _
      $region20: #{bottleneck_pallas.5} parent=11 // pred_fallthru
        _
      // Predicated region
      $region21: #{bottleneck_pallas.5} parent=11 // pred_check
        %p174 = pneg %p101
      $region22: #{bottleneck_pallas.5} parent=11 // pred_check_branch
        %176 = sbr.rel (%p174) target = $region24
      $region23: #{bottleneck_pallas.5} parent=11 // pred_region
        _
      $region24: #{bottleneck_pallas.5} parent=11 // pred_fallthru
        _
    $region12: #{bottleneck_pallas.5} parent=5 // pred_fallthru
      _
    %p177 = scmp.lt.s32.totalorder %s12, 2
    // Predicated region
    $region25: #{bottleneck_pallas.5} parent=5 // pred_check
      %p178 = pneg %p177
    $region26: #{bottleneck_pallas.5} parent=5 // pred_check_branch
      %180 = sbr.rel (%p178) target = $region28
    $region27: #{bottleneck_pallas.5} parent=5 // pred_region
      // Predicated region
      $region29: #{bottleneck_pallas.5} parent=27 // pred_check
        %p181 = pneg %p32
      $region30: #{bottleneck_pallas.5} parent=27 // pred_check_branch
        %183 = sbr.rel (%p181) target = $region32
      $region31: #{bottleneck_pallas.5} parent=27 // pred_region
        %p184 = scmp.lt.s32.totalorder %s12, 1
        %s185 = scalar_select %p184, %s12, 1
        %s186 = smul.addr %s185, 32
        %s187 = smul.addr %s186, 8
        %s188 = scalar_lea.vmem %s0, %s187
      $region32: #{bottleneck_pallas.5} parent=27 // pred_fallthru
        _
    $region28: #{bottleneck_pallas.5} parent=5 // pred_fallthru
      _
    %p189 = scmp.le.s32.totalorder 1, %s12
    %p190 = scmp.lt.s32.totalorder %s12, 3
    %p191 = pnand %p189, %p190
    %p192 = pneg %p191
    // Predicated region
    $region33: #{bottleneck_pallas.5} parent=5 // pred_check
      _
    $region34: #{bottleneck_pallas.5} parent=5 // pred_check_branch
      %194 = sbr.rel (%p191) target = $region36
    $region35: #{bottleneck_pallas.5} parent=5 // pred_region
      %s195 = ssub.s32 %s12, 1
      %p196 = scmp.lt.s32.totalorder %s17, 1
      %s197 = scalar_select %p196, %s17, 1
      %s198 = smul.addr %s197, 32
      %s199 = smul.addr %s198, 8
      %s200 = scalar_lea.vmem %s0, %s199
      %p201 = pneg %p38
      %p202 = pneg %p35
      %p203 = pneg %p59
      %p204 = pneg %p56
      %p205 = pneg %p80
      %p206 = pneg %p77
      %p207 = pneg %p101
      %p208 = pneg %p98
      %p209 = pneg %p127
      %p210 = pneg %p124
      %p211 = scmp.lt.s32.totalorder %s17, 1
      %s212 = scalar_select %p211, %s17, 1
      %s213 = smul.addr %s212, 32
      %s214 = smul.addr %s213, 8
      %s215 = scalar_lea.vmem %s4, %s214
      %p216 = pneg %p153
      %p217 = pneg %p150
      %p218 = scmp.lt.s32.totalorder %s17, 1
      %s219 = scalar_select %p218, %s17, 1
      %s220 = smul.addr %s219, 2
      %s221 = scalar_lea.vmem %s5, %s220
      %p222 = scmp.lt.s32.totalorder %s17, 1
      %s223 = scalar_select %p222, %s17, 1
      %s224 = smul.addr %s223, 32
      %s225 = smul.addr %s224, 8
      %s226 = scalar_lea.vmem %s0, %s225
      %p227 = scmp.lt.s32.totalorder %s17, 1
      %s228 = scalar_select %p227, %s17, 1
      %s229 = smul.addr %s228, 32
      %s230 = smul.addr %s229, 8
      %s231 = scalar_lea.vmem %s4, %s230
      %p232 = scmp.lt.s32.totalorder %s17, 1
      %s233 = scalar_select %p232, %s17, 1
      %s234 = smul.addr %s233, 2
      %s235 = scalar_lea.vmem %s5, %s234
      %v236 = vld [vmem:[%s1] sm:$0x1]
      %v237 = vld [vmem:[%s2] sm:$0x1]
      %v238 = vld [vmem:[%s226] sm:$0xff]
      %v239 = vld [vmem:[%s226 + $0x8] sm:$0xff]
      %v240 = vld [vmem:[%s226 + $0x10] sm:$0xff]
      %v241 = vld [vmem:[%s226 + $0x18] sm:$0xff]
      %v242 = vld [vmem:[%s226 + $0x20] sm:$0xff]
      %v243 = vld [vmem:[%s226 + $0x28] sm:$0xff]
      %v244 = vld [vmem:[%s226 + $0x30] sm:$0xff]
      %v245 = vld [vmem:[%s226 + $0x38] sm:$0xff]
      %v246 = vld [vmem:[%s226 + $0x40] sm:$0xff]
      %v247 = vld [vmem:[%s226 + $0x48] sm:$0xff]
      %v248 = vld [vmem:[%s226 + $0x50] sm:$0xff]
      %v249 = vld [vmem:[%s226 + $0x58] sm:$0xff]
      %v250 = vld [vmem:[%s226 + $0x60] sm:$0xff]
      %v251 = vld [vmem:[%s226 + $0x68] sm:$0xff]
      %v252 = vld [vmem:[%s226 + $0x70] sm:$0xff]
      %v253 = vld [vmem:[%s226 + $0x78] sm:$0xff]
      %v254 = vld [vmem:[%s226 + $0x80] sm:$0xff]
      %v255 = vld [vmem:[%s226 + $0x88] sm:$0xff]
      %v256 = vld [vmem:[%s226 + $0x90] sm:$0xff]
      %v257 = vld [vmem:[%s226 + $0x98] sm:$0xff]
      %v258 = vld [vmem:[%s226 + $0xa0] sm:$0xff]
      %v259 = vld [vmem:[%s226 + $0xa8] sm:$0xff]
      %v260 = vld [vmem:[%s226 + $0xb0] sm:$0xff]
      %v261 = vld [vmem:[%s226 + $0xb8] sm:$0xff]
      %v262 = vld [vmem:[%s226 + $0xc0] sm:$0xff]
      %v263 = vld [vmem:[%s226 + $0xc8] sm:$0xff]
      %v264 = vld [vmem:[%s226 + $0xd0] sm:$0xff]
      %v265 = vld [vmem:[%s226 + $0xd8] sm:$0xff]
      %v266 = vld [vmem:[%s226 + $0xe0] sm:$0xff]
      %v267 = vld [vmem:[%s226 + $0xe8] sm:$0xff]
      %v268 = vld [vmem:[%s226 + $0xf0] sm:$0xff]
      %v269 = vld [vmem:[%s226 + $0xf8] sm:$0xff]
      %v271 = vlaneseq
      %v272 = vshrl.u32 %v271, 7
      %v273 = vsub.s32 0, %v272
      %v274 = vrot.slane %v236, %v273
      %v276 = vmul.f32 %v238, %v274
      %v277 = vmul.f32 %v239, %v274
      %v278 = vmul.f32 %v240, %v274
      %v279 = vmul.f32 %v241, %v274
      %v280 = vmul.f32 %v242, %v274
      %v281 = vmul.f32 %v243, %v274
      %v282 = vmul.f32 %v244, %v274
      %v283 = vmul.f32 %v245, %v274
      %v284 = vmul.f32 %v246, %v274
      %v285 = vmul.f32 %v247, %v274
      %v286 = vmul.f32 %v248, %v274
      %v287 = vmul.f32 %v249, %v274
      %v288 = vmul.f32 %v250, %v274
      %v289 = vmul.f32 %v251, %v274
      %v290 = vmul.f32 %v252, %v274
      %v291 = vmul.f32 %v253, %v274
      %v292 = vmul.f32 %v254, %v274
      %v293 = vmul.f32 %v255, %v274
      %v294 = vmul.f32 %v256, %v274
      %v295 = vmul.f32 %v257, %v274
      %v296 = vmul.f32 %v258, %v274
      %v297 = vmul.f32 %v259, %v274
      %v298 = vmul.f32 %v260, %v274
      %v299 = vmul.f32 %v261, %v274
      %v300 = vmul.f32 %v262, %v274
      %v301 = vmul.f32 %v263, %v274
      %v302 = vmul.f32 %v264, %v274
      %v303 = vmul.f32 %v265, %v274
      %v304 = vmul.f32 %v266, %v274
      %v305 = vmul.f32 %v267, %v274
      %v306 = vmul.f32 %v268, %v274
      %v307 = vmul.f32 %v269, %v274
      %v309 = vlaneseq
      %v310 = vshrl.u32 %v309, 7
      %v311 = vsub.s32 0, %v310
      %v312 = vrot.slane %v237, %v311
      %v314 = vadd.f32 %v276, %v312
      %v315 = vadd.f32 %v277, %v312
      %v316 = vadd.f32 %v278, %v312
      %v317 = vadd.f32 %v279, %v312
      %v318 = vadd.f32 %v280, %v312
      %v319 = vadd.f32 %v281, %v312
      %v320 = vadd.f32 %v282, %v312
      %v321 = vadd.f32 %v283, %v312
      %v322 = vadd.f32 %v284, %v312
      %v323 = vadd.f32 %v285, %v312
      %v324 = vadd.f32 %v286, %v312
      %v325 = vadd.f32 %v287, %v312
      %v326 = vadd.f32 %v288, %v312
      %v327 = vadd.f32 %v289, %v312
      %v328 = vadd.f32 %v290, %v312
      %v329 = vadd.f32 %v291, %v312
      %v330 = vadd.f32 %v292, %v312
      %v331 = vadd.f32 %v293, %v312
      %v332 = vadd.f32 %v294, %v312
      %v333 = vadd.f32 %v295, %v312
      %v334 = vadd.f32 %v296, %v312
      %v335 = vadd.f32 %v297, %v312
      %v336 = vadd.f32 %v298, %v312
      %v337 = vadd.f32 %v299, %v312
      %v338 = vadd.f32 %v300, %v312
      %v339 = vadd.f32 %v301, %v312
      %v340 = vadd.f32 %v302, %v312
      %v341 = vadd.f32 %v303, %v312
      %v342 = vadd.f32 %v304, %v312
      %v343 = vadd.f32 %v305, %v312
      %v344 = vadd.f32 %v306, %v312
      %v345 = vadd.f32 %v307, %v312
      %v346 = vmax.f32 %v314, 0.0
      %v347 = vmax.f32 %v315, 0.0
      %v348 = vmax.f32 %v316, 0.0
      %v349 = vmax.f32 %v317, 0.0
      %v350 = vmax.f32 %v318, 0.0
      %v351 = vmax.f32 %v319, 0.0
      %v352 = vmax.f32 %v320, 0.0
      %v353 = vmax.f32 %v321, 0.0
      %v354 = vmax.f32 %v322, 0.0
      %v355 = vmax.f32 %v323, 0.0
      %v356 = vmax.f32 %v324, 0.0
      %v357 = vmax.f32 %v325, 0.0
      %v358 = vmax.f32 %v326, 0.0
      %v359 = vmax.f32 %v327, 0.0
      %v360 = vmax.f32 %v328, 0.0
      %v361 = vmax.f32 %v329, 0.0
      %v362 = vmax.f32 %v330, 0.0
      %v363 = vmax.f32 %v331, 0.0
      %v364 = vmax.f32 %v332, 0.0
      %v365 = vmax.f32 %v333, 0.0
      %v366 = vmax.f32 %v334, 0.0
      %v367 = vmax.f32 %v335, 0.0
      %v368 = vmax.f32 %v336, 0.0
      %v369 = vmax.f32 %v337, 0.0
      %v370 = vmax.f32 %v338, 0.0
      %v371 = vmax.f32 %v339, 0.0
      %v372 = vmax.f32 %v340, 0.0
      %v373 = vmax.f32 %v341, 0.0
      %v374 = vmax.f32 %v342, 0.0
      %v375 = vmax.f32 %v343, 0.0
      %v376 = vmax.f32 %v344, 0.0
      %v377 = vmax.f32 %v345, 0.0
      %vm410 = vcmask 1040384
      %v411 = vrot.slane %v346, 7
      %v412 = vrot.slane %v347, 7
      %v413 = vsel %vm410, %v411, %v412
      %v414 = vrot.slane %v348, 7
      %v415 = vrot.slane %v349, 7
      %v416 = vsel %vm410, %v414, %v415
      %v417 = vrot.slane %v350, 7
      %v418 = vrot.slane %v351, 7
      %v419 = vsel %vm410, %v417, %v418
      %v420 = vrot.slane %v352, 7
      %v421 = vrot.slane %v353, 7
      %v422 = vsel %vm410, %v420, %v421
      %v423 = vrot.slane %v354, 7
      %v424 = vrot.slane %v355, 7
      %v425 = vsel %vm410, %v423, %v424
      %v426 = vrot.slane %v356, 7
      %v427 = vrot.slane %v357, 7
      %v428 = vsel %vm410, %v426, %v427
      %v429 = vrot.slane %v358, 7
      %v430 = vrot.slane %v359, 7
      %v431 = vsel %vm410, %v429, %v430
      %v432 = vrot.slane %v360, 7
      %v433 = vrot.slane %v361, 7
      %v434 = vsel %vm410, %v432, %v433
      %v435 = vrot.slane %v362, 7
      %v436 = vrot.slane %v363, 7
      %v437 = vsel %vm410, %v435, %v436
      %v438 = vrot.slane %v364, 7
      %v439 = vrot.slane %v365, 7
      %v440 = vsel %vm410, %v438, %v439
      %v441 = vrot.slane %v366, 7
      %v442 = vrot.slane %v367, 7
      %v443 = vsel %vm410, %v441, %v442
      %v444 = vrot.slane %v368, 7
      %v445 = vrot.slane %v369, 7
      %v446 = vsel %vm410, %v444, %v445
      %v447 = vrot.slane %v370, 7
      %v448 = vrot.slane %v371, 7
      %v449 = vsel %vm410, %v447, %v448
      %v450 = vrot.slane %v372, 7
      %v451 = vrot.slane %v373, 7
      %v452 = vsel %vm410, %v450, %v451
      %v453 = vrot.slane %v374, 7
      %v454 = vrot.slane %v375, 7
      %v455 = vsel %vm410, %v453, %v454
      %v456 = vrot.slane %v376, 7
      %v457 = vrot.slane %v377, 7
      %v458 = vsel %vm410, %v456, %v457
      %v507 = vsel %vm410, 0.0, %v411
      %v508 = vsel %vm410, 0.0, %v414
      %v509 = vsel %vm410, 0.0, %v417
      %v510 = vsel %vm410, 0.0, %v420
      %v511 = vsel %vm410, 0.0, %v423
      %v512 = vsel %vm410, 0.0, %v426
      %v513 = vsel %vm410, 0.0, %v429
      %v514 = vsel %vm410, 0.0, %v432
      %v515 = vsel %vm410, 0.0, %v435
      %v516 = vsel %vm410, 0.0, %v438
      %v517 = vsel %vm410, 0.0, %v441
      %v518 = vsel %vm410, 0.0, %v444
      %v519 = vsel %vm410, 0.0, %v447
      %v520 = vsel %vm410, 0.0, %v450
      %v521 = vsel %vm410, 0.0, %v453
      %v522 = vsel %vm410, 0.0, %v456
      %v523 = vsel %vm410, %v412, 0.0
      %v524 = vsel %vm410, %v415, 0.0
      %v525 = vsel %vm410, %v418, 0.0
      %v526 = vsel %vm410, %v421, 0.0
      %v527 = vsel %vm410, %v424, 0.0
      %v528 = vsel %vm410, %v427, 0.0
      %v529 = vsel %vm410, %v430, 0.0
      %v530 = vsel %vm410, %v433, 0.0
      %v531 = vsel %vm410, %v436, 0.0
      %v532 = vsel %vm410, %v439, 0.0
      %v533 = vsel %vm410, %v442, 0.0
      %v534 = vsel %vm410, %v445, 0.0
      %v535 = vsel %vm410, %v448, 0.0
      %v536 = vsel %vm410, %v451, 0.0
      %v537 = vsel %vm410, %v454, 0.0
      %v538 = vsel %vm410, %v457, 0.0
      %vm570 = vcmask 1046528
      %v571 = vrot.slane 0.0, 1
      %v572 = vsel %vm570, %v571, %v571
      %v573 = vrot.slane %v507, 1
      %v574 = vrot.slane %v413, 1
      %v575 = vsel %vm570, %v573, %v574
      %v576 = vrot.slane %v523, 1
      %v577 = vsel %vm570, %v574, %v576
      %v578 = vrot.slane %v508, 1
      %v579 = vrot.slane %v416, 1
      %v580 = vsel %vm570, %v578, %v579
      %v581 = vrot.slane %v524, 1
      %v582 = vsel %vm570, %v579, %v581
      %v583 = vrot.slane %v509, 1
      %v584 = vrot.slane %v419, 1
      %v585 = vsel %vm570, %v583, %v584
      %v586 = vrot.slane %v525, 1
      %v587 = vsel %vm570, %v584, %v586
      %v588 = vrot.slane %v510, 1
      %v589 = vrot.slane %v422, 1
      %v590 = vsel %vm570, %v588, %v589
      %v591 = vrot.slane %v526, 1
      %v592 = vsel %vm570, %v589, %v591
      %v593 = vrot.slane %v511, 1
      %v594 = vrot.slane %v425, 1
      %v595 = vsel %vm570, %v593, %v594
      %v596 = vrot.slane %v527, 1
      %v597 = vsel %vm570, %v594, %v596
      %v598 = vrot.slane %v512, 1
      %v599 = vrot.slane %v428, 1
      %v600 = vsel %vm570, %v598, %v599
      %v601 = vrot.slane %v528, 1
      %v602 = vsel %vm570, %v599, %v601
      %v603 = vrot.slane %v513, 1
      %v604 = vrot.slane %v431, 1
      %v605 = vsel %vm570, %v603, %v604
      %v606 = vrot.slane %v529, 1
      %v607 = vsel %vm570, %v604, %v606
      %v608 = vrot.slane %v514, 1
      %v609 = vrot.slane %v434, 1
      %v610 = vsel %vm570, %v608, %v609
      %v611 = vrot.slane %v530, 1
      %v612 = vsel %vm570, %v609, %v611
      %v613 = vrot.slane %v515, 1
      %v614 = vrot.slane %v437, 1
      %v615 = vsel %vm570, %v613, %v614
      %v616 = vrot.slane %v531, 1
      %v617 = vsel %vm570, %v614, %v616
      %v618 = vrot.slane %v516, 1
      %v619 = vrot.slane %v440, 1
      %v620 = vsel %vm570, %v618, %v619
      %v621 = vrot.slane %v532, 1
      %v622 = vsel %vm570, %v619, %v621
      %v623 = vrot.slane %v517, 1
      %v624 = vrot.slane %v443, 1
      %v625 = vsel %vm570, %v623, %v624
      %v626 = vrot.slane %v533, 1
      %v627 = vsel %vm570, %v624, %v626
      %v628 = vrot.slane %v518, 1
      %v629 = vrot.slane %v446, 1
      %v630 = vsel %vm570, %v628, %v629
      %v631 = vrot.slane %v534, 1
      %v632 = vsel %vm570, %v629, %v631
      %v633 = vrot.slane %v519, 1
      %v634 = vrot.slane %v449, 1
      %v635 = vsel %vm570, %v633, %v634
      %v636 = vrot.slane %v535, 1
      %v637 = vsel %vm570, %v634, %v636
      %v638 = vrot.slane %v520, 1
      %v639 = vrot.slane %v452, 1
      %v640 = vsel %vm570, %v638, %v639
      %v641 = vrot.slane %v536, 1
      %v642 = vsel %vm570, %v639, %v641
      %v643 = vrot.slane %v521, 1
      %v644 = vrot.slane %v455, 1
      %v645 = vsel %vm570, %v643, %v644
      %v646 = vrot.slane %v537, 1
      %v647 = vsel %vm570, %v644, %v646
      %vm679 = vcmask 1045504
      %v680 = vrot.slane 0.0, 2
      %v681 = vsel %vm679, %v680, %v680
      %v682 = vrot.slane %v507, 2
      %v683 = vrot.slane %v413, 2
      %v684 = vsel %vm679, %v682, %v683
      %v685 = vrot.slane %v523, 2
      %v686 = vsel %vm679, %v683, %v685
      %v687 = vrot.slane %v508, 2
      %v688 = vrot.slane %v416, 2
      %v689 = vsel %vm679, %v687, %v688
      %v690 = vrot.slane %v524, 2
      %v691 = vsel %vm679, %v688, %v690
      %v692 = vrot.slane %v509, 2
      %v693 = vrot.slane %v419, 2
      %v694 = vsel %vm679, %v692, %v693
      %v695 = vrot.slane %v525, 2
      %v696 = vsel %vm679, %v693, %v695
      %v697 = vrot.slane %v510, 2
      %v698 = vrot.slane %v422, 2
      %v699 = vsel %vm679, %v697, %v698
      %v700 = vrot.slane %v526, 2
      %v701 = vsel %vm679, %v698, %v700
      %v702 = vrot.slane %v511, 2
      %v703 = vrot.slane %v425, 2
      %v704 = vsel %vm679, %v702, %v703
      %v705 = vrot.slane %v527, 2
      %v706 = vsel %vm679, %v703, %v705
      %v707 = vrot.slane %v512, 2
      %v708 = vrot.slane %v428, 2
      %v709 = vsel %vm679, %v707, %v708
      %v710 = vrot.slane %v528, 2
      %v711 = vsel %vm679, %v708, %v710
      %v712 = vrot.slane %v513, 2
      %v713 = vrot.slane %v431, 2
      %v714 = vsel %vm679, %v712, %v713
      %v715 = vrot.slane %v529, 2
      %v716 = vsel %vm679, %v713, %v715
      %v717 = vrot.slane %v514, 2
      %v718 = vrot.slane %v434, 2
      %v719 = vsel %vm679, %v717, %v718
      %v720 = vrot.slane %v530, 2
      %v721 = vsel %vm679, %v718, %v720
      %v722 = vrot.slane %v515, 2
      %v723 = vrot.slane %v437, 2
      %v724 = vsel %vm679, %v722, %v723
      %v725 = vrot.slane %v531, 2
      %v726 = vsel %vm679, %v723, %v725
      %v727 = vrot.slane %v516, 2
      %v728 = vrot.slane %v440, 2
      %v729 = vsel %vm679, %v727, %v728
      %v730 = vrot.slane %v532, 2
      %v731 = vsel %vm679, %v728, %v730
      %v732 = vrot.slane %v517, 2
      %v733 = vrot.slane %v443, 2
      %v734 = vsel %vm679, %v732, %v733
      %v735 = vrot.slane %v533, 2
      %v736 = vsel %vm679, %v733, %v735
      %v737 = vrot.slane %v518, 2
      %v738 = vrot.slane %v446, 2
      %v739 = vsel %vm679, %v737, %v738
      %v740 = vrot.slane %v534, 2
      %v741 = vsel %vm679, %v738, %v740
      %v742 = vrot.slane %v519, 2
      %v743 = vrot.slane %v449, 2
      %v744 = vsel %vm679, %v742, %v743
      %v745 = vrot.slane %v535, 2
      %v746 = vsel %vm679, %v743, %v745
      %v747 = vrot.slane %v520, 2
      %v748 = vrot.slane %v452, 2
      %v749 = vsel %vm679, %v747, %v748
      %v750 = vrot.slane %v536, 2
      %v751 = vsel %vm679, %v748, %v750
      %v752 = vrot.slane %v521, 2
      %v753 = vrot.slane %v455, 2
      %v754 = vsel %vm679, %v752, %v753
      %v755 = vrot.slane %v537, 2
      %v756 = vsel %vm679, %v753, %v755
      %v788 = vld [vmem:[%s3] sm:$0xff]
      %v789 = vld [vmem:[%s3 + $0x8] sm:$0xff]
      %v790 = vld [vmem:[%s3 + $0x10] sm:$0xff]
      %v791 = vld [vmem:[%s3 + $0x18] sm:$0xff]
      %v792 = vld [vmem:[%s3 + $0x20] sm:$0xff]
      %v793 = vld [vmem:[%s3 + $0x28] sm:$0xff]
      %v794 = vld [vmem:[%s3 + $0x30] sm:$0xff]
      %v795 = vld [vmem:[%s3 + $0x38] sm:$0xff]
      %v796 = vld [vmem:[%s3 + $0x40] sm:$0xff]
      %v797 = vld [vmem:[%s3 + $0x48] sm:$0xff]
      %v798 = vld [vmem:[%s3 + $0x50] sm:$0xff]
      %v799 = vld [vmem:[%s3 + $0x58] sm:$0xff]
      %v800 = vld [vmem:[%s3 + $0x60] sm:$0xff]
      %v801 = vld [vmem:[%s3 + $0x68] sm:$0xff]
      %v802 = vld [vmem:[%s3 + $0x70] sm:$0xff]
      %v803 = vld [vmem:[%s3 + $0x78] sm:$0xff]
      %v804 = vld [vmem:[%s3 + $0x80] sm:$0xff]
      %v805 = vld [vmem:[%s3 + $0x88] sm:$0xff]
      %v806 = vld [vmem:[%s3 + $0x90] sm:$0xff]
      %v807 = vld [vmem:[%s3 + $0x98] sm:$0xff]
      %v808 = vld [vmem:[%s3 + $0xa0] sm:$0xff]
      %v809 = vld [vmem:[%s3 + $0xa8] sm:$0xff]
      %v810 = vld [vmem:[%s3 + $0xb0] sm:$0xff]
      %v811 = vld [vmem:[%s3 + $0xb8] sm:$0xff]
      %v812 = vld [vmem:[%s3 + $0xc0] sm:$0xff]
      %v813 = vld [vmem:[%s3 + $0xc8] sm:$0xff]
      %v814 = vld [vmem:[%s3 + $0xd0] sm:$0xff]
      %v815 = vld [vmem:[%s3 + $0xd8] sm:$0xff]
      %v816 = vld [vmem:[%s3 + $0xe0] sm:$0xff]
      %v817 = vld [vmem:[%s3 + $0xe8] sm:$0xff]
      %v818 = vld [vmem:[%s3 + $0xf0] sm:$0xff]
      %v819 = vld [vmem:[%s3 + $0xf8] sm:$0xff]
      %v820 = vld [vmem:[%s3 + $0x100] sm:$0xff]
      %v821 = vld [vmem:[%s3 + $0x108] sm:$0xff]
      %v822 = vld [vmem:[%s3 + $0x110] sm:$0xff]
      %v823 = vld [vmem:[%s3 + $0x118] sm:$0xff]
      %v824 = vld [vmem:[%s3 + $0x120] sm:$0xff]
      %v825 = vld [vmem:[%s3 + $0x128] sm:$0xff]
      %v826 = vld [vmem:[%s3 + $0x130] sm:$0xff]
      %v827 = vld [vmem:[%s3 + $0x138] sm:$0xff]
      %v828 = vld [vmem:[%s3 + $0x140] sm:$0xff]
      %v829 = vld [vmem:[%s3 + $0x148] sm:$0xff]
      %v830 = vld [vmem:[%s3 + $0x150] sm:$0xff]
      %v831 = vld [vmem:[%s3 + $0x158] sm:$0xff]
      %v832 = vld [vmem:[%s3 + $0x160] sm:$0xff]
      %v833 = vld [vmem:[%s3 + $0x168] sm:$0xff]
      %v834 = vld [vmem:[%s3 + $0x170] sm:$0xff]
      %v835 = vld [vmem:[%s3 + $0x178] sm:$0xff]
      %v838 = vrot.slane %v522, 1
      %v839 = vrot.slane %v458, 1
      %v840 = vsel %vm570, %v838, %v839
      %v841 = vrot.slane %v538, 1
      %v842 = vsel %vm570, %v839, %v841
      %v845 = vrot.slane %v522, 2
      %v846 = vrot.slane %v458, 2
      %v847 = vsel %vm679, %v845, %v846
      %v848 = vrot.slane %v538, 2
      %v849 = vsel %vm679, %v846, %v848
      %s852 = scalar_lea.vmem %s3, 384
      %v853 = vld [vmem:[%s852] sm:$0xff]
      %v854 = vld [vmem:[%s852 + $0x8] sm:$0xff]
      %v855 = vld [vmem:[%s852 + $0x10] sm:$0xff]
      %v856 = vld [vmem:[%s852 + $0x18] sm:$0xff]
      %v857 = vld [vmem:[%s852 + $0x20] sm:$0xff]
      %v858 = vld [vmem:[%s852 + $0x28] sm:$0xff]
      %v859 = vld [vmem:[%s852 + $0x30] sm:$0xff]
      %v860 = vld [vmem:[%s852 + $0x38] sm:$0xff]
      %v861 = vld [vmem:[%s852 + $0x40] sm:$0xff]
      %v862 = vld [vmem:[%s852 + $0x48] sm:$0xff]
      %v863 = vld [vmem:[%s852 + $0x50] sm:$0xff]
      %v864 = vld [vmem:[%s852 + $0x58] sm:$0xff]
      %v865 = vld [vmem:[%s852 + $0x60] sm:$0xff]
      %v866 = vld [vmem:[%s852 + $0x68] sm:$0xff]
      %v867 = vld [vmem:[%s852 + $0x70] sm:$0xff]
      %v868 = vld [vmem:[%s852 + $0x78] sm:$0xff]
      %v869 = vld [vmem:[%s852 + $0x80] sm:$0xff]
      %v870 = vld [vmem:[%s852 + $0x88] sm:$0xff]
      %v871 = vld [vmem:[%s852 + $0x90] sm:$0xff]
      %v872 = vld [vmem:[%s852 + $0x98] sm:$0xff]
      %v873 = vld [vmem:[%s852 + $0xa0] sm:$0xff]
      %v874 = vld [vmem:[%s852 + $0xa8] sm:$0xff]
      %v875 = vld [vmem:[%s852 + $0xb0] sm:$0xff]
      %v876 = vld [vmem:[%s852 + $0xb8] sm:$0xff]
      %v877 = vld [vmem:[%s852 + $0xc0] sm:$0xff]
      %v878 = vld [vmem:[%s852 + $0xc8] sm:$0xff]
      %v879 = vld [vmem:[%s852 + $0xd0] sm:$0xff]
      %v880 = vld [vmem:[%s852 + $0xd8] sm:$0xff]
      %v881 = vld [vmem:[%s852 + $0xe0] sm:$0xff]
      %v882 = vld [vmem:[%s852 + $0xe8] sm:$0xff]
      %v883 = vld [vmem:[%s852 + $0xf0] sm:$0xff]
      %v884 = vld [vmem:[%s852 + $0xf8] sm:$0xff]
      %v885 = vld [vmem:[%s852 + $0x100] sm:$0xff]
      %v886 = vld [vmem:[%s852 + $0x108] sm:$0xff]
      %v887 = vld [vmem:[%s852 + $0x110] sm:$0xff]
      %v888 = vld [vmem:[%s852 + $0x118] sm:$0xff]
      %v889 = vld [vmem:[%s852 + $0x120] sm:$0xff]
      %v890 = vld [vmem:[%s852 + $0x128] sm:$0xff]
      %v891 = vld [vmem:[%s852 + $0x130] sm:$0xff]
      %v892 = vld [vmem:[%s852 + $0x138] sm:$0xff]
      %v893 = vld [vmem:[%s852 + $0x140] sm:$0xff]
      %v894 = vld [vmem:[%s852 + $0x148] sm:$0xff]
      %v895 = vld [vmem:[%s852 + $0x150] sm:$0xff]
      %v896 = vld [vmem:[%s852 + $0x158] sm:$0xff]
      %v897 = vld [vmem:[%s852 + $0x160] sm:$0xff]
      %v898 = vld [vmem:[%s852 + $0x168] sm:$0xff]
      %v899 = vld [vmem:[%s852 + $0x170] sm:$0xff]
      %v900 = vld [vmem:[%s852 + $0x178] sm:$0xff]
      %901 = vmatprep.subr.mxu0 0.0
      %902 = vmatpush1.msra.mxu0 %v868
      %903 = vmatprep.subr.mxu0 0.0
      %904 = vmatpush1.msra.mxu0 %v867
      %905 = vmatprep.subr.mxu0 0.0
      %906 = vmatpush1.msra.mxu0 %v866
      %907 = vmatprep.subr.mxu0 0.0
      %908 = vmatpush1.msra.mxu0 %v865
      %909 = vmatprep.subr.mxu0 0.0
      %910 = vmatpush1.msra.mxu0 %v864
      %911 = vmatprep.subr.mxu0 0.0
      %912 = vmatpush1.msra.mxu0 %v863
      %913 = vmatprep.subr.mxu0 0.0
      %914 = vmatpush1.msra.mxu0 %v862
      %915 = vmatprep.subr.mxu0 0.0
      %916 = vmatpush1.msra.mxu0 %v861
      %917 = vmatprep.subr.mxu0 0.0
      %918 = vmatpush1.msra.mxu0 %v860
      %919 = vmatprep.subr.mxu0 0.0
      %920 = vmatpush1.msra.mxu0 %v859
      %921 = vmatprep.subr.mxu0 0.0
      %922 = vmatpush1.msra.mxu0 %v858
      %923 = vmatprep.subr.mxu0 0.0
      %924 = vmatpush1.msra.mxu0 %v857
      %925 = vmatprep.subr.mxu0 0.0
      %926 = vmatpush1.msra.mxu0 %v856
      %927 = vmatprep.subr.mxu0 0.0
      %928 = vmatpush1.msra.mxu0 %v855
      %929 = vmatprep.subr.mxu0 0.0
      %930 = vmatpush1.msra.mxu0 %v854
      %931 = vmatprep.subr.mxu0 0.0
      %932 = vmatpush1.msra.mxu0 %v853
      %933 = vmatprep.subr.mxu0 0.0
      %934 = vmatpush2.msra.mxu0 %v884
      %935 = vmatprep.subr.mxu0 0.0
      %936 = vmatpush2.msra.mxu0 %v883
      %937 = vmatprep.subr.mxu0 0.0
      %938 = vmatpush2.msra.mxu0 %v882
      %939 = vmatprep.subr.mxu0 0.0
      %940 = vmatpush2.msra.mxu0 %v881
      %941 = vmatprep.subr.mxu0 0.0
      %942 = vmatpush2.msra.mxu0 %v880
      %943 = vmatprep.subr.mxu0 0.0
      %944 = vmatpush2.msra.mxu0 %v879
      %945 = vmatprep.subr.mxu0 0.0
      %946 = vmatpush2.msra.mxu0 %v878
      %947 = vmatprep.subr.mxu0 0.0
      %948 = vmatpush2.msra.mxu0 %v877
      %949 = vmatprep.subr.mxu0 0.0
      %950 = vmatpush2.msra.mxu0 %v876
      %951 = vmatprep.subr.mxu0 0.0
      %952 = vmatpush2.msra.mxu0 %v875
      %953 = vmatprep.subr.mxu0 0.0
      %954 = vmatpush2.msra.mxu0 %v874
      %955 = vmatprep.subr.mxu0 0.0
      %956 = vmatpush2.msra.mxu0 %v873
      %957 = vmatprep.subr.mxu0 0.0
      %958 = vmatpush2.msra.mxu0 %v872
      %959 = vmatprep.subr.mxu0 0.0
      %960 = vmatpush2.msra.mxu0 %v871
      %961 = vmatprep.subr.mxu0 0.0
      %962 = vmatpush2.msra.mxu0 %v870
      %963 = vmatprep.subr.mxu0 0.0
      %964 = vmatpush2.msra.mxu0 %v869
      %965 = vmatprep.mubr.f32.mxu0 %v575
      %966 = vmatmul.mubr.f32.gmra.mxu0 %v507
      %v967 = vpop.f32.mrf.mxu0
      %v968 = vadd.f32 0.0, %v967
      %v969 = vpop.f32.mrf.mxu0
      %970 = vmatprep.mubr.f32.mxu0 %v577
      %971 = vmatmul.mubr.f32.gmra.mxu0 %v413
      %v972 = vpop.f32.mrf.mxu0
      %v973 = vadd.f32 0.0, %v972
      %v974 = vpop.f32.mrf.mxu0
      %975 = vmatprep.mubr.f32.mxu0 %v580
      %976 = vmatmul.mubr.f32.gmra.mxu0 %v508
      %v977 = vpop.f32.mrf.mxu0
      %v978 = vadd.f32 0.0, %v977
      %v979 = vpop.f32.mrf.mxu0
      %980 = vmatprep.mubr.f32.mxu0 %v582
      %981 = vmatmul.mubr.f32.gmra.mxu0 %v416
      %v982 = vpop.f32.mrf.mxu0
      %v983 = vadd.f32 0.0, %v982
      %v984 = vpop.f32.mrf.mxu0
      %985 = vmatprep.mubr.f32.mxu0 %v585
      %986 = vmatmul.mubr.f32.gmra.mxu0 %v509
      %v987 = vpop.f32.mrf.mxu0
      %v988 = vadd.f32 0.0, %v987
      %v989 = vpop.f32.mrf.mxu0
      %990 = vmatprep.mubr.f32.mxu0 %v587
      %991 = vmatmul.mubr.f32.gmra.mxu0 %v419
      %v992 = vpop.f32.mrf.mxu0
      %v993 = vadd.f32 0.0, %v992
      %v994 = vpop.f32.mrf.mxu0
      %995 = vmatprep.mubr.f32.mxu0 %v590
      %996 = vmatmul.mubr.f32.gmra.mxu0 %v510
      %v997 = vpop.f32.mrf.mxu0
      %v998 = vadd.f32 0.0, %v997
      %v999 = vpop.f32.mrf.mxu0
      %1000 = vmatprep.mubr.f32.mxu0 %v592
      %1001 = vmatmul.mubr.f32.gmra.mxu0 %v422
      %v1002 = vpop.f32.mrf.mxu0
      %v1003 = vadd.f32 0.0, %v1002
      %v1004 = vpop.f32.mrf.mxu0
      %1005 = vmatprep.mubr.f32.mxu0 %v595
      %1006 = vmatmul.mubr.f32.gmra.mxu0 %v511
      %v1007 = vpop.f32.mrf.mxu0
      %v1008 = vadd.f32 0.0, %v1007
      %v1009 = vpop.f32.mrf.mxu0
      %1010 = vmatprep.mubr.f32.mxu0 %v597
      %1011 = vmatmul.mubr.f32.gmra.mxu0 %v425
      %v1012 = vpop.f32.mrf.mxu0
      %v1013 = vadd.f32 0.0, %v1012
      %v1014 = vpop.f32.mrf.mxu0
      %1015 = vmatprep.mubr.f32.mxu0 %v600
      %1016 = vmatmul.mubr.f32.gmra.mxu0 %v512
      %v1017 = vpop.f32.mrf.mxu0
      %v1018 = vadd.f32 0.0, %v1017
      %v1019 = vpop.f32.mrf.mxu0
      %1020 = vmatprep.mubr.f32.mxu0 %v602
      %1021 = vmatmul.mubr.f32.gmra.mxu0 %v428
      %v1022 = vpop.f32.mrf.mxu0
      %v1023 = vadd.f32 0.0, %v1022
      %v1024 = vpop.f32.mrf.mxu0
      %1025 = vmatprep.mubr.f32.mxu0 %v605
      %1026 = vmatmul.mubr.f32.gmra.mxu0 %v513
      %v1027 = vpop.f32.mrf.mxu0
      %v1028 = vadd.f32 0.0, %v1027
      %v1029 = vpop.f32.mrf.mxu0
      %1030 = vmatprep.mubr.f32.mxu0 %v607
      %1031 = vmatmul.mubr.f32.gmra.mxu0 %v431
      %v1032 = vpop.f32.mrf.mxu0
      %v1033 = vadd.f32 0.0, %v1032
      %v1034 = vpop.f32.mrf.mxu0
      %1035 = vmatprep.mubr.f32.mxu0 %v610
      %1036 = vmatmul.mubr.f32.gmra.mxu0 %v514
      %v1037 = vpop.f32.mrf.mxu0
      %v1038 = vadd.f32 0.0, %v1037
      %v1039 = vpop.f32.mrf.mxu0
      %1040 = vmatprep.mubr.f32.mxu0 %v612
      %1041 = vmatmul.mubr.f32.gmra.mxu0 %v434
      %v1042 = vpop.f32.mrf.mxu0
      %v1043 = vadd.f32 0.0, %v1042
      %v1044 = vpop.f32.mrf.mxu0
      %1045 = vmatprep.mubr.f32.mxu0 %v615
      %1046 = vmatmul.mubr.f32.gmra.mxu0 %v515
      %v1047 = vpop.f32.mrf.mxu0
      %v1048 = vadd.f32 0.0, %v1047
      %v1049 = vpop.f32.mrf.mxu0
      %1050 = vmatprep.mubr.f32.mxu0 %v617
      %1051 = vmatmul.mubr.f32.gmra.mxu0 %v437
      %v1052 = vpop.f32.mrf.mxu0
      %v1053 = vadd.f32 0.0, %v1052
      %v1054 = vpop.f32.mrf.mxu0
      %1055 = vmatprep.mubr.f32.mxu0 %v620
      %1056 = vmatmul.mubr.f32.gmra.mxu0 %v516
      %v1057 = vpop.f32.mrf.mxu0
      %v1058 = vadd.f32 0.0, %v1057
      %v1059 = vpop.f32.mrf.mxu0
      %1060 = vmatprep.mubr.f32.mxu0 %v622
      %1061 = vmatmul.mubr.f32.gmra.mxu0 %v440
      %v1062 = vpop.f32.mrf.mxu0
      %v1063 = vadd.f32 0.0, %v1062
      %v1064 = vpop.f32.mrf.mxu0
      %1065 = vmatprep.mubr.f32.mxu0 %v625
      %1066 = vmatmul.mubr.f32.gmra.mxu0 %v517
      %v1067 = vpop.f32.mrf.mxu0
      %v1068 = vadd.f32 0.0, %v1067
      %v1069 = vpop.f32.mrf.mxu0
      %1070 = vmatprep.mubr.f32.mxu0 %v627
      %1071 = vmatmul.mubr.f32.gmra.mxu0 %v443
      %v1072 = vpop.f32.mrf.mxu0
      %v1073 = vadd.f32 0.0, %v1072
      %v1074 = vpop.f32.mrf.mxu0
      %1075 = vmatprep.mubr.f32.mxu0 %v630
      %1076 = vmatmul.mubr.f32.gmra.mxu0 %v518
      %v1077 = vpop.f32.mrf.mxu0
      %v1078 = vadd.f32 0.0, %v1077
      %v1079 = vpop.f32.mrf.mxu0
      %1080 = vmatprep.mubr.f32.mxu0 %v632
      %1081 = vmatmul.mubr.f32.gmra.mxu0 %v446
      %v1082 = vpop.f32.mrf.mxu0
      %v1083 = vadd.f32 0.0, %v1082
      %v1084 = vpop.f32.mrf.mxu0
      %1085 = vmatprep.mubr.f32.mxu0 %v635
      %1086 = vmatmul.mubr.f32.gmra.mxu0 %v519
      %v1087 = vpop.f32.mrf.mxu0
      %v1088 = vadd.f32 0.0, %v1087
      %v1089 = vpop.f32.mrf.mxu0
      %1090 = vmatprep.mubr.f32.mxu0 %v637
      %1091 = vmatmul.mubr.f32.gmra.mxu0 %v449
      %v1092 = vpop.f32.mrf.mxu0
      %v1093 = vadd.f32 0.0, %v1092
      %v1094 = vpop.f32.mrf.mxu0
      %1095 = vmatprep.mubr.f32.mxu0 %v640
      %1096 = vmatmul.mubr.f32.gmra.mxu0 %v520
      %v1097 = vpop.f32.mrf.mxu0
      %v1098 = vadd.f32 0.0, %v1097
      %v1099 = vpop.f32.mrf.mxu0
      %1100 = vmatprep.mubr.f32.mxu0 %v642
      %1101 = vmatmul.mubr.f32.gmra.mxu0 %v452
      %v1102 = vpop.f32.mrf.mxu0
      %v1103 = vadd.f32 0.0, %v1102
      %v1104 = vpop.f32.mrf.mxu0
      %1105 = vmatprep.mubr.f32.mxu0 %v645
      %1106 = vmatmul.mubr.f32.gmra.mxu0 %v521
      %v1107 = vpop.f32.mrf.mxu0
      %v1108 = vadd.f32 0.0, %v1107
      %v1109 = vpop.f32.mrf.mxu0
      %1110 = vmatprep.mubr.f32.mxu0 %v647
      %1111 = vmatmul.mubr.f32.gmra.mxu0 %v455
      %v1112 = vpop.f32.mrf.mxu0
      %v1113 = vadd.f32 0.0, %v1112
      %v1114 = vpop.f32.mrf.mxu0
      %1115 = vmatprep.mubr.f32.mxu0 %v840
      %1116 = vmatmul.mubr.f32.gmra.mxu0 %v522
      %v1117 = vpop.f32.mrf.mxu0
      %v1118 = vadd.f32 0.0, %v1117
      %v1119 = vpop.f32.mrf.mxu0
      %1120 = vmatprep.mubr.f32.mxu0 %v842
      %1121 = vmatmul.mubr.f32.gmra.mxu0 %v458
      %v1122 = vpop.f32.mrf.mxu0
      %v1123 = vadd.f32 0.0, %v1122
      %v1124 = vpop.f32.mrf.mxu0
      %1125 = vdwg.mxu0
      %1126 = vmatprep.subr.mxu0 0.0
      %1127 = vmatpush1.msra.mxu0 %v900
      %1128 = vmatprep.subr.mxu0 0.0
      %1129 = vmatpush1.msra.mxu0 %v899
      %1130 = vmatprep.subr.mxu0 0.0
      %1131 = vmatpush1.msra.mxu0 %v898
      %1132 = vmatprep.subr.mxu0 0.0
      %1133 = vmatpush1.msra.mxu0 %v897
      %1134 = vmatprep.subr.mxu0 0.0
      %1135 = vmatpush1.msra.mxu0 %v896
      %1136 = vmatprep.subr.mxu0 0.0
      %1137 = vmatpush1.msra.mxu0 %v895
      %1138 = vmatprep.subr.mxu0 0.0
      %1139 = vmatpush1.msra.mxu0 %v894
      %1140 = vmatprep.subr.mxu0 0.0
      %1141 = vmatpush1.msra.mxu0 %v893
      %1142 = vmatprep.subr.mxu0 0.0
      %1143 = vmatpush1.msra.mxu0 %v892
      %1144 = vmatprep.subr.mxu0 0.0
      %1145 = vmatpush1.msra.mxu0 %v891
      %1146 = vmatprep.subr.mxu0 0.0
      %1147 = vmatpush1.msra.mxu0 %v890
      %1148 = vmatprep.subr.mxu0 0.0
      %1149 = vmatpush1.msra.mxu0 %v889
      %1150 = vmatprep.subr.mxu0 0.0
      %1151 = vmatpush1.msra.mxu0 %v888
      %1152 = vmatprep.subr.mxu0 0.0
      %1153 = vmatpush1.msra.mxu0 %v887
      %1154 = vmatprep.subr.mxu0 0.0
      %1155 = vmatpush1.msra.mxu0 %v886
      %1156 = vmatprep.subr.mxu0 0.0
      %1157 = vmatpush1.msra.mxu0 %v885
      %1158 = vmatprep.subr.mxu0 0.0
      %1159 = vmatpush2.msra.mxu0 0.0
      %1160 = vmatprep.subr.mxu0 0.0
      %1161 = vmatpush2.msra.mxu0 0.0
      %1162 = vmatprep.subr.mxu0 0.0
      %1163 = vmatpush2.msra.mxu0 0.0
      %1164 = vmatprep.subr.mxu0 0.0
      %1165 = vmatpush2.msra.mxu0 0.0
      %1166 = vmatprep.subr.mxu0 0.0
      %1167 = vmatpush2.msra.mxu0 0.0
      %1168 = vmatprep.subr.mxu0 0.0
      %1169 = vmatpush2.msra.mxu0 0.0
      %1170 = vmatprep.subr.mxu0 0.0
      %1171 = vmatpush2.msra.mxu0 0.0
      %1172 = vmatprep.subr.mxu0 0.0
      %1173 = vmatpush2.msra.mxu0 0.0
      %1174 = vmatprep.subr.mxu0 0.0
      %1175 = vmatpush2.msra.mxu0 0.0
      %1176 = vmatprep.subr.mxu0 0.0
      %1177 = vmatpush2.msra.mxu0 0.0
      %1178 = vmatprep.subr.mxu0 0.0
      %1179 = vmatpush2.msra.mxu0 0.0
      %1180 = vmatprep.subr.mxu0 0.0
      %1181 = vmatpush2.msra.mxu0 0.0
      %1182 = vmatprep.subr.mxu0 0.0
      %1183 = vmatpush2.msra.mxu0 0.0
      %1184 = vmatprep.subr.mxu0 0.0
      %1185 = vmatpush2.msra.mxu0 0.0
      %1186 = vmatprep.subr.mxu0 0.0
      %1187 = vmatpush2.msra.mxu0 0.0
      %1188 = vmatprep.subr.mxu0 0.0
      %1189 = vmatpush2.msra.mxu0 0.0
      %1190 = vmatprep.mubr.f32.mxu0 0.0
      %1191 = vmatmul.mubr.f32.gmra.mxu0 %v684
      %v1192 = vpop.f32.mrf.mxu0
      %v1193 = vadd.f32 %v968, %v1192
      %v1194 = vpop.f32.mrf.mxu0
      %1195 = vmatprep.mubr.f32.mxu0 0.0
      %1196 = vmatmul.mubr.f32.gmra.mxu0 %v686
      %v1197 = vpop.f32.mrf.mxu0
      %v1198 = vadd.f32 %v973, %v1197
      %v1199 = vpop.f32.mrf.mxu0
      %1200 = vmatprep.mubr.f32.mxu0 0.0
      %1201 = vmatmul.mubr.f32.gmra.mxu0 %v689
      %v1202 = vpop.f32.mrf.mxu0
      %v1203 = vadd.f32 %v978, %v1202
      %v1204 = vpop.f32.mrf.mxu0
      %1205 = vmatprep.mubr.f32.mxu0 0.0
      %1206 = vmatmul.mubr.f32.gmra.mxu0 %v691
      %v1207 = vpop.f32.mrf.mxu0
      %v1208 = vadd.f32 %v983, %v1207
      %v1209 = vpop.f32.mrf.mxu0
      %1210 = vmatprep.mubr.f32.mxu0 0.0
      %1211 = vmatmul.mubr.f32.gmra.mxu0 %v694
      %v1212 = vpop.f32.mrf.mxu0
      %v1213 = vadd.f32 %v988, %v1212
      %v1214 = vpop.f32.mrf.mxu0
      %1215 = vmatprep.mubr.f32.mxu0 0.0
      %1216 = vmatmul.mubr.f32.gmra.mxu0 %v696
      %v1217 = vpop.f32.mrf.mxu0
      %v1218 = vadd.f32 %v993, %v1217
      %v1219 = vpop.f32.mrf.mxu0
      %1220 = vmatprep.mubr.f32.mxu0 0.0
      %1221 = vmatmul.mubr.f32.gmra.mxu0 %v699
      %v1222 = vpop.f32.mrf.mxu0
      %v1223 = vadd.f32 %v998, %v1222
      %v1224 = vpop.f32.mrf.mxu0
      %1225 = vmatprep.mubr.f32.mxu0 0.0
      %1226 = vmatmul.mubr.f32.gmra.mxu0 %v701
      %v1227 = vpop.f32.mrf.mxu0
      %v1228 = vadd.f32 %v1003, %v1227
      %v1229 = vpop.f32.mrf.mxu0
      %1230 = vmatprep.mubr.f32.mxu0 0.0
      %1231 = vmatmul.mubr.f32.gmra.mxu0 %v704
      %v1232 = vpop.f32.mrf.mxu0
      %v1233 = vadd.f32 %v1008, %v1232
      %v1234 = vpop.f32.mrf.mxu0
      %1235 = vmatprep.mubr.f32.mxu0 0.0
      %1236 = vmatmul.mubr.f32.gmra.mxu0 %v706
      %v1237 = vpop.f32.mrf.mxu0
      %v1238 = vadd.f32 %v1013, %v1237
      %v1239 = vpop.f32.mrf.mxu0
      %1240 = vmatprep.mubr.f32.mxu0 0.0
      %1241 = vmatmul.mubr.f32.gmra.mxu0 %v709
      %v1242 = vpop.f32.mrf.mxu0
      %v1243 = vadd.f32 %v1018, %v1242
      %v1244 = vpop.f32.mrf.mxu0
      %1245 = vmatprep.mubr.f32.mxu0 0.0
      %1246 = vmatmul.mubr.f32.gmra.mxu0 %v711
      %v1247 = vpop.f32.mrf.mxu0
      %v1248 = vadd.f32 %v1023, %v1247
      %v1249 = vpop.f32.mrf.mxu0
      %1250 = vmatprep.mubr.f32.mxu0 0.0
      %1251 = vmatmul.mubr.f32.gmra.mxu0 %v714
      %v1252 = vpop.f32.mrf.mxu0
      %v1253 = vadd.f32 %v1028, %v1252
      %v1254 = vpop.f32.mrf.mxu0
      %1255 = vmatprep.mubr.f32.mxu0 0.0
      %1256 = vmatmul.mubr.f32.gmra.mxu0 %v716
      %v1257 = vpop.f32.mrf.mxu0
      %v1258 = vadd.f32 %v1033, %v1257
      %v1259 = vpop.f32.mrf.mxu0
      %1260 = vmatprep.mubr.f32.mxu0 0.0
      %1261 = vmatmul.mubr.f32.gmra.mxu0 %v719
      %v1262 = vpop.f32.mrf.mxu0
      %v1263 = vadd.f32 %v1038, %v1262
      %v1264 = vpop.f32.mrf.mxu0
      %1265 = vmatprep.mubr.f32.mxu0 0.0
      %1266 = vmatmul.mubr.f32.gmra.mxu0 %v721
      %v1267 = vpop.f32.mrf.mxu0
      %v1268 = vadd.f32 %v1043, %v1267
      %v1269 = vpop.f32.mrf.mxu0
      %1270 = vmatprep.mubr.f32.mxu0 0.0
      %1271 = vmatmul.mubr.f32.gmra.mxu0 %v724
      %v1272 = vpop.f32.mrf.mxu0
      %v1273 = vadd.f32 %v1048, %v1272
      %v1274 = vpop.f32.mrf.mxu0
      %1275 = vmatprep.mubr.f32.mxu0 0.0
      %1276 = vmatmul.mubr.f32.gmra.mxu0 %v726
      %v1277 = vpop.f32.mrf.mxu0
      %v1278 = vadd.f32 %v1053, %v1277
      %v1279 = vpop.f32.mrf.mxu0
      %1280 = vmatprep.mubr.f32.mxu0 0.0
      %1281 = vmatmul.mubr.f32.gmra.mxu0 %v729
      %v1282 = vpop.f32.mrf.mxu0
      %v1283 = vadd.f32 %v1058, %v1282
      %v1284 = vpop.f32.mrf.mxu0
      %1285 = vmatprep.mubr.f32.mxu0 0.0
      %1286 = vmatmul.mubr.f32.gmra.mxu0 %v731
      %v1287 = vpop.f32.mrf.mxu0
      %v1288 = vadd.f32 %v1063, %v1287
      %v1289 = vpop.f32.mrf.mxu0
      %1290 = vmatprep.mubr.f32.mxu0 0.0
      %1291 = vmatmul.mubr.f32.gmra.mxu0 %v734
      %v1292 = vpop.f32.mrf.mxu0
      %v1293 = vadd.f32 %v1068, %v1292
      %v1294 = vpop.f32.mrf.mxu0
      %1295 = vmatprep.mubr.f32.mxu0 0.0
      %1296 = vmatmul.mubr.f32.gmra.mxu0 %v736
      %v1297 = vpop.f32.mrf.mxu0
      %v1298 = vadd.f32 %v1073, %v1297
      %v1299 = vpop.f32.mrf.mxu0
      %1300 = vmatprep.mubr.f32.mxu0 0.0
      %1301 = vmatmul.mubr.f32.gmra.mxu0 %v739
      %v1302 = vpop.f32.mrf.mxu0
      %v1303 = vadd.f32 %v1078, %v1302
      %v1304 = vpop.f32.mrf.mxu0
      %1305 = vmatprep.mubr.f32.mxu0 0.0
      %1306 = vmatmul.mubr.f32.gmra.mxu0 %v741
      %v1307 = vpop.f32.mrf.mxu0
      %v1308 = vadd.f32 %v1083, %v1307
      %v1309 = vpop.f32.mrf.mxu0
      %1310 = vmatprep.mubr.f32.mxu0 0.0
      %1311 = vmatmul.mubr.f32.gmra.mxu0 %v744
      %v1312 = vpop.f32.mrf.mxu0
      %v1313 = vadd.f32 %v1088, %v1312
      %v1314 = vpop.f32.mrf.mxu0
      %1315 = vmatprep.mubr.f32.mxu0 0.0
      %1316 = vmatmul.mubr.f32.gmra.mxu0 %v746
      %v1317 = vpop.f32.mrf.mxu0
      %v1318 = vadd.f32 %v1093, %v1317
      %v1319 = vpop.f32.mrf.mxu0
      %1320 = vmatprep.mubr.f32.mxu0 0.0
      %1321 = vmatmul.mubr.f32.gmra.mxu0 %v749
      %v1322 = vpop.f32.mrf.mxu0
      %v1323 = vadd.f32 %v1098, %v1322
      %v1324 = vpop.f32.mrf.mxu0
      %1325 = vmatprep.mubr.f32.mxu0 0.0
      %1326 = vmatmul.mubr.f32.gmra.mxu0 %v751
      %v1327 = vpop.f32.mrf.mxu0
      %v1328 = vadd.f32 %v1103, %v1327
      %v1329 = vpop.f32.mrf.mxu0
      %1330 = vmatprep.mubr.f32.mxu0 0.0
      %1331 = vmatmul.mubr.f32.gmra.mxu0 %v754
      %v1332 = vpop.f32.mrf.mxu0
      %v1333 = vadd.f32 %v1108, %v1332
      %v1334 = vpop.f32.mrf.mxu0
      %1335 = vmatprep.mubr.f32.mxu0 0.0
      %1336 = vmatmul.mubr.f32.gmra.mxu0 %v756
      %v1337 = vpop.f32.mrf.mxu0
      %v1338 = vadd.f32 %v1113, %v1337
      %v1339 = vpop.f32.mrf.mxu0
      %1340 = vmatprep.mubr.f32.mxu0 0.0
      %1341 = vmatmul.mubr.f32.gmra.mxu0 %v847
      %v1342 = vpop.f32.mrf.mxu0
      %v1343 = vadd.f32 %v1118, %v1342
      %v1344 = vpop.f32.mrf.mxu0
      %1345 = vmatprep.mubr.f32.mxu0 0.0
      %1346 = vmatmul.mubr.f32.gmra.mxu0 %v849
      %v1347 = vpop.f32.mrf.mxu0
      %v1348 = vadd.f32 %v1123, %v1347
      %v1349 = vpop.f32.mrf.mxu0
      %1350 = vdwg.mxu0
      %1351 = vmatprep.subr.mxu0 0.0
      %1352 = vmatpush1.msra.mxu0 %v803
      %1353 = vmatprep.subr.mxu0 0.0
      %1354 = vmatpush1.msra.mxu0 %v802
      %1355 = vmatprep.subr.mxu0 0.0
      %1356 = vmatpush1.msra.mxu0 %v801
      %1357 = vmatprep.subr.mxu0 0.0
      %1358 = vmatpush1.msra.mxu0 %v800
      %1359 = vmatprep.subr.mxu0 0.0
      %1360 = vmatpush1.msra.mxu0 %v799
      %1361 = vmatprep.subr.mxu0 0.0
      %1362 = vmatpush1.msra.mxu0 %v798
      %1363 = vmatprep.subr.mxu0 0.0
      %1364 = vmatpush1.msra.mxu0 %v797
      %1365 = vmatprep.subr.mxu0 0.0
      %1366 = vmatpush1.msra.mxu0 %v796
      %1367 = vmatprep.subr.mxu0 0.0
      %1368 = vmatpush1.msra.mxu0 %v795
      %1369 = vmatprep.subr.mxu0 0.0
      %1370 = vmatpush1.msra.mxu0 %v794
      %1371 = vmatprep.subr.mxu0 0.0
      %1372 = vmatpush1.msra.mxu0 %v793
      %1373 = vmatprep.subr.mxu0 0.0
      %1374 = vmatpush1.msra.mxu0 %v792
      %1375 = vmatprep.subr.mxu0 0.0
      %1376 = vmatpush1.msra.mxu0 %v791
      %1377 = vmatprep.subr.mxu0 0.0
      %1378 = vmatpush1.msra.mxu0 %v790
      %1379 = vmatprep.subr.mxu0 0.0
      %1380 = vmatpush1.msra.mxu0 %v789
      %1381 = vmatprep.subr.mxu0 0.0
      %1382 = vmatpush1.msra.mxu0 %v788
      %1383 = vmatprep.subr.mxu0 0.0
      %1384 = vmatpush2.msra.mxu0 %v819
      %1385 = vmatprep.subr.mxu0 0.0
      %1386 = vmatpush2.msra.mxu0 %v818
      %1387 = vmatprep.subr.mxu0 0.0
      %1388 = vmatpush2.msra.mxu0 %v817
      %1389 = vmatprep.subr.mxu0 0.0
      %1390 = vmatpush2.msra.mxu0 %v816
      %1391 = vmatprep.subr.mxu0 0.0
      %1392 = vmatpush2.msra.mxu0 %v815
      %1393 = vmatprep.subr.mxu0 0.0
      %1394 = vmatpush2.msra.mxu0 %v814
      %1395 = vmatprep.subr.mxu0 0.0
      %1396 = vmatpush2.msra.mxu0 %v813
      %1397 = vmatprep.subr.mxu0 0.0
      %1398 = vmatpush2.msra.mxu0 %v812
      %1399 = vmatprep.subr.mxu0 0.0
      %1400 = vmatpush2.msra.mxu0 %v811
      %1401 = vmatprep.subr.mxu0 0.0
      %1402 = vmatpush2.msra.mxu0 %v810
      %1403 = vmatprep.subr.mxu0 0.0
      %1404 = vmatpush2.msra.mxu0 %v809
      %1405 = vmatprep.subr.mxu0 0.0
      %1406 = vmatpush2.msra.mxu0 %v808
      %1407 = vmatprep.subr.mxu0 0.0
      %1408 = vmatpush2.msra.mxu0 %v807
      %1409 = vmatprep.subr.mxu0 0.0
      %1410 = vmatpush2.msra.mxu0 %v806
      %1411 = vmatprep.subr.mxu0 0.0
      %1412 = vmatpush2.msra.mxu0 %v805
      %1413 = vmatprep.subr.mxu0 0.0
      %1414 = vmatpush2.msra.mxu0 %v804
      %1415 = vmatprep.mubr.f32.mxu0 %v572
      %1416 = vmatmul.mubr.f32.gmra.mxu0 0.0
      %v1417 = vpop.f32.mrf.mxu0
      %v1418 = vadd.f32 %v1193, %v1417
      %v1419 = vpop.f32.mrf.mxu0
      %1420 = vmatprep.mubr.f32.mxu0 %v572
      %1421 = vmatmul.mubr.f32.gmra.mxu0 0.0
      %v1422 = vpop.f32.mrf.mxu0
      %v1423 = vadd.f32 %v1198, %v1422
      %v1424 = vpop.f32.mrf.mxu0
      %1425 = vmatprep.mubr.f32.mxu0 %v575
      %1426 = vmatmul.mubr.f32.gmra.mxu0 %v507
      %v1427 = vpop.f32.mrf.mxu0
      %v1428 = vadd.f32 %v1203, %v1427
      %v1429 = vpop.f32.mrf.mxu0
      %1430 = vmatprep.mubr.f32.mxu0 %v577
      %1431 = vmatmul.mubr.f32.gmra.mxu0 %v413
      %v1432 = vpop.f32.mrf.mxu0
      %v1433 = vadd.f32 %v1208, %v1432
      %v1434 = vpop.f32.mrf.mxu0
      %1435 = vmatprep.mubr.f32.mxu0 %v580
      %1436 = vmatmul.mubr.f32.gmra.mxu0 %v508
      %v1437 = vpop.f32.mrf.mxu0
      %v1438 = vadd.f32 %v1213, %v1437
      %v1439 = vpop.f32.mrf.mxu0
      %1440 = vmatprep.mubr.f32.mxu0 %v582
      %1441 = vmatmul.mubr.f32.gmra.mxu0 %v416
      %v1442 = vpop.f32.mrf.mxu0
      %v1443 = vadd.f32 %v1218, %v1442
      %v1444 = vpop.f32.mrf.mxu0
      %1445 = vmatprep.mubr.f32.mxu0 %v585
      %1446 = vmatmul.mubr.f32.gmra.mxu0 %v509
      %v1447 = vpop.f32.mrf.mxu0
      %v1448 = vadd.f32 %v1223, %v1447
      %v1449 = vpop.f32.mrf.mxu0
      %1450 = vmatprep.mubr.f32.mxu0 %v587
      %1451 = vmatmul.mubr.f32.gmra.mxu0 %v419
      %v1452 = vpop.f32.mrf.mxu0
      %v1453 = vadd.f32 %v1228, %v1452
      %v1454 = vpop.f32.mrf.mxu0
      %1455 = vmatprep.mubr.f32.mxu0 %v590
      %1456 = vmatmul.mubr.f32.gmra.mxu0 %v510
      %v1457 = vpop.f32.mrf.mxu0
      %v1458 = vadd.f32 %v1233, %v1457
      %v1459 = vpop.f32.mrf.mxu0
      %1460 = vmatprep.mubr.f32.mxu0 %v592
      %1461 = vmatmul.mubr.f32.gmra.mxu0 %v422
      %v1462 = vpop.f32.mrf.mxu0
      %v1463 = vadd.f32 %v1238, %v1462
      %v1464 = vpop.f32.mrf.mxu0
      %1465 = vmatprep.mubr.f32.mxu0 %v595
      %1466 = vmatmul.mubr.f32.gmra.mxu0 %v511
      %v1467 = vpop.f32.mrf.mxu0
      %v1468 = vadd.f32 %v1243, %v1467
      %v1469 = vpop.f32.mrf.mxu0
      %1470 = vmatprep.mubr.f32.mxu0 %v597
      %1471 = vmatmul.mubr.f32.gmra.mxu0 %v425
      %v1472 = vpop.f32.mrf.mxu0
      %v1473 = vadd.f32 %v1248, %v1472
      %v1474 = vpop.f32.mrf.mxu0
      %1475 = vmatprep.mubr.f32.mxu0 %v600
      %1476 = vmatmul.mubr.f32.gmra.mxu0 %v512
      %v1477 = vpop.f32.mrf.mxu0
      %v1478 = vadd.f32 %v1253, %v1477
      %v1479 = vpop.f32.mrf.mxu0
      %1480 = vmatprep.mubr.f32.mxu0 %v602
      %1481 = vmatmul.mubr.f32.gmra.mxu0 %v428
      %v1482 = vpop.f32.mrf.mxu0
      %v1483 = vadd.f32 %v1258, %v1482
      %v1484 = vpop.f32.mrf.mxu0
      %1485 = vmatprep.mubr.f32.mxu0 %v605
      %1486 = vmatmul.mubr.f32.gmra.mxu0 %v513
      %v1487 = vpop.f32.mrf.mxu0
      %v1488 = vadd.f32 %v1263, %v1487
      %v1489 = vpop.f32.mrf.mxu0
      %1490 = vmatprep.mubr.f32.mxu0 %v607
      %1491 = vmatmul.mubr.f32.gmra.mxu0 %v431
      %v1492 = vpop.f32.mrf.mxu0
      %v1493 = vadd.f32 %v1268, %v1492
      %v1494 = vpop.f32.mrf.mxu0
      %1495 = vmatprep.mubr.f32.mxu0 %v610
      %1496 = vmatmul.mubr.f32.gmra.mxu0 %v514
      %v1497 = vpop.f32.mrf.mxu0
      %v1498 = vadd.f32 %v1273, %v1497
      %v1499 = vpop.f32.mrf.mxu0
      %1500 = vmatprep.mubr.f32.mxu0 %v612
      %1501 = vmatmul.mubr.f32.gmra.mxu0 %v434
      %v1502 = vpop.f32.mrf.mxu0
      %v1503 = vadd.f32 %v1278, %v1502
      %v1504 = vpop.f32.mrf.mxu0
      %1505 = vmatprep.mubr.f32.mxu0 %v615
      %1506 = vmatmul.mubr.f32.gmra.mxu0 %v515
      %v1507 = vpop.f32.mrf.mxu0
      %v1508 = vadd.f32 %v1283, %v1507
      %v1509 = vpop.f32.mrf.mxu0
      %1510 = vmatprep.mubr.f32.mxu0 %v617
      %1511 = vmatmul.mubr.f32.gmra.mxu0 %v437
      %v1512 = vpop.f32.mrf.mxu0
      %v1513 = vadd.f32 %v1288, %v1512
      %v1514 = vpop.f32.mrf.mxu0
      %1515 = vmatprep.mubr.f32.mxu0 %v620
      %1516 = vmatmul.mubr.f32.gmra.mxu0 %v516
      %v1517 = vpop.f32.mrf.mxu0
      %v1518 = vadd.f32 %v1293, %v1517
      %v1519 = vpop.f32.mrf.mxu0
      %1520 = vmatprep.mubr.f32.mxu0 %v622
      %1521 = vmatmul.mubr.f32.gmra.mxu0 %v440
      %v1522 = vpop.f32.mrf.mxu0
      %v1523 = vadd.f32 %v1298, %v1522
      %v1524 = vpop.f32.mrf.mxu0
      %1525 = vmatprep.mubr.f32.mxu0 %v625
      %1526 = vmatmul.mubr.f32.gmra.mxu0 %v517
      %v1527 = vpop.f32.mrf.mxu0
      %v1528 = vadd.f32 %v1303, %v1527
      %v1529 = vpop.f32.mrf.mxu0
      %1530 = vmatprep.mubr.f32.mxu0 %v627
      %1531 = vmatmul.mubr.f32.gmra.mxu0 %v443
      %v1532 = vpop.f32.mrf.mxu0
      %v1533 = vadd.f32 %v1308, %v1532
      %v1534 = vpop.f32.mrf.mxu0
      %1535 = vmatprep.mubr.f32.mxu0 %v630
      %1536 = vmatmul.mubr.f32.gmra.mxu0 %v518
      %v1537 = vpop.f32.mrf.mxu0
      %v1538 = vadd.f32 %v1313, %v1537
      %v1539 = vpop.f32.mrf.mxu0
      %1540 = vmatprep.mubr.f32.mxu0 %v632
      %1541 = vmatmul.mubr.f32.gmra.mxu0 %v446
      %v1542 = vpop.f32.mrf.mxu0
      %v1543 = vadd.f32 %v1318, %v1542
      %v1544 = vpop.f32.mrf.mxu0
      %1545 = vmatprep.mubr.f32.mxu0 %v635
      %1546 = vmatmul.mubr.f32.gmra.mxu0 %v519
      %v1547 = vpop.f32.mrf.mxu0
      %v1548 = vadd.f32 %v1323, %v1547
      %v1549 = vpop.f32.mrf.mxu0
      %1550 = vmatprep.mubr.f32.mxu0 %v637
      %1551 = vmatmul.mubr.f32.gmra.mxu0 %v449
      %v1552 = vpop.f32.mrf.mxu0
      %v1553 = vadd.f32 %v1328, %v1552
      %v1554 = vpop.f32.mrf.mxu0
      %1555 = vmatprep.mubr.f32.mxu0 %v640
      %1556 = vmatmul.mubr.f32.gmra.mxu0 %v520
      %v1557 = vpop.f32.mrf.mxu0
      %v1558 = vadd.f32 %v1333, %v1557
      %v1559 = vpop.f32.mrf.mxu0
      %1560 = vmatprep.mubr.f32.mxu0 %v642
      %1561 = vmatmul.mubr.f32.gmra.mxu0 %v452
      %v1562 = vpop.f32.mrf.mxu0
      %v1563 = vadd.f32 %v1338, %v1562
      %v1564 = vpop.f32.mrf.mxu0
      %1565 = vmatprep.mubr.f32.mxu0 %v645
      %1566 = vmatmul.mubr.f32.gmra.mxu0 %v521
      %v1567 = vpop.f32.mrf.mxu0
      %v1568 = vadd.f32 %v1343, %v1567
      %v1569 = vpop.f32.mrf.mxu0
      %1570 = vmatprep.mubr.f32.mxu0 %v647
      %1571 = vmatmul.mubr.f32.gmra.mxu0 %v455
      %v1572 = vpop.f32.mrf.mxu0
      %v1573 = vadd.f32 %v1348, %v1572
      %v1574 = vpop.f32.mrf.mxu0
      %1575 = vdwg.mxu0
      %1576 = vmatprep.subr.mxu0 0.0
      %1577 = vmatpush1.msra.mxu0 %v835
      %1578 = vmatprep.subr.mxu0 0.0
      %1579 = vmatpush1.msra.mxu0 %v834
      %1580 = vmatprep.subr.mxu0 0.0
      %1581 = vmatpush1.msra.mxu0 %v833
      %1582 = vmatprep.subr.mxu0 0.0
      %1583 = vmatpush1.msra.mxu0 %v832
      %1584 = vmatprep.subr.mxu0 0.0
      %1585 = vmatpush1.msra.mxu0 %v831
      %1586 = vmatprep.subr.mxu0 0.0
      %1587 = vmatpush1.msra.mxu0 %v830
      %1588 = vmatprep.subr.mxu0 0.0
      %1589 = vmatpush1.msra.mxu0 %v829
      %1590 = vmatprep.subr.mxu0 0.0
      %1591 = vmatpush1.msra.mxu0 %v828
      %1592 = vmatprep.subr.mxu0 0.0
      %1593 = vmatpush1.msra.mxu0 %v827
      %1594 = vmatprep.subr.mxu0 0.0
      %1595 = vmatpush1.msra.mxu0 %v826
      %1596 = vmatprep.subr.mxu0 0.0
      %1597 = vmatpush1.msra.mxu0 %v825
      %1598 = vmatprep.subr.mxu0 0.0
      %1599 = vmatpush1.msra.mxu0 %v824
      %1600 = vmatprep.subr.mxu0 0.0
      %1601 = vmatpush1.msra.mxu0 %v823
      %1602 = vmatprep.subr.mxu0 0.0
      %1603 = vmatpush1.msra.mxu0 %v822
      %1604 = vmatprep.subr.mxu0 0.0
      %1605 = vmatpush1.msra.mxu0 %v821
      %1606 = vmatprep.subr.mxu0 0.0
      %1607 = vmatpush1.msra.mxu0 %v820
      %1608 = vmatprep.subr.mxu0 0.0
      %1609 = vmatpush2.msra.mxu0 0.0
      %1610 = vmatprep.subr.mxu0 0.0
      %1611 = vmatpush2.msra.mxu0 0.0
      %1612 = vmatprep.subr.mxu0 0.0
      %1613 = vmatpush2.msra.mxu0 0.0
      %1614 = vmatprep.subr.mxu0 0.0
      %1615 = vmatpush2.msra.mxu0 0.0
      %1616 = vmatprep.subr.mxu0 0.0
      %1617 = vmatpush2.msra.mxu0 0.0
      %1618 = vmatprep.subr.mxu0 0.0
      %1619 = vmatpush2.msra.mxu0 0.0
      %1620 = vmatprep.subr.mxu0 0.0
      %1621 = vmatpush2.msra.mxu0 0.0
      %1622 = vmatprep.subr.mxu0 0.0
      %1623 = vmatpush2.msra.mxu0 0.0
      %1624 = vmatprep.subr.mxu0 0.0
      %1625 = vmatpush2.msra.mxu0 0.0
      %1626 = vmatprep.subr.mxu0 0.0
      %1627 = vmatpush2.msra.mxu0 0.0
      %1628 = vmatprep.subr.mxu0 0.0
      %1629 = vmatpush2.msra.mxu0 0.0
      %1630 = vmatprep.subr.mxu0 0.0
      %1631 = vmatpush2.msra.mxu0 0.0
      %1632 = vmatprep.subr.mxu0 0.0
      %1633 = vmatpush2.msra.mxu0 0.0
      %1634 = vmatprep.subr.mxu0 0.0
      %1635 = vmatpush2.msra.mxu0 0.0
      %1636 = vmatprep.subr.mxu0 0.0
      %1637 = vmatpush2.msra.mxu0 0.0
      %1638 = vmatprep.subr.mxu0 0.0
      %1639 = vmatpush2.msra.mxu0 0.0
      %1640 = vmatprep.mubr.f32.mxu0 0.0
      %1641 = vmatmul.mubr.f32.gmra.mxu0 %v681
      %v1642 = vpop.f32.mrf.mxu0
      %v1643 = vadd.f32 %v1418, %v1642
      %v1644 = vpop.f32.mrf.mxu0
      %1645 = vmatprep.mubr.f32.mxu0 0.0
      %1646 = vmatmul.mubr.f32.gmra.mxu0 %v681
      %v1647 = vpop.f32.mrf.mxu0
      %v1648 = vadd.f32 %v1423, %v1647
      %v1649 = vpop.f32.mrf.mxu0
      %1650 = vmatprep.mubr.f32.mxu0 0.0
      %1651 = vmatmul.mubr.f32.gmra.mxu0 %v684
      %v1652 = vpop.f32.mrf.mxu0
      %v1653 = vadd.f32 %v1428, %v1652
      %v1654 = vpop.f32.mrf.mxu0
      %1655 = vmatprep.mubr.f32.mxu0 0.0
      %1656 = vmatmul.mubr.f32.gmra.mxu0 %v686
      %v1657 = vpop.f32.mrf.mxu0
      %v1658 = vadd.f32 %v1433, %v1657
      %v1659 = vpop.f32.mrf.mxu0
      %1660 = vmatprep.mubr.f32.mxu0 0.0
      %1661 = vmatmul.mubr.f32.gmra.mxu0 %v689
      %v1662 = vpop.f32.mrf.mxu0
      %v1663 = vadd.f32 %v1438, %v1662
      %v1664 = vpop.f32.mrf.mxu0
      %1665 = vmatprep.mubr.f32.mxu0 0.0
      %1666 = vmatmul.mubr.f32.gmra.mxu0 %v691
      %v1667 = vpop.f32.mrf.mxu0
      %v1668 = vadd.f32 %v1443, %v1667
      %v1669 = vpop.f32.mrf.mxu0
      %1670 = vmatprep.mubr.f32.mxu0 0.0
      %1671 = vmatmul.mubr.f32.gmra.mxu0 %v694
      %v1672 = vpop.f32.mrf.mxu0
      %v1673 = vadd.f32 %v1448, %v1672
      %v1674 = vpop.f32.mrf.mxu0
      %1675 = vmatprep.mubr.f32.mxu0 0.0
      %1676 = vmatmul.mubr.f32.gmra.mxu0 %v696
      %v1677 = vpop.f32.mrf.mxu0
      %v1678 = vadd.f32 %v1453, %v1677
      %v1679 = vpop.f32.mrf.mxu0
      %1680 = vmatprep.mubr.f32.mxu0 0.0
      %1681 = vmatmul.mubr.f32.gmra.mxu0 %v699
      %v1682 = vpop.f32.mrf.mxu0
      %v1683 = vadd.f32 %v1458, %v1682
      %v1684 = vpop.f32.mrf.mxu0
      %1685 = vmatprep.mubr.f32.mxu0 0.0
      %1686 = vmatmul.mubr.f32.gmra.mxu0 %v701
      %v1687 = vpop.f32.mrf.mxu0
      %v1688 = vadd.f32 %v1463, %v1687
      %v1689 = vpop.f32.mrf.mxu0
      %1690 = vmatprep.mubr.f32.mxu0 0.0
      %1691 = vmatmul.mubr.f32.gmra.mxu0 %v704
      %v1692 = vpop.f32.mrf.mxu0
      %v1693 = vadd.f32 %v1468, %v1692
      %v1694 = vpop.f32.mrf.mxu0
      %1695 = vmatprep.mubr.f32.mxu0 0.0
      %1696 = vmatmul.mubr.f32.gmra.mxu0 %v706
      %v1697 = vpop.f32.mrf.mxu0
      %v1698 = vadd.f32 %v1473, %v1697
      %v1699 = vpop.f32.mrf.mxu0
      %1700 = vmatprep.mubr.f32.mxu0 0.0
      %1701 = vmatmul.mubr.f32.gmra.mxu0 %v709
      %v1702 = vpop.f32.mrf.mxu0
      %v1703 = vadd.f32 %v1478, %v1702
      %v1704 = vpop.f32.mrf.mxu0
      %1705 = vmatprep.mubr.f32.mxu0 0.0
      %1706 = vmatmul.mubr.f32.gmra.mxu0 %v711
      %v1707 = vpop.f32.mrf.mxu0
      %v1708 = vadd.f32 %v1483, %v1707
      %v1709 = vpop.f32.mrf.mxu0
      %1710 = vmatprep.mubr.f32.mxu0 0.0
      %1711 = vmatmul.mubr.f32.gmra.mxu0 %v714
      %v1712 = vpop.f32.mrf.mxu0
      %v1713 = vadd.f32 %v1488, %v1712
      %v1714 = vpop.f32.mrf.mxu0
      %1715 = vmatprep.mubr.f32.mxu0 0.0
      %1716 = vmatmul.mubr.f32.gmra.mxu0 %v716
      %v1717 = vpop.f32.mrf.mxu0
      %v1718 = vadd.f32 %v1493, %v1717
      %v1719 = vpop.f32.mrf.mxu0
      %1720 = vmatprep.mubr.f32.mxu0 0.0
      %1721 = vmatmul.mubr.f32.gmra.mxu0 %v719
      %v1722 = vpop.f32.mrf.mxu0
      %v1723 = vadd.f32 %v1498, %v1722
      %v1724 = vpop.f32.mrf.mxu0
      %1725 = vmatprep.mubr.f32.mxu0 0.0
      %1726 = vmatmul.mubr.f32.gmra.mxu0 %v721
      %v1727 = vpop.f32.mrf.mxu0
      %v1728 = vadd.f32 %v1503, %v1727
      %v1729 = vpop.f32.mrf.mxu0
      %1730 = vmatprep.mubr.f32.mxu0 0.0
      %1731 = vmatmul.mubr.f32.gmra.mxu0 %v724
      %v1732 = vpop.f32.mrf.mxu0
      %v1733 = vadd.f32 %v1508, %v1732
      %v1734 = vpop.f32.mrf.mxu0
      %1735 = vmatprep.mubr.f32.mxu0 0.0
      %1736 = vmatmul.mubr.f32.gmra.mxu0 %v726
      %v1737 = vpop.f32.mrf.mxu0
      %v1738 = vadd.f32 %v1513, %v1737
      %v1739 = vpop.f32.mrf.mxu0
      %1740 = vmatprep.mubr.f32.mxu0 0.0
      %1741 = vmatmul.mubr.f32.gmra.mxu0 %v729
      %v1742 = vpop.f32.mrf.mxu0
      %v1743 = vadd.f32 %v1518, %v1742
      %v1744 = vpop.f32.mrf.mxu0
      %1745 = vmatprep.mubr.f32.mxu0 0.0
      %1746 = vmatmul.mubr.f32.gmra.mxu0 %v731
      %v1747 = vpop.f32.mrf.mxu0
      %v1748 = vadd.f32 %v1523, %v1747
      %v1749 = vpop.f32.mrf.mxu0
      %1750 = vmatprep.mubr.f32.mxu0 0.0
      %1751 = vmatmul.mubr.f32.gmra.mxu0 %v734
      %v1752 = vpop.f32.mrf.mxu0
      %v1753 = vadd.f32 %v1528, %v1752
      %v1754 = vpop.f32.mrf.mxu0
      %1755 = vmatprep.mubr.f32.mxu0 0.0
      %1756 = vmatmul.mubr.f32.gmra.mxu0 %v736
      %v1757 = vpop.f32.mrf.mxu0
      %v1758 = vadd.f32 %v1533, %v1757
      %v1759 = vpop.f32.mrf.mxu0
      %1760 = vmatprep.mubr.f32.mxu0 0.0
      %1761 = vmatmul.mubr.f32.gmra.mxu0 %v739
      %v1762 = vpop.f32.mrf.mxu0
      %v1763 = vadd.f32 %v1538, %v1762
      %v1764 = vpop.f32.mrf.mxu0
      %1765 = vmatprep.mubr.f32.mxu0 0.0
      %1766 = vmatmul.mubr.f32.gmra.mxu0 %v741
      %v1767 = vpop.f32.mrf.mxu0
      %v1768 = vadd.f32 %v1543, %v1767
      %v1769 = vpop.f32.mrf.mxu0
      %1770 = vmatprep.mubr.f32.mxu0 0.0
      %1771 = vmatmul.mubr.f32.gmra.mxu0 %v744
      %v1772 = vpop.f32.mrf.mxu0
      %v1773 = vadd.f32 %v1548, %v1772
      %v1774 = vpop.f32.mrf.mxu0
      %1775 = vmatprep.mubr.f32.mxu0 0.0
      %1776 = vmatmul.mubr.f32.gmra.mxu0 %v746
      %v1777 = vpop.f32.mrf.mxu0
      %v1778 = vadd.f32 %v1553, %v1777
      %v1779 = vpop.f32.mrf.mxu0
      %1780 = vmatprep.mubr.f32.mxu0 0.0
      %1781 = vmatmul.mubr.f32.gmra.mxu0 %v749
      %v1782 = vpop.f32.mrf.mxu0
      %v1783 = vadd.f32 %v1558, %v1782
      %v1784 = vpop.f32.mrf.mxu0
      %1785 = vmatprep.mubr.f32.mxu0 0.0
      %1786 = vmatmul.mubr.f32.gmra.mxu0 %v751
      %v1787 = vpop.f32.mrf.mxu0
      %v1788 = vadd.f32 %v1563, %v1787
      %v1789 = vpop.f32.mrf.mxu0
      %1790 = vmatprep.mubr.f32.mxu0 0.0
      %1791 = vmatmul.mubr.f32.gmra.mxu0 %v754
      %v1792 = vpop.f32.mrf.mxu0
      %v1793 = vadd.f32 %v1568, %v1792
      %v1794 = vpop.f32.mrf.mxu0
      %1795 = vmatprep.mubr.f32.mxu0 0.0
      %1796 = vmatmul.mubr.f32.gmra.mxu0 %v756
      %v1797 = vpop.f32.mrf.mxu0
      %v1798 = vadd.f32 %v1573, %v1797
      %v1799 = vpop.f32.mrf.mxu0
      %1800 = vdwg.mxu0
      %s1801 = scalar_lea.vmem %s3, 768
      %v1802 = vld [vmem:[%s1801] sm:$0xff]
      %v1803 = vld [vmem:[%s1801 + $0x8] sm:$0xff]
      %v1804 = vld [vmem:[%s1801 + $0x10] sm:$0xff]
      %v1805 = vld [vmem:[%s1801 + $0x18] sm:$0xff]
      %v1806 = vld [vmem:[%s1801 + $0x20] sm:$0xff]
      %v1807 = vld [vmem:[%s1801 + $0x28] sm:$0xff]
      %v1808 = vld [vmem:[%s1801 + $0x30] sm:$0xff]
      %v1809 = vld [vmem:[%s1801 + $0x38] sm:$0xff]
      %v1810 = vld [vmem:[%s1801 + $0x40] sm:$0xff]
      %v1811 = vld [vmem:[%s1801 + $0x48] sm:$0xff]
      %v1812 = vld [vmem:[%s1801 + $0x50] sm:$0xff]
      %v1813 = vld [vmem:[%s1801 + $0x58] sm:$0xff]
      %v1814 = vld [vmem:[%s1801 + $0x60] sm:$0xff]
      %v1815 = vld [vmem:[%s1801 + $0x68] sm:$0xff]
      %v1816 = vld [vmem:[%s1801 + $0x70] sm:$0xff]
      %v1817 = vld [vmem:[%s1801 + $0x78] sm:$0xff]
      %v1818 = vld [vmem:[%s1801 + $0x80] sm:$0xff]
      %v1819 = vld [vmem:[%s1801 + $0x88] sm:$0xff]
      %v1820 = vld [vmem:[%s1801 + $0x90] sm:$0xff]
      %v1821 = vld [vmem:[%s1801 + $0x98] sm:$0xff]
      %v1822 = vld [vmem:[%s1801 + $0xa0] sm:$0xff]
      %v1823 = vld [vmem:[%s1801 + $0xa8] sm:$0xff]
      %v1824 = vld [vmem:[%s1801 + $0xb0] sm:$0xff]
      %v1825 = vld [vmem:[%s1801 + $0xb8] sm:$0xff]
      %v1826 = vld [vmem:[%s1801 + $0xc0] sm:$0xff]
      %v1827 = vld [vmem:[%s1801 + $0xc8] sm:$0xff]
      %v1828 = vld [vmem:[%s1801 + $0xd0] sm:$0xff]
      %v1829 = vld [vmem:[%s1801 + $0xd8] sm:$0xff]
      %v1830 = vld [vmem:[%s1801 + $0xe0] sm:$0xff]
      %v1831 = vld [vmem:[%s1801 + $0xe8] sm:$0xff]
      %v1832 = vld [vmem:[%s1801 + $0xf0] sm:$0xff]
      %v1833 = vld [vmem:[%s1801 + $0xf8] sm:$0xff]
      %v1834 = vld [vmem:[%s1801 + $0x100] sm:$0xff]
      %v1835 = vld [vmem:[%s1801 + $0x108] sm:$0xff]
      %v1836 = vld [vmem:[%s1801 + $0x110] sm:$0xff]
      %v1837 = vld [vmem:[%s1801 + $0x118] sm:$0xff]
      %v1838 = vld [vmem:[%s1801 + $0x120] sm:$0xff]
      %v1839 = vld [vmem:[%s1801 + $0x128] sm:$0xff]
      %v1840 = vld [vmem:[%s1801 + $0x130] sm:$0xff]
      %v1841 = vld [vmem:[%s1801 + $0x138] sm:$0xff]
      %v1842 = vld [vmem:[%s1801 + $0x140] sm:$0xff]
      %v1843 = vld [vmem:[%s1801 + $0x148] sm:$0xff]
      %v1844 = vld [vmem:[%s1801 + $0x150] sm:$0xff]
      %v1845 = vld [vmem:[%s1801 + $0x158] sm:$0xff]
      %v1846 = vld [vmem:[%s1801 + $0x160] sm:$0xff]
      %v1847 = vld [vmem:[%s1801 + $0x168] sm:$0xff]
      %v1848 = vld [vmem:[%s1801 + $0x170] sm:$0xff]
      %v1849 = vld [vmem:[%s1801 + $0x178] sm:$0xff]
      %1850 = vmatprep.subr.mxu0 0.0
      %1851 = vmatpush1.msra.mxu0 %v1817
      %1852 = vmatprep.subr.mxu0 0.0
      %1853 = vmatpush1.msra.mxu0 %v1816
      %1854 = vmatprep.subr.mxu0 0.0
      %1855 = vmatpush1.msra.mxu0 %v1815
      %1856 = vmatprep.subr.mxu0 0.0
      %1857 = vmatpush1.msra.mxu0 %v1814
      %1858 = vmatprep.subr.mxu0 0.0
      %1859 = vmatpush1.msra.mxu0 %v1813
      %1860 = vmatprep.subr.mxu0 0.0
      %1861 = vmatpush1.msra.mxu0 %v1812
      %1862 = vmatprep.subr.mxu0 0.0
      %1863 = vmatpush1.msra.mxu0 %v1811
      %1864 = vmatprep.subr.mxu0 0.0
      %1865 = vmatpush1.msra.mxu0 %v1810
      %1866 = vmatprep.subr.mxu0 0.0
      %1867 = vmatpush1.msra.mxu0 %v1809
      %1868 = vmatprep.subr.mxu0 0.0
      %1869 = vmatpush1.msra.mxu0 %v1808
      %1870 = vmatprep.subr.mxu0 0.0
      %1871 = vmatpush1.msra.mxu0 %v1807
      %1872 = vmatprep.subr.mxu0 0.0
      %1873 = vmatpush1.msra.mxu0 %v1806
      %1874 = vmatprep.subr.mxu0 0.0
      %1875 = vmatpush1.msra.mxu0 %v1805
      %1876 = vmatprep.subr.mxu0 0.0
      %1877 = vmatpush1.msra.mxu0 %v1804
      %1878 = vmatprep.subr.mxu0 0.0
      %1879 = vmatpush1.msra.mxu0 %v1803
      %1880 = vmatprep.subr.mxu0 0.0
      %1881 = vmatpush1.msra.mxu0 %v1802
      %1882 = vmatprep.subr.mxu0 0.0
      %1883 = vmatpush2.msra.mxu0 %v1833
      %1884 = vmatprep.subr.mxu0 0.0
      %1885 = vmatpush2.msra.mxu0 %v1832
      %1886 = vmatprep.subr.mxu0 0.0
      %1887 = vmatpush2.msra.mxu0 %v1831
      %1888 = vmatprep.subr.mxu0 0.0
      %1889 = vmatpush2.msra.mxu0 %v1830
      %1890 = vmatprep.subr.mxu0 0.0
      %1891 = vmatpush2.msra.mxu0 %v1829
      %1892 = vmatprep.subr.mxu0 0.0
      %1893 = vmatpush2.msra.mxu0 %v1828
      %1894 = vmatprep.subr.mxu0 0.0
      %1895 = vmatpush2.msra.mxu0 %v1827
      %1896 = vmatprep.subr.mxu0 0.0
      %1897 = vmatpush2.msra.mxu0 %v1826
      %1898 = vmatprep.subr.mxu0 0.0
      %1899 = vmatpush2.msra.mxu0 %v1825
      %1900 = vmatprep.subr.mxu0 0.0
      %1901 = vmatpush2.msra.mxu0 %v1824
      %1902 = vmatprep.subr.mxu0 0.0
      %1903 = vmatpush2.msra.mxu0 %v1823
      %1904 = vmatprep.subr.mxu0 0.0
      %1905 = vmatpush2.msra.mxu0 %v1822
      %1906 = vmatprep.subr.mxu0 0.0
      %1907 = vmatpush2.msra.mxu0 %v1821
      %1908 = vmatprep.subr.mxu0 0.0
      %1909 = vmatpush2.msra.mxu0 %v1820
      %1910 = vmatprep.subr.mxu0 0.0
      %1911 = vmatpush2.msra.mxu0 %v1819
      %1912 = vmatprep.subr.mxu0 0.0
      %1913 = vmatpush2.msra.mxu0 %v1818
      %1914 = vmatprep.mubr.f32.mxu0 %v580
      %1915 = vmatmul.mubr.f32.gmra.mxu0 %v508
      %v1916 = vpop.f32.mrf.mxu0
      %v1917 = vadd.f32 0.0, %v1916
      %v1918 = vpop.f32.mrf.mxu0
      %1919 = vmatprep.mubr.f32.mxu0 %v582
      %1920 = vmatmul.mubr.f32.gmra.mxu0 %v416
      %v1921 = vpop.f32.mrf.mxu0
      %v1922 = vadd.f32 0.0, %v1921
      %v1923 = vpop.f32.mrf.mxu0
      %1924 = vmatprep.mubr.f32.mxu0 %v585
      %1925 = vmatmul.mubr.f32.gmra.mxu0 %v509
      %v1926 = vpop.f32.mrf.mxu0
      %v1927 = vadd.f32 0.0, %v1926
      %v1928 = vpop.f32.mrf.mxu0
      %1929 = vmatprep.mubr.f32.mxu0 %v587
      %1930 = vmatmul.mubr.f32.gmra.mxu0 %v419
      %v1931 = vpop.f32.mrf.mxu0
      %v1932 = vadd.f32 0.0, %v1931
      %v1933 = vpop.f32.mrf.mxu0
      %1934 = vmatprep.mubr.f32.mxu0 %v590
      %1935 = vmatmul.mubr.f32.gmra.mxu0 %v510
      %v1936 = vpop.f32.mrf.mxu0
      %v1937 = vadd.f32 0.0, %v1936
      %v1938 = vpop.f32.mrf.mxu0
      %1939 = vmatprep.mubr.f32.mxu0 %v592
      %1940 = vmatmul.mubr.f32.gmra.mxu0 %v422
      %v1941 = vpop.f32.mrf.mxu0
      %v1942 = vadd.f32 0.0, %v1941
      %v1943 = vpop.f32.mrf.mxu0
      %1944 = vmatprep.mubr.f32.mxu0 %v595
      %1945 = vmatmul.mubr.f32.gmra.mxu0 %v511
      %v1946 = vpop.f32.mrf.mxu0
      %v1947 = vadd.f32 0.0, %v1946
      %v1948 = vpop.f32.mrf.mxu0
      %1949 = vmatprep.mubr.f32.mxu0 %v597
      %1950 = vmatmul.mubr.f32.gmra.mxu0 %v425
      %v1951 = vpop.f32.mrf.mxu0
      %v1952 = vadd.f32 0.0, %v1951
      %v1953 = vpop.f32.mrf.mxu0
      %1954 = vmatprep.mubr.f32.mxu0 %v600
      %1955 = vmatmul.mubr.f32.gmra.mxu0 %v512
      %v1956 = vpop.f32.mrf.mxu0
      %v1957 = vadd.f32 0.0, %v1956
      %v1958 = vpop.f32.mrf.mxu0
      %1959 = vmatprep.mubr.f32.mxu0 %v602
      %1960 = vmatmul.mubr.f32.gmra.mxu0 %v428
      %v1961 = vpop.f32.mrf.mxu0
      %v1962 = vadd.f32 0.0, %v1961
      %v1963 = vpop.f32.mrf.mxu0
      %1964 = vmatprep.mubr.f32.mxu0 %v605
      %1965 = vmatmul.mubr.f32.gmra.mxu0 %v513
      %v1966 = vpop.f32.mrf.mxu0
      %v1967 = vadd.f32 0.0, %v1966
      %v1968 = vpop.f32.mrf.mxu0
      %1969 = vmatprep.mubr.f32.mxu0 %v607
      %1970 = vmatmul.mubr.f32.gmra.mxu0 %v431
      %v1971 = vpop.f32.mrf.mxu0
      %v1972 = vadd.f32 0.0, %v1971
      %v1973 = vpop.f32.mrf.mxu0
      %1974 = vmatprep.mubr.f32.mxu0 %v610
      %1975 = vmatmul.mubr.f32.gmra.mxu0 %v514
      %v1976 = vpop.f32.mrf.mxu0
      %v1977 = vadd.f32 0.0, %v1976
      %v1978 = vpop.f32.mrf.mxu0
      %1979 = vmatprep.mubr.f32.mxu0 %v612
      %1980 = vmatmul.mubr.f32.gmra.mxu0 %v434
      %v1981 = vpop.f32.mrf.mxu0
      %v1982 = vadd.f32 0.0, %v1981
      %v1983 = vpop.f32.mrf.mxu0
      %1984 = vmatprep.mubr.f32.mxu0 %v615
      %1985 = vmatmul.mubr.f32.gmra.mxu0 %v515
      %v1986 = vpop.f32.mrf.mxu0
      %v1987 = vadd.f32 0.0, %v1986
      %v1988 = vpop.f32.mrf.mxu0
      %1989 = vmatprep.mubr.f32.mxu0 %v617
      %1990 = vmatmul.mubr.f32.gmra.mxu0 %v437
      %v1991 = vpop.f32.mrf.mxu0
      %v1992 = vadd.f32 0.0, %v1991
      %v1993 = vpop.f32.mrf.mxu0
      %1994 = vmatprep.mubr.f32.mxu0 %v620
      %1995 = vmatmul.mubr.f32.gmra.mxu0 %v516
      %v1996 = vpop.f32.mrf.mxu0
      %v1997 = vadd.f32 0.0, %v1996
      %v1998 = vpop.f32.mrf.mxu0
      %1999 = vmatprep.mubr.f32.mxu0 %v622
      %2000 = vmatmul.mubr.f32.gmra.mxu0 %v440
      %v2001 = vpop.f32.mrf.mxu0
      %v2002 = vadd.f32 0.0, %v2001
      %v2003 = vpop.f32.mrf.mxu0
      %2004 = vmatprep.mubr.f32.mxu0 %v625
      %2005 = vmatmul.mubr.f32.gmra.mxu0 %v517
      %v2006 = vpop.f32.mrf.mxu0
      %v2007 = vadd.f32 0.0, %v2006
      %v2008 = vpop.f32.mrf.mxu0
      %2009 = vmatprep.mubr.f32.mxu0 %v627
      %2010 = vmatmul.mubr.f32.gmra.mxu0 %v443
      %v2011 = vpop.f32.mrf.mxu0
      %v2012 = vadd.f32 0.0, %v2011
      %v2013 = vpop.f32.mrf.mxu0
      %2014 = vmatprep.mubr.f32.mxu0 %v630
      %2015 = vmatmul.mubr.f32.gmra.mxu0 %v518
      %v2016 = vpop.f32.mrf.mxu0
      %v2017 = vadd.f32 0.0, %v2016
      %v2018 = vpop.f32.mrf.mxu0
      %2019 = vmatprep.mubr.f32.mxu0 %v632
      %2020 = vmatmul.mubr.f32.gmra.mxu0 %v446
      %v2021 = vpop.f32.mrf.mxu0
      %v2022 = vadd.f32 0.0, %v2021
      %v2023 = vpop.f32.mrf.mxu0
      %2024 = vmatprep.mubr.f32.mxu0 %v635
      %2025 = vmatmul.mubr.f32.gmra.mxu0 %v519
      %v2026 = vpop.f32.mrf.mxu0
      %v2027 = vadd.f32 0.0, %v2026
      %v2028 = vpop.f32.mrf.mxu0
      %2029 = vmatprep.mubr.f32.mxu0 %v637
      %2030 = vmatmul.mubr.f32.gmra.mxu0 %v449
      %v2031 = vpop.f32.mrf.mxu0
      %v2032 = vadd.f32 0.0, %v2031
      %v2033 = vpop.f32.mrf.mxu0
      %2034 = vmatprep.mubr.f32.mxu0 %v640
      %2035 = vmatmul.mubr.f32.gmra.mxu0 %v520
      %v2036 = vpop.f32.mrf.mxu0
      %v2037 = vadd.f32 0.0, %v2036
      %v2038 = vpop.f32.mrf.mxu0
      %2039 = vmatprep.mubr.f32.mxu0 %v642
      %2040 = vmatmul.mubr.f32.gmra.mxu0 %v452
      %v2041 = vpop.f32.mrf.mxu0
      %v2042 = vadd.f32 0.0, %v2041
      %v2043 = vpop.f32.mrf.mxu0
      %2044 = vmatprep.mubr.f32.mxu0 %v645
      %2045 = vmatmul.mubr.f32.gmra.mxu0 %v521
      %v2046 = vpop.f32.mrf.mxu0
      %v2047 = vadd.f32 0.0, %v2046
      %v2048 = vpop.f32.mrf.mxu0
      %2049 = vmatprep.mubr.f32.mxu0 %v647
      %2050 = vmatmul.mubr.f32.gmra.mxu0 %v455
      %v2051 = vpop.f32.mrf.mxu0
      %v2052 = vadd.f32 0.0, %v2051
      %v2053 = vpop.f32.mrf.mxu0
      %2054 = vmatprep.mubr.f32.mxu0 %v840
      %2055 = vmatmul.mubr.f32.gmra.mxu0 %v522
      %v2056 = vpop.f32.mrf.mxu0
      %v2057 = vadd.f32 0.0, %v2056
      %v2058 = vpop.f32.mrf.mxu0
      %2059 = vmatprep.mubr.f32.mxu0 %v842
      %2060 = vmatmul.mubr.f32.gmra.mxu0 %v458
      %v2061 = vpop.f32.mrf.mxu0
      %v2062 = vadd.f32 0.0, %v2061
      %v2063 = vpop.f32.mrf.mxu0
      %2064 = vmatprep.mubr.f32.mxu0 %v572
      %2065 = vmatmul.mubr.f32.gmra.mxu0 0.0
      %v2066 = vpop.f32.mrf.mxu0
      %v2067 = vadd.f32 0.0, %v2066
      %v2068 = vpop.f32.mrf.mxu0
      %2069 = vmatprep.mubr.f32.mxu0 %v572
      %2070 = vmatmul.mubr.f32.gmra.mxu0 0.0
      %v2071 = vpop.f32.mrf.mxu0
      %v2072 = vadd.f32 0.0, %v2071
      %v2073 = vpop.f32.mrf.mxu0
      %2074 = vdwg.mxu0
      %2075 = vmatprep.subr.mxu0 0.0
      %2076 = vmatpush1.msra.mxu0 %v1849
      %2077 = vmatprep.subr.mxu0 0.0
      %2078 = vmatpush1.msra.mxu0 %v1848
      %2079 = vmatprep.subr.mxu0 0.0
      %2080 = vmatpush1.msra.mxu0 %v1847
      %2081 = vmatprep.subr.mxu0 0.0
      %2082 = vmatpush1.msra.mxu0 %v1846
      %2083 = vmatprep.subr.mxu0 0.0
      %2084 = vmatpush1.msra.mxu0 %v1845
      %2085 = vmatprep.subr.mxu0 0.0
      %2086 = vmatpush1.msra.mxu0 %v1844
      %2087 = vmatprep.subr.mxu0 0.0
      %2088 = vmatpush1.msra.mxu0 %v1843
      %2089 = vmatprep.subr.mxu0 0.0
      %2090 = vmatpush1.msra.mxu0 %v1842
      %2091 = vmatprep.subr.mxu0 0.0
      %2092 = vmatpush1.msra.mxu0 %v1841
      %2093 = vmatprep.subr.mxu0 0.0
      %2094 = vmatpush1.msra.mxu0 %v1840
      %2095 = vmatprep.subr.mxu0 0.0
      %2096 = vmatpush1.msra.mxu0 %v1839
      %2097 = vmatprep.subr.mxu0 0.0
      %2098 = vmatpush1.msra.mxu0 %v1838
      %2099 = vmatprep.subr.mxu0 0.0
      %2100 = vmatpush1.msra.mxu0 %v1837
      %2101 = vmatprep.subr.mxu0 0.0
      %2102 = vmatpush1.msra.mxu0 %v1836
      %2103 = vmatprep.subr.mxu0 0.0
      %2104 = vmatpush1.msra.mxu0 %v1835
      %2105 = vmatprep.subr.mxu0 0.0
      %2106 = vmatpush1.msra.mxu0 %v1834
      %2107 = vmatprep.subr.mxu0 0.0
      %2108 = vmatpush2.msra.mxu0 0.0
      %2109 = vmatprep.subr.mxu0 0.0
      %2110 = vmatpush2.msra.mxu0 0.0
      %2111 = vmatprep.subr.mxu0 0.0
      %2112 = vmatpush2.msra.mxu0 0.0
      %2113 = vmatprep.subr.mxu0 0.0
      %2114 = vmatpush2.msra.mxu0 0.0
      %2115 = vmatprep.subr.mxu0 0.0
      %2116 = vmatpush2.msra.mxu0 0.0
      %2117 = vmatprep.subr.mxu0 0.0
      %2118 = vmatpush2.msra.mxu0 0.0
      %2119 = vmatprep.subr.mxu0 0.0
      %2120 = vmatpush2.msra.mxu0 0.0
      %2121 = vmatprep.subr.mxu0 0.0
      %2122 = vmatpush2.msra.mxu0 0.0
      %2123 = vmatprep.subr.mxu0 0.0
      %2124 = vmatpush2.msra.mxu0 0.0
      %2125 = vmatprep.subr.mxu0 0.0
      %2126 = vmatpush2.msra.mxu0 0.0
      %2127 = vmatprep.subr.mxu0 0.0
      %2128 = vmatpush2.msra.mxu0 0.0
      %2129 = vmatprep.subr.mxu0 0.0
      %2130 = vmatpush2.msra.mxu0 0.0
      %2131 = vmatprep.subr.mxu0 0.0
      %2132 = vmatpush2.msra.mxu0 0.0
      %2133 = vmatprep.subr.mxu0 0.0
      %2134 = vmatpush2.msra.mxu0 0.0
      %2135 = vmatprep.subr.mxu0 0.0
      %2136 = vmatpush2.msra.mxu0 0.0
      %2137 = vmatprep.subr.mxu0 0.0
      %2138 = vmatpush2.msra.mxu0 0.0
      %2139 = vmatprep.mubr.f32.mxu0 0.0
      %2140 = vmatmul.mubr.f32.gmra.mxu0 %v689
      %v2141 = vpop.f32.mrf.mxu0
      %v2142 = vadd.f32 %v1917, %v2141
      %v2143 = vpop.f32.mrf.mxu0
      %2144 = vmatprep.mubr.f32.mxu0 0.0
      %2145 = vmatmul.mubr.f32.gmra.mxu0 %v691
      %v2146 = vpop.f32.mrf.mxu0
      %v2147 = vadd.f32 %v1922, %v2146
      %v2148 = vpop.f32.mrf.mxu0
      %2149 = vmatprep.mubr.f32.mxu0 0.0
      %2150 = vmatmul.mubr.f32.gmra.mxu0 %v694
      %v2151 = vpop.f32.mrf.mxu0
      %v2152 = vadd.f32 %v1927, %v2151
      %v2153 = vpop.f32.mrf.mxu0
      %2154 = vmatprep.mubr.f32.mxu0 0.0
      %2155 = vmatmul.mubr.f32.gmra.mxu0 %v696
      %v2156 = vpop.f32.mrf.mxu0
      %v2157 = vadd.f32 %v1932, %v2156
      %v2158 = vpop.f32.mrf.mxu0
      %2159 = vmatprep.mubr.f32.mxu0 0.0
      %2160 = vmatmul.mubr.f32.gmra.mxu0 %v699
      %v2161 = vpop.f32.mrf.mxu0
      %v2162 = vadd.f32 %v1937, %v2161
      %v2163 = vpop.f32.mrf.mxu0
      %2164 = vmatprep.mubr.f32.mxu0 0.0
      %2165 = vmatmul.mubr.f32.gmra.mxu0 %v701
      %v2166 = vpop.f32.mrf.mxu0
      %v2167 = vadd.f32 %v1942, %v2166
      %v2168 = vpop.f32.mrf.mxu0
      %2169 = vmatprep.mubr.f32.mxu0 0.0
      %2170 = vmatmul.mubr.f32.gmra.mxu0 %v704
      %v2171 = vpop.f32.mrf.mxu0
      %v2172 = vadd.f32 %v1947, %v2171
      %v2173 = vpop.f32.mrf.mxu0
      %2174 = vmatprep.mubr.f32.mxu0 0.0
      %2175 = vmatmul.mubr.f32.gmra.mxu0 %v706
      %v2176 = vpop.f32.mrf.mxu0
      %v2177 = vadd.f32 %v1952, %v2176
      %v2178 = vpop.f32.mrf.mxu0
      %2179 = vmatprep.mubr.f32.mxu0 0.0
      %2180 = vmatmul.mubr.f32.gmra.mxu0 %v709
      %v2181 = vpop.f32.mrf.mxu0
      %v2182 = vadd.f32 %v1957, %v2181
      %v2183 = vpop.f32.mrf.mxu0
      %2184 = vmatprep.mubr.f32.mxu0 0.0
      %2185 = vmatmul.mubr.f32.gmra.mxu0 %v711
      %v2186 = vpop.f32.mrf.mxu0
      %v2187 = vadd.f32 %v1962, %v2186
      %v2188 = vpop.f32.mrf.mxu0
      %2189 = vmatprep.mubr.f32.mxu0 0.0
      %2190 = vmatmul.mubr.f32.gmra.mxu0 %v714
      %v2191 = vpop.f32.mrf.mxu0
      %v2192 = vadd.f32 %v1967, %v2191
      %v2193 = vpop.f32.mrf.mxu0
      %2194 = vmatprep.mubr.f32.mxu0 0.0
      %2195 = vmatmul.mubr.f32.gmra.mxu0 %v716
      %v2196 = vpop.f32.mrf.mxu0
      %v2197 = vadd.f32 %v1972, %v2196
      %v2198 = vpop.f32.mrf.mxu0
      %2199 = vmatprep.mubr.f32.mxu0 0.0
      %2200 = vmatmul.mubr.f32.gmra.mxu0 %v719
      %v2201 = vpop.f32.mrf.mxu0
      %v2202 = vadd.f32 %v1977, %v2201
      %v2203 = vpop.f32.mrf.mxu0
      %2204 = vmatprep.mubr.f32.mxu0 0.0
      %2205 = vmatmul.mubr.f32.gmra.mxu0 %v721
      %v2206 = vpop.f32.mrf.mxu0
      %v2207 = vadd.f32 %v1982, %v2206
      %v2208 = vpop.f32.mrf.mxu0
      %2209 = vmatprep.mubr.f32.mxu0 0.0
      %2210 = vmatmul.mubr.f32.gmra.mxu0 %v724
      %v2211 = vpop.f32.mrf.mxu0
      %v2212 = vadd.f32 %v1987, %v2211
      %v2213 = vpop.f32.mrf.mxu0
      %2214 = vmatprep.mubr.f32.mxu0 0.0
      %2215 = vmatmul.mubr.f32.gmra.mxu0 %v726
      %v2216 = vpop.f32.mrf.mxu0
      %v2217 = vadd.f32 %v1992, %v2216
      %v2218 = vpop.f32.mrf.mxu0
      %2219 = vmatprep.mubr.f32.mxu0 0.0
      %2220 = vmatmul.mubr.f32.gmra.mxu0 %v729
      %v2221 = vpop.f32.mrf.mxu0
      %v2222 = vadd.f32 %v1997, %v2221
      %v2223 = vpop.f32.mrf.mxu0
      %2224 = vmatprep.mubr.f32.mxu0 0.0
      %2225 = vmatmul.mubr.f32.gmra.mxu0 %v731
      %v2226 = vpop.f32.mrf.mxu0
      %v2227 = vadd.f32 %v2002, %v2226
      %v2228 = vpop.f32.mrf.mxu0
      %2229 = vmatprep.mubr.f32.mxu0 0.0
      %2230 = vmatmul.mubr.f32.gmra.mxu0 %v734
      %v2231 = vpop.f32.mrf.mxu0
      %v2232 = vadd.f32 %v2007, %v2231
      %v2233 = vpop.f32.mrf.mxu0
      %2234 = vmatprep.mubr.f32.mxu0 0.0
      %2235 = vmatmul.mubr.f32.gmra.mxu0 %v736
      %v2236 = vpop.f32.mrf.mxu0
      %v2237 = vadd.f32 %v2012, %v2236
      %v2238 = vpop.f32.mrf.mxu0
      %2239 = vmatprep.mubr.f32.mxu0 0.0
      %2240 = vmatmul.mubr.f32.gmra.mxu0 %v739
      %v2241 = vpop.f32.mrf.mxu0
      %v2242 = vadd.f32 %v2017, %v2241
      %v2243 = vpop.f32.mrf.mxu0
      %2244 = vmatprep.mubr.f32.mxu0 0.0
      %2245 = vmatmul.mubr.f32.gmra.mxu0 %v741
      %v2246 = vpop.f32.mrf.mxu0
      %v2247 = vadd.f32 %v2022, %v2246
      %v2248 = vpop.f32.mrf.mxu0
      %2249 = vmatprep.mubr.f32.mxu0 0.0
      %2250 = vmatmul.mubr.f32.gmra.mxu0 %v744
      %v2251 = vpop.f32.mrf.mxu0
      %v2252 = vadd.f32 %v2027, %v2251
      %v2253 = vpop.f32.mrf.mxu0
      %2254 = vmatprep.mubr.f32.mxu0 0.0
      %2255 = vmatmul.mubr.f32.gmra.mxu0 %v746
      %v2256 = vpop.f32.mrf.mxu0
      %v2257 = vadd.f32 %v2032, %v2256
      %v2258 = vpop.f32.mrf.mxu0
      %2259 = vmatprep.mubr.f32.mxu0 0.0
      %2260 = vmatmul.mubr.f32.gmra.mxu0 %v749
      %v2261 = vpop.f32.mrf.mxu0
      %v2262 = vadd.f32 %v2037, %v2261
      %v2263 = vpop.f32.mrf.mxu0
      %2264 = vmatprep.mubr.f32.mxu0 0.0
      %2265 = vmatmul.mubr.f32.gmra.mxu0 %v751
      %v2266 = vpop.f32.mrf.mxu0
      %v2267 = vadd.f32 %v2042, %v2266
      %v2268 = vpop.f32.mrf.mxu0
      %2269 = vmatprep.mubr.f32.mxu0 0.0
      %2270 = vmatmul.mubr.f32.gmra.mxu0 %v754
      %v2271 = vpop.f32.mrf.mxu0
      %v2272 = vadd.f32 %v2047, %v2271
      %v2273 = vpop.f32.mrf.mxu0
      %2274 = vmatprep.mubr.f32.mxu0 0.0
      %2275 = vmatmul.mubr.f32.gmra.mxu0 %v756
      %v2276 = vpop.f32.mrf.mxu0
      %v2277 = vadd.f32 %v2052, %v2276
      %v2278 = vpop.f32.mrf.mxu0
      %2279 = vmatprep.mubr.f32.mxu0 0.0
      %2280 = vmatmul.mubr.f32.gmra.mxu0 %v847
      %v2281 = vpop.f32.mrf.mxu0
      %v2282 = vadd.f32 %v2057, %v2281
      %v2283 = vpop.f32.mrf.mxu0
      %2284 = vmatprep.mubr.f32.mxu0 0.0
      %2285 = vmatmul.mubr.f32.gmra.mxu0 %v849
      %v2286 = vpop.f32.mrf.mxu0
      %v2287 = vadd.f32 %v2062, %v2286
      %v2288 = vpop.f32.mrf.mxu0
      %2289 = vmatprep.mubr.f32.mxu0 0.0
      %2290 = vmatmul.mubr.f32.gmra.mxu0 %v681
      %v2291 = vpop.f32.mrf.mxu0
      %v2292 = vadd.f32 %v2067, %v2291
      %v2293 = vpop.f32.mrf.mxu0
      %2294 = vmatprep.mubr.f32.mxu0 0.0
      %2295 = vmatmul.mubr.f32.gmra.mxu0 %v681
      %v2296 = vpop.f32.mrf.mxu0
      %v2297 = vadd.f32 %v2072, %v2296
      %v2298 = vpop.f32.mrf.mxu0
      %2299 = vdwg.mxu0
      %v2300 = vadd.f32 %v1643, %v2142
      %v2301 = vadd.f32 %v1648, %v2147
      %v2302 = vadd.f32 %v1653, %v2152
      %v2303 = vadd.f32 %v1658, %v2157
      %v2304 = vadd.f32 %v1663, %v2162
      %v2305 = vadd.f32 %v1668, %v2167
      %v2306 = vadd.f32 %v1673, %v2172
      %v2307 = vadd.f32 %v1678, %v2177
      %v2308 = vadd.f32 %v1683, %v2182
      %v2309 = vadd.f32 %v1688, %v2187
      %v2310 = vadd.f32 %v1693, %v2192
      %v2311 = vadd.f32 %v1698, %v2197
      %v2312 = vadd.f32 %v1703, %v2202
      %v2313 = vadd.f32 %v1708, %v2207
      %v2314 = vadd.f32 %v1713, %v2212
      %v2315 = vadd.f32 %v1718, %v2217
      %v2316 = vadd.f32 %v1723, %v2222
      %v2317 = vadd.f32 %v1728, %v2227
      %v2318 = vadd.f32 %v1733, %v2232
      %v2319 = vadd.f32 %v1738, %v2237
      %v2320 = vadd.f32 %v1743, %v2242
      %v2321 = vadd.f32 %v1748, %v2247
      %v2322 = vadd.f32 %v1753, %v2252
      %v2323 = vadd.f32 %v1758, %v2257
      %v2324 = vadd.f32 %v1763, %v2262
      %v2325 = vadd.f32 %v1768, %v2267
      %v2326 = vadd.f32 %v1773, %v2272
      %v2327 = vadd.f32 %v1778, %v2277
      %v2328 = vadd.f32 %v1783, %v2282
      %v2329 = vadd.f32 %v1788, %v2287
      %v2330 = vadd.f32 %v1793, %v2292
      %v2331 = vadd.f32 %v1798, %v2297
      %2332 = vst [vmem:[%s231] sm:$0xff] %v2300
      %2333 = vst [vmem:[%s231 + $0x8] sm:$0xff] %v2301
      %2334 = vst [vmem:[%s231 + $0x10] sm:$0xff] %v2302
      %2335 = vst [vmem:[%s231 + $0x18] sm:$0xff] %v2303
      %2336 = vst [vmem:[%s231 + $0x20] sm:$0xff] %v2304
      %2337 = vst [vmem:[%s231 + $0x28] sm:$0xff] %v2305
      %2338 = vst [vmem:[%s231 + $0x30] sm:$0xff] %v2306
      %2339 = vst [vmem:[%s231 + $0x38] sm:$0xff] %v2307
      %2340 = vst [vmem:[%s231 + $0x40] sm:$0xff] %v2308
      %2341 = vst [vmem:[%s231 + $0x48] sm:$0xff] %v2309
      %2342 = vst [vmem:[%s231 + $0x50] sm:$0xff] %v2310
      %2343 = vst [vmem:[%s231 + $0x58] sm:$0xff] %v2311
      %2344 = vst [vmem:[%s231 + $0x60] sm:$0xff] %v2312
      %2345 = vst [vmem:[%s231 + $0x68] sm:$0xff] %v2313
      %2346 = vst [vmem:[%s231 + $0x70] sm:$0xff] %v2314
      %2347 = vst [vmem:[%s231 + $0x78] sm:$0xff] %v2315
      %2348 = vst [vmem:[%s231 + $0x80] sm:$0xff] %v2316
      %2349 = vst [vmem:[%s231 + $0x88] sm:$0xff] %v2317
      %2350 = vst [vmem:[%s231 + $0x90] sm:$0xff] %v2318
      %2351 = vst [vmem:[%s231 + $0x98] sm:$0xff] %v2319
      %2352 = vst [vmem:[%s231 + $0xa0] sm:$0xff] %v2320
      %2353 = vst [vmem:[%s231 + $0xa8] sm:$0xff] %v2321
      %2354 = vst [vmem:[%s231 + $0xb0] sm:$0xff] %v2322
      %2355 = vst [vmem:[%s231 + $0xb8] sm:$0xff] %v2323
      %2356 = vst [vmem:[%s231 + $0xc0] sm:$0xff] %v2324
      %2357 = vst [vmem:[%s231 + $0xc8] sm:$0xff] %v2325
      %2358 = vst [vmem:[%s231 + $0xd0] sm:$0xff] %v2326
      %2359 = vst [vmem:[%s231 + $0xd8] sm:$0xff] %v2327
      %2360 = vst [vmem:[%s231 + $0xe0] sm:$0xff] %v2328
      %2361 = vst [vmem:[%s231 + $0xe8] sm:$0xff] %v2329
      %2362 = vst [vmem:[%s231 + $0xf0] sm:$0xff] %v2330
      %2363 = vst [vmem:[%s231 + $0xf8] sm:$0xff] %v2331
      %v2364 = vadd.f32 %v2300, %v2301
      %v2365 = vadd.f32 %v2364, %v2302
      %v2366 = vadd.f32 %v2365, %v2303
      %v2367 = vadd.f32 %v2366, %v2304
      %v2368 = vadd.f32 %v2367, %v2305
      %v2369 = vadd.f32 %v2368, %v2306
      %v2370 = vadd.f32 %v2369, %v2307
      %v2371 = vadd.f32 %v2370, %v2308
      %v2372 = vadd.f32 %v2371, %v2309
      %v2373 = vadd.f32 %v2372, %v2310
      %v2374 = vadd.f32 %v2373, %v2311
      %v2375 = vadd.f32 %v2374, %v2312
      %v2376 = vadd.f32 %v2375, %v2313
      %v2377 = vadd.f32 %v2376, %v2314
      %v2378 = vadd.f32 %v2377, %v2315
      %v2379 = vadd.f32 %v2378, %v2316
      %v2380 = vadd.f32 %v2379, %v2317
      %v2381 = vadd.f32 %v2380, %v2318
      %v2382 = vadd.f32 %v2381, %v2319
      %v2383 = vadd.f32 %v2382, %v2320
      %v2384 = vadd.f32 %v2383, %v2321
      %v2385 = vadd.f32 %v2384, %v2322
      %v2386 = vadd.f32 %v2385, %v2323
      %v2387 = vadd.f32 %v2386, %v2324
      %v2388 = vadd.f32 %v2387, %v2325
      %v2389 = vadd.f32 %v2388, %v2326
      %v2390 = vadd.f32 %v2389, %v2327
      %v2391 = vadd.f32 %v2390, %v2328
      %v2392 = vadd.f32 %v2391, %v2329
      %v2393 = vadd.f32 %v2392, %v2330
      %v2394 = vadd.f32 %v2393, %v2331
      %v2395 = vrot.slane %v2394, 4
      %v2396 = vadd.f32 %v2394, %v2395
      %v2397 = vrot.slane %v2396, 2
      %v2398 = vadd.f32 %v2396, %v2397
      %v2399 = vrot.slane %v2398, 1
      %v2400 = vadd.f32 %v2398, %v2399
      %v2401 = vrcp.pop 256.0
      %v2402 = vmul.f32 %v2400, %v2401
      %v2403 = vsub.f32 %v2300, %v2402
      %v2404 = vsub.f32 %v2301, %v2402
      %v2405 = vsub.f32 %v2302, %v2402
      %v2406 = vsub.f32 %v2303, %v2402
      %v2407 = vsub.f32 %v2304, %v2402
      %v2408 = vsub.f32 %v2305, %v2402
      %v2409 = vsub.f32 %v2306, %v2402
      %v2410 = vsub.f32 %v2307, %v2402
      %v2411 = vsub.f32 %v2308, %v2402
      %v2412 = vsub.f32 %v2309, %v2402
      %v2413 = vsub.f32 %v2310, %v2402
      %v2414 = vsub.f32 %v2311, %v2402
      %v2415 = vsub.f32 %v2312, %v2402
      %v2416 = vsub.f32 %v2313, %v2402
      %v2417 = vsub.f32 %v2314, %v2402
      %v2418 = vsub.f32 %v2315, %v2402
      %v2419 = vsub.f32 %v2316, %v2402
      %v2420 = vsub.f32 %v2317, %v2402
      %v2421 = vsub.f32 %v2318, %v2402
      %v2422 = vsub.f32 %v2319, %v2402
      %v2423 = vsub.f32 %v2320, %v2402
      %v2424 = vsub.f32 %v2321, %v2402
      %v2425 = vsub.f32 %v2322, %v2402
      %v2426 = vsub.f32 %v2323, %v2402
      %v2427 = vsub.f32 %v2324, %v2402
      %v2428 = vsub.f32 %v2325, %v2402
      %v2429 = vsub.f32 %v2326, %v2402
      %v2430 = vsub.f32 %v2327, %v2402
      %v2431 = vsub.f32 %v2328, %v2402
      %v2432 = vsub.f32 %v2329, %v2402
      %v2433 = vsub.f32 %v2330, %v2402
      %v2434 = vsub.f32 %v2331, %v2402
      %v2435 = vmul.f32 %v2403, %v2403
      %v2436 = vmul.f32 %v2404, %v2404
      %v2437 = vmul.f32 %v2405, %v2405
      %v2438 = vmul.f32 %v2406, %v2406
      %v2439 = vmul.f32 %v2407, %v2407
      %v2440 = vmul.f32 %v2408, %v2408
      %v2441 = vmul.f32 %v2409, %v2409
      %v2442 = vmul.f32 %v2410, %v2410
      %v2443 = vmul.f32 %v2411, %v2411
      %v2444 = vmul.f32 %v2412, %v2412
      %v2445 = vmul.f32 %v2413, %v2413
      %v2446 = vmul.f32 %v2414, %v2414
      %v2447 = vmul.f32 %v2415, %v2415
      %v2448 = vmul.f32 %v2416, %v2416
      %v2449 = vmul.f32 %v2417, %v2417
      %v2450 = vmul.f32 %v2418, %v2418
      %v2451 = vmul.f32 %v2419, %v2419
      %v2452 = vmul.f32 %v2420, %v2420
      %v2453 = vmul.f32 %v2421, %v2421
      %v2454 = vmul.f32 %v2422, %v2422
      %v2455 = vmul.f32 %v2423, %v2423
      %v2456 = vmul.f32 %v2424, %v2424
      %v2457 = vmul.f32 %v2425, %v2425
      %v2458 = vmul.f32 %v2426, %v2426
      %v2459 = vmul.f32 %v2427, %v2427
      %v2460 = vmul.f32 %v2428, %v2428
      %v2461 = vmul.f32 %v2429, %v2429
      %v2462 = vmul.f32 %v2430, %v2430
      %v2463 = vmul.f32 %v2431, %v2431
      %v2464 = vmul.f32 %v2432, %v2432
      %v2465 = vmul.f32 %v2433, %v2433
      %v2466 = vmul.f32 %v2434, %v2434
      %v2467 = vadd.f32 %v2435, %v2436
      %v2468 = vadd.f32 %v2467, %v2437
      %v2469 = vadd.f32 %v2468, %v2438
      %v2470 = vadd.f32 %v2469, %v2439
      %v2471 = vadd.f32 %v2470, %v2440
      %v2472 = vadd.f32 %v2471, %v2441
      %v2473 = vadd.f32 %v2472, %v2442
      %v2474 = vadd.f32 %v2473, %v2443
      %v2475 = vadd.f32 %v2474, %v2444
      %v2476 = vadd.f32 %v2475, %v2445
      %v2477 = vadd.f32 %v2476, %v2446
      %v2478 = vadd.f32 %v2477, %v2447
      %v2479 = vadd.f32 %v2478, %v2448
      %v2480 = vadd.f32 %v2479, %v2449
      %v2481 = vadd.f32 %v2480, %v2450
      %v2482 = vadd.f32 %v2481, %v2451
      %v2483 = vadd.f32 %v2482, %v2452
      %v2484 = vadd.f32 %v2483, %v2453
      %v2485 = vadd.f32 %v2484, %v2454
      %v2486 = vadd.f32 %v2485, %v2455
      %v2487 = vadd.f32 %v2486, %v2456
      %v2488 = vadd.f32 %v2487, %v2457
      %v2489 = vadd.f32 %v2488, %v2458
      %v2490 = vadd.f32 %v2489, %v2459
      %v2491 = vadd.f32 %v2490, %v2460
      %v2492 = vadd.f32 %v2491, %v2461
      %v2493 = vadd.f32 %v2492, %v2462
      %v2494 = vadd.f32 %v2493, %v2463
      %v2495 = vadd.f32 %v2494, %v2464
      %v2496 = vadd.f32 %v2495, %v2465
      %v2497 = vadd.f32 %v2496, %v2466
      %v2498 = vrot.slane %v2497, 4
      %v2499 = vadd.f32 %v2497, %v2498
      %v2500 = vrot.slane %v2499, 2
      %v2501 = vadd.f32 %v2499, %v2500
      %v2502 = vrot.slane %v2501, 1
      %v2503 = vadd.f32 %v2501, %v2502
      %v2504 = vsel %vm410, %v2402, %v2503
      %2505 = vst [vmem:[%s235] sm:$0x3] %v2504
      %p2506 = scmp.lt.s32.totalorder %s17, 1
      %s2507 = scalar_select %p2506, %s17, 1
      %s2508 = smul.addr %s2507, 32
      %s2509 = smul.addr %s2508, 8
      %s2510 = scalar_lea.vmem %s4, %s2509
      %p2511 = scmp.lt.s32.totalorder %s17, 1
      %s2512 = scalar_select %p2511, %s17, 1
      %s2513 = smul.addr %s2512, 2
      %s2514 = scalar_lea.vmem %s5, %s2513
      // Predicated region
      $region37: #{bottleneck_pallas.5} parent=35 // pred_check
        %p2515 = pneg %p124
      $region38: #{bottleneck_pallas.5} parent=35 // pred_check_branch
        %2517 = sbr.rel (%p2515) target = $region40
      $region39: #{bottleneck_pallas.5} parent=35 // pred_region
        _
      $region40: #{bottleneck_pallas.5} parent=35 // pred_fallthru
        _
      // Predicated region
      $region41: #{bottleneck_pallas.5} parent=35 // pred_check
        %p2518 = pneg %p150
      $region42: #{bottleneck_pallas.5} parent=35 // pred_check_branch
        %2520 = sbr.rel (%p2518) target = $region44
      $region43: #{bottleneck_pallas.5} parent=35 // pred_region
        _
      $region44: #{bottleneck_pallas.5} parent=35 // pred_fallthru
        _
    $region36: #{bottleneck_pallas.5} parent=5 // pred_fallthru
      _
    %p2521 = scmp.le.s32.totalorder 2, %s12
    // Predicated region
    $region45: #{bottleneck_pallas.5} parent=5 // pred_check
      %p2522 = pneg %p2521
    $region46: #{bottleneck_pallas.5} parent=5 // pred_check_branch
      %2524 = sbr.rel (%p2522) target = $region48
    $region47: #{bottleneck_pallas.5} parent=5 // pred_region
      %s2525 = ssub.s32 %s12, 2
      // Predicated region
      $region49: #{bottleneck_pallas.5} parent=47 // pred_check
        %p2526 = pneg %p130
      $region50: #{bottleneck_pallas.5} parent=47 // pred_check_branch
        %2528 = sbr.rel (%p2526) target = $region52
      $region51: #{bottleneck_pallas.5} parent=47 // pred_region
        %p2529 = scmp.lt.s32.totalorder %s18, 1
        %s2530 = scalar_select %p2529, %s18, 1
        %s2531 = smul.addr %s2530, 32
        %s2532 = smul.addr %s2531, 8
        %s2533 = scalar_lea.vmem %s4, %s2532
      $region52: #{bottleneck_pallas.5} parent=47 // pred_fallthru
        _
      // Predicated region
      $region53: #{bottleneck_pallas.5} parent=47 // pred_check
        %p2534 = pneg %p156
      $region54: #{bottleneck_pallas.5} parent=47 // pred_check_branch
        %2536 = sbr.rel (%p2534) target = $region56
      $region55: #{bottleneck_pallas.5} parent=47 // pred_region
        %p2537 = scmp.lt.s32.totalorder %s18, 1
        %s2538 = scalar_select %p2537, %s18, 1
        %s2539 = smul.addr %s2538, 2
        %s2540 = scalar_lea.vmem %s5, %s2539
      $region56: #{bottleneck_pallas.5} parent=47 // pred_fallthru
        _
    $region48: #{bottleneck_pallas.5} parent=5 // pred_fallthru
      _
  $region6: #{bottleneck_pallas.5} parent=0 // loop_footer
    %s16 = sadd.s32 1, %s12
  $region7: #{bottleneck_pallas.5} parent=0 // loop_footer_branch
    %11 = sbr.rel target = $region3
  $region8: #{bottleneck_pallas.5} parent=0 // loop_exit
    _

</llo_original>
